<compile_context>
chip_gen: v5e
topology: v5e:2x2
jax: 0.10.0
libtpu: 0.0.40
codegen_flags: <defaults>
</compile_context>

<pallas_src>
import numpy as np
import jax
import jax.numpy as jnp
from jax.experimental import pallas as pl
from jax.experimental.pallas import tpu as pltpu

# ----- static shape plan -----------------------------------------------------
L_IN = 84                 # input sequence length
L_PAD = 128               # lane-dense padded input width
K1, C1 = 5, 32
L1 = L_IN - K1 + 1        # 80  (conv1, k=5, valid)
P1L = L1 // 4             # 20  (maxpool 4/4)
K2, C2 = 3, 64
L2 = P1L - K2 + 1         # 18  (conv2, k=3, valid)
P2L = L2 // 4             # 4   (maxpool 4/4; last 2 positions dropped)
FLAT = C2 * P2L           # 256 (LazyLinear in_features)
OUT_DIM = 10
OUT_PAD = 128             # lane-dense padded output width

N1 = 4 * C1 * P1L         # 2560: conv1 matmul output cols [phase, c1, pooled_pos]
R2 = C1 * P1L             # 640 : conv2 matmul contraction dim [c1, pooled_pos]
N2 = 4 * C2 * P2L         # 1024: conv2 matmul output cols [phase, c2, pooled_pos]


def _prelu(x, a):
    # nn.PReLU with a single shared slope `a` (PyTorch default num_parameters=1)
    return jnp.where(x >= 0.0, x, a * x)


def _round_up(v, m):
    return -(-v // m) * m


# ----- Pallas kernel: TILE_B samples per grid step ----------------------------
def _convo1d_s2_kernel(x_ref, t1_ref, c1b_ref, t2_ref, c2b_ref,
                       f1w_ref, f1b_ref, f2w_ref, f2b_ref,
                       f3w_ref, f3b_ref, f4w_ref, f4b_ref,
                       a_ref, out_ref):
    x = x_ref[...].astype(jnp.bfloat16)                            # (TILE_B, 128)

    # Conv1d(1,32,k=5) as one bf16 Toeplitz matmul -> (TILE_B, 2560), f32 acc.
    h = jnp.dot(x, t1_ref[...], preferred_element_type=jnp.float32)
    # MaxPool1d(4,4): column order is [phase, channel, pooled_pos] so the pool
    # is a max of four lane-tile-aligned slices (offsets multiple of 128).
    # Bias + PReLU applied AFTER the pool (bias phase-invariant, slope >= 0).
    q = C1 * P1L                                                   # 640
    h = jnp.maximum(jnp.maximum(h[:, 0:q],         h[:, q:2 * q]),
                    jnp.maximum(h[:, 2 * q:3 * q], h[:, 3 * q:4 * q]))
    h = _prelu(h + c1b_ref[...], a_ref[0])                         # (TILE_B, 640)

    # Conv1d(32,64,k=3) as one bf16 Toeplitz matmul -> (TILE_B, 1024), f32 acc.
    h = jnp.dot(h.astype(jnp.bfloat16), t2_ref[...],
                preferred_element_type=jnp.float32)
    # MaxPool1d(4,4) (floor mode already handled: only 16 positions computed).
    q = C2 * P2L                                                   # 256
    h = jnp.maximum(jnp.maximum(h[:, 0:q],         h[:, q:2 * q]),
                    jnp.maximum(h[:, 2 * q:3 * q], h[:, 3 * q:4 * q]))
    h = _prelu(h + c2b_ref[...], a_ref[1])                         # (TILE_B, 256)
    # h is now (TILE_B, 256) in PyTorch channel-major flatten order.

    # MLP head, all (TILE_B, K) x (K, N) bf16 MXU matmuls with f32 accumulation.
    h = _prelu(jnp.dot(h.astype(jnp.bfloat16), f1w_ref[...],
                       preferred_element_type=jnp.float32) + f1b_ref[...], a_ref[2])
    h = _prelu(jnp.dot(h.astype(jnp.bfloat16), f2w_ref[...],
                       preferred_element_type=jnp.float32) + f2b_ref[...], a_ref[3])
    h = _prelu(jnp.dot(h.astype(jnp.bfloat16), f3w_ref[...],
                       preferred_element_type=jnp.float32) + f3b_ref[...], a_ref[4])
    # Last layer zero-padded to 128 columns -> lane-dense store.
    out_ref[...] = (jnp.dot(h.astype(jnp.bfloat16), f4w_ref[...],
                            preferred_element_type=jnp.float32) + f4b_ref[...])


# ----- one-time parameter repacking (host side, outside the jitted forward) ---
def prepare_params(params):
    f32 = np.float32
    w1 = np.asarray(params["w1"], f32)     # (32, 1, 5)
    b1 = np.asarray(params["b1"], f32)     # (32,)
    w2 = np.asarray(params["w2"], f32)     # (64, 32, 3)
    b2 = np.asarray(params["b2"], f32)     # (64,)
    W1 = np.asarray(params["W1"], f32)     # (512, 256)
    b3 = np.asarray(params["b3"], f32)
    W2 = np.asarray(params["W2"], f32)     # (256, 512)
    b4 = np.asarray(params["b4"], f32)
    W3 = np.asarray(params["W3"], f32)     # (128, 256)
    b5 = np.asarray(params["b5"], f32)
    W4 = np.asarray(params["W4"], f32)     # (10, 128)
    b6 = np.asarray(params["b6"], f32)
    a = np.asarray(params["a"], f32)       # (5,) PReLU slopes

    # Post-pool PReLU for the conv stages is exact only for non-negative slope
    # (monotone => commutes with max-pool).  PyTorch default init is 0.25.
    assert float(a[0]) >= 0.0 and float(a[1]) >= 0.0, \
        "post-pool PReLU requires non-negative conv-stage slopes"

    # Conv1 Toeplitz (padded to 128 rows for a lane-dense / K=128-aligned input):
    # output column = (l % 4)*(C1*P1L) + c*P1L + (l // 4)
    T1 = np.zeros((L_PAD, N1), f32)
    for l in range(L1):
        base = (l % 4) * (C1 * P1L) + (l // 4)
        for c in range(C1):
            T1[l:l + K1, base + c * P1L] = w1[c, 0, :]
    # Bias is phase-invariant -> add it AFTER the pool: only (1, C1*P1L) wide.
    B1 = np.repeat(b1, P1L).reshape(1, C1 * P1L)

    # Conv2 Toeplitz: input col = c1*P1L + pos, output col =
    # (l % 4)*(C2*P2L) + c2*P2L + (l // 4); only positions l < 16 feed the pool.
    T2 = np.zeros((R2, N2), f32)
    for l in range(4 * P2L):
        base = (l % 4) * (C2 * P2L) + (l // 4)
        for c2 in range(C2):
            col = base + c2 * P2L
            for c1 in range(C1):
                T2[c1 * P1L + l: c1 * P1L + l + K2, col] = w2[c2, c1, :]
    B2 = np.repeat(b2, P2L).reshape(1, C2 * P2L)

    # FC layers: pooled2 column order (c2*P2L + j) == PyTorch flatten order,
    # so FC1 is a plain transpose.  Last layer padded to 128 output columns.
    F4W = np.zeros((128, OUT_PAD), f32)
    F4W[:, :OUT_DIM] = W4.T
    F4B = np.zeros((1, OUT_PAD), f32)
    F4B[0, :OUT_DIM] = b6

    bf16 = jnp.bfloat16
    packed = (
        jnp.asarray(T1, bf16), jnp.asarray(B1),                    # conv1
        jnp.asarray(T2, bf16), jnp.asarray(B2),                    # conv2
        jnp.asarray(np.ascontiguousarray(W1.T), bf16), jnp.asarray(b3.reshape(1, -1)),
        jnp.asarray(np.ascontiguousarray(W2.T), bf16), jnp.asarray(b4.reshape(1, -1)),
        jnp.asarray(np.ascontiguousarray(W3.T), bf16), jnp.asarray(b5.reshape(1, -1)),
        jnp.asarray(F4W, bf16), jnp.asarray(F4B),
        jnp.asarray(a),
    )
    return packed


# ----- wrapper: pallas_call with batch tiling ---------------------------------
def _weight_spec(arr):
    # Grid-invariant weights: constant index_map; single-buffered (no point in
    # double-buffering something that is DMA'd once).
    nd = arr.ndim
    idx = lambda b, _nd=nd: (0,) * _nd
    try:
        return pl.BlockSpec(arr.shape, idx, pipeline_mode=pl.Buffered(1))
    except TypeError:  # older jax without pipeline_mode: fall back to default buffering
        return pl.BlockSpec(arr.shape, idx)


@jax.jit
def convo1dnet_s2_forward(x, packed):
    (t1, c1b, t2, c2b, f1w, f1b, f2w, f2b, f3w, f3b, f4w, f4b, a) = packed
    B, L = x.shape
    assert L == L_IN

    # Batch tile policy:
    #  * small B: round up to sublane granularity (8);
    #  * B > 128: at least two grid steps (so "parallel" can use both v7x TCs),
    #    capped at 256 rows (fills the 256-tall MXU on v6e/v7x) and chosen to
    #    minimize padded rows.
    if B <= 128:
        tile_b = max(8, _round_up(B, 8))
    else:
        tile_b = min(256, _round_up(-(-B // 2), 8))
    b_pad = _round_up(B, tile_b)

    # Lane-dense (b_pad, 128) input slab (zeros in columns 84..127 and pad rows).
    xp = jnp.pad(x.astype(jnp.float32), ((0, b_pad - B), (0, L_PAD - L_IN)))

    weights = (t1, c1b, t2, c2b, f1w, f1b, f2w, f2b, f3w, f3b, f4w, f4b)

    in_specs = [pl.BlockSpec((tile_b, L_PAD), lambda b: (b, 0))]      # batch tile
    in_specs += [_weight_spec(w) for w in weights]                    # resident weights
    in_specs += [pl.BlockSpec(memory_space=pltpu.MemorySpace.SMEM)]   # PReLU slopes

    out = pl.pallas_call(
        _convo1d_s2_kernel,
        grid=(b_pad // tile_b,),
        in_specs=in_specs,
        out_specs=pl.BlockSpec((tile_b, OUT_PAD), lambda b: (b, 0)),
        out_shape=jax.ShapeDtypeStruct((b_pad, OUT_PAD), jnp.float32),
        compiler_params=pltpu.CompilerParams(
            dimension_semantics=("parallel",),        # batch steps independent (2 TCs on v7x)
            vmem_limit_bytes=32 * 1024 * 1024),       # safe on v5e/v6e/v7x; ~13 MiB footprint
    )(xp, *weights, a)
    return out[:B, :OUT_DIM]


# ----- pure-JAX f32 reference (mimics PyTorch NCL conventions exactly) --------
def _ref_conv1d(x, w, b):
    # x: (B, Cin, L), w: (Cout, Cin, K) -> (B, Cout, L-K+1)
    K = w.shape[-1]
    Lout = x.shape[-1] - K + 1
    patches = jnp.stack([x[:, :, k:k + Lout] for k in range(K)], axis=-1)
    return jnp.einsum("bilk,oik->bol", patches, w) + b[None, :, None]


def _ref_maxpool4(h):
    B, C, L = h.shape
    Lp = L // 4
    return h[:, :, :Lp * 4].reshape(B, C, Lp, 4).max(axis=-1)


def ref_forward(x, p):
    B = x.shape[0]
    h = x[:, None, :]
    h = _prelu(_ref_conv1d(h, p["w1"], p["b1"]), p["a"][0])
    h = _ref_maxpool4(h)
    h = _prelu(_ref_conv1d(h, p["w2"], p["b2"]), p["a"][1])
    h = _ref_maxpool4(h)
    f = h.reshape(B, -1)                                   # channel-major flatten (PyTorch)
    f = _prelu(f @ p["W1"].T + p["b3"], p["a"][2])
    f = _prelu(f @ p["W2"].T + p["b4"], p["a"][3])
    f = _prelu(f @ p["W3"].T + p["b5"], p["a"][4])
    return f @ p["W4"].T + p["b6"]


# ----- main --------------------------------------------------------------------
if __name__ == "__main__":
    key = jax.random.PRNGKey(0)
    keys = jax.random.split(key, 16)

    def uinit(k, shape, fan_in):
        bound = 1.0 / np.sqrt(fan_in)
        return jax.random.uniform(k, shape, jnp.float32, -bound, bound)

    params = {
        "w1": uinit(keys[0], (32, 1, 5), 5),
        "b1": uinit(keys[1], (32,), 5),
        "w2": uinit(keys[2], (64, 32, 3), 32 * 3),
        "b2": uinit(keys[3], (64,), 32 * 3),
        "W1": uinit(keys[4], (512, FLAT), FLAT),     # LazyLinear(512): in_features = 64*P2L
        "b3": uinit(keys[5], (512,), FLAT),
        "W2": uinit(keys[6], (256, 512), 512),
        "b4": uinit(keys[7], (256,), 512),
        "W3": uinit(keys[8], (128, 256), 256),
        "b5": uinit(keys[9], (128,), 256),
        "W4": uinit(keys[10], (OUT_DIM, 128), 128),
        "b6": uinit(keys[11], (OUT_DIM,), 128),
        "a": jnp.full((5,), 0.25, dtype=jnp.float32),   # PyTorch PReLU default init
    }

    x = jax.random.normal(keys[12], (2, L_IN), dtype=jnp.float32)

    packed = prepare_params(params)                 # one-time weight repacking (bf16 Toeplitz/FC)
    y = convo1dnet_s2_forward(x, packed)
    y = jax.block_until_ready(y)

    y_ref = ref_forward(x, params)
    # Matmuls run in bf16 with f32 accumulation -> compare at bf16-level tolerance.
    np.testing.assert_allclose(np.asarray(y), np.asarray(y_ref), atol=2e-2, rtol=2e-2)
    print("KERNEL_OK")
</pallas_src>

<mosaic_0001>
module attributes {stable_mosaic.version = 11 : i64} {
  func.func @_convo1d_s2_kernel(%arg0: i32, %arg1: memref<8x128xf32, #tpu.memory_space<vmem>>, %arg2: memref<128x2560xbf16, #tpu.memory_space<vmem>>, %arg3: memref<1x640xf32, #tpu.memory_space<vmem>>, %arg4: memref<640x1024xbf16, #tpu.memory_space<vmem>>, %arg5: memref<1x256xf32, #tpu.memory_space<vmem>>, %arg6: memref<256x512xbf16, #tpu.memory_space<vmem>>, %arg7: memref<1x512xf32, #tpu.memory_space<vmem>>, %arg8: memref<512x256xbf16, #tpu.memory_space<vmem>>, %arg9: memref<1x256xf32, #tpu.memory_space<vmem>>, %arg10: memref<256x128xbf16, #tpu.memory_space<vmem>>, %arg11: memref<1x128xf32, #tpu.memory_space<vmem>>, %arg12: memref<128x128xbf16, #tpu.memory_space<vmem>>, %arg13: memref<1x128xf32, #tpu.memory_space<vmem>>, %arg14: memref<5xf32, #tpu.memory_space<smem>>, %arg15: memref<8x128xf32, #tpu.memory_space<vmem>>) attributes {dimension_semantics = [#tpu.dimension_semantics<parallel>], iteration_bounds = array<i64: 1>, scalar_prefetch = 0 : i64, scratch_operands = 0 : i64, tpu.core_type = #tpu.core_type<tc>, window_params = [{transform_indices = @transform_0, window_bounds = array<i64: 8, 128>}, {pipeline_mode = #tpu.pipeline_mode<synchronous>, transform_indices = @transform_1, window_bounds = array<i64: 128, 2560>}, {pipeline_mode = #tpu.pipeline_mode<synchronous>, transform_indices = @transform_2, window_bounds = array<i64: 1, 640>}, {pipeline_mode = #tpu.pipeline_mode<synchronous>, transform_indices = @transform_3, window_bounds = array<i64: 640, 1024>}, {pipeline_mode = #tpu.pipeline_mode<synchronous>, transform_indices = @transform_4, window_bounds = array<i64: 1, 256>}, {pipeline_mode = #tpu.pipeline_mode<synchronous>, transform_indices = @transform_5, window_bounds = array<i64: 256, 512>}, {pipeline_mode = #tpu.pipeline_mode<synchronous>, transform_indices = @transform_6, window_bounds = array<i64: 1, 512>}, {pipeline_mode = #tpu.pipeline_mode<synchronous>, transform_indices = @transform_7, window_bounds = array<i64: 512, 256>}, {pipeline_mode = #tpu.pipeline_mode<synchronous>, transform_indices = @transform_8, window_bounds = array<i64: 1, 256>}, {pipeline_mode = #tpu.pipeline_mode<synchronous>, transform_indices = @transform_9, window_bounds = array<i64: 256, 128>}, {pipeline_mode = #tpu.pipeline_mode<synchronous>, transform_indices = @transform_10, window_bounds = array<i64: 1, 128>}, {pipeline_mode = #tpu.pipeline_mode<synchronous>, transform_indices = @transform_11, window_bounds = array<i64: 128, 128>}, {pipeline_mode = #tpu.pipeline_mode<synchronous>, transform_indices = @transform_12, window_bounds = array<i64: 1, 128>}, {transform_indices = @transform_13, window_bounds = array<i64: 5>}, {transform_indices = @transform_14, window_bounds = array<i64: 8, 128>}]} {
    %c0 = arith.constant 0 : index
    %c0_0 = arith.constant 0 : index
    %0 = vector.load %arg1[%c0, %c0_0] : memref<8x128xf32, #tpu.memory_space<vmem>>, vector<8x128xf32>
    %1 = arith.truncf %0 : vector<8x128xf32> to vector<8x128xbf16>
    %c0_1 = arith.constant 0 : index
    %c0_2 = arith.constant 0 : index
    %2 = vector.load %arg2[%c0_1, %c0_2] : memref<128x2560xbf16, #tpu.memory_space<vmem>>, vector<128x2560xbf16>
    %cst = arith.constant dense<0.000000e+00> : vector<8x2560xf32>
    %3 = tpu.matmul %1, %2, %cst {dimension_numbers = #tpu.dot_dimension_numbers<[1], [0], [0], [1], [0, 0, 1, 1], [], []>} : vector<8x128xbf16>, vector<128x2560xbf16>, vector<8x2560xf32> -> vector<8x2560xf32>
    %4 = vector.extract_strided_slice %3 {offsets = [0, 0], sizes = [8, 640], strides = [1, 1]} : vector<8x2560xf32> to vector<8x640xf32>
    %5 = vector.extract_strided_slice %3 {offsets = [0, 640], sizes = [8, 640], strides = [1, 1]} : vector<8x2560xf32> to vector<8x640xf32>
    %6 = arith.maximumf %4, %5 : vector<8x640xf32>
    %7 = vector.extract_strided_slice %3 {offsets = [0, 1280], sizes = [8, 640], strides = [1, 1]} : vector<8x2560xf32> to vector<8x640xf32>
    %8 = vector.extract_strided_slice %3 {offsets = [0, 1920], sizes = [8, 640], strides = [1, 1]} : vector<8x2560xf32> to vector<8x640xf32>
    %9 = arith.maximumf %7, %8 : vector<8x640xf32>
    %10 = arith.maximumf %6, %9 : vector<8x640xf32>
    %c0_3 = arith.constant 0 : index
    %c0_4 = arith.constant 0 : index
    %11 = vector.load %arg3[%c0_3, %c0_4] : memref<1x640xf32, #tpu.memory_space<vmem>>, vector<1x640xf32>
    %12 = vector.broadcast %11 : vector<1x640xf32> to vector<8x640xf32>
    %13 = arith.addf %10, %12 : vector<8x640xf32>
    %c0_5 = arith.constant 0 : index
    %14 = memref.load %arg14[%c0_5] : memref<5xf32, #tpu.memory_space<smem>>
    %cst_6 = arith.constant 0.000000e+00 : f32
    %15 = vector.broadcast %cst_6 : f32 to vector<8x640xf32>
    %16 = arith.cmpf oge, %13, %15 : vector<8x640xf32>
    %17 = vector.broadcast %14 : f32 to vector<8x640xf32>
    %18 = arith.mulf %17, %13 : vector<8x640xf32>
    %19 = arith.select %16, %13, %18 : vector<8x640xi1>, vector<8x640xf32>
    %20 = arith.truncf %19 : vector<8x640xf32> to vector<8x640xbf16>
    %c0_7 = arith.constant 0 : index
    %c0_8 = arith.constant 0 : index
    %21 = vector.load %arg4[%c0_7, %c0_8] : memref<640x1024xbf16, #tpu.memory_space<vmem>>, vector<640x1024xbf16>
    %cst_9 = arith.constant dense<0.000000e+00> : vector<8x1024xf32>
    %22 = tpu.matmul %20, %21, %cst_9 {dimension_numbers = #tpu.dot_dimension_numbers<[1], [0], [0], [1], [0, 0, 1, 1], [], []>} : vector<8x640xbf16>, vector<640x1024xbf16>, vector<8x1024xf32> -> vector<8x1024xf32>
    %23 = vector.extract_strided_slice %22 {offsets = [0, 0], sizes = [8, 256], strides = [1, 1]} : vector<8x1024xf32> to vector<8x256xf32>
    %24 = vector.extract_strided_slice %22 {offsets = [0, 256], sizes = [8, 256], strides = [1, 1]} : vector<8x1024xf32> to vector<8x256xf32>
    %25 = arith.maximumf %23, %24 : vector<8x256xf32>
    %26 = vector.extract_strided_slice %22 {offsets = [0, 512], sizes = [8, 256], strides = [1, 1]} : vector<8x1024xf32> to vector<8x256xf32>
    %27 = vector.extract_strided_slice %22 {offsets = [0, 768], sizes = [8, 256], strides = [1, 1]} : vector<8x1024xf32> to vector<8x256xf32>
    %28 = arith.maximumf %26, %27 : vector<8x256xf32>
    %29 = arith.maximumf %25, %28 : vector<8x256xf32>
    %c0_10 = arith.constant 0 : index
    %c0_11 = arith.constant 0 : index
    %30 = vector.load %arg5[%c0_10, %c0_11] : memref<1x256xf32, #tpu.memory_space<vmem>>, vector<1x256xf32>
    %31 = vector.broadcast %30 : vector<1x256xf32> to vector<8x256xf32>
    %32 = arith.addf %29, %31 : vector<8x256xf32>
    %c1 = arith.constant 1 : index
    %33 = memref.load %arg14[%c1] : memref<5xf32, #tpu.memory_space<smem>>
    %cst_12 = arith.constant 0.000000e+00 : f32
    %34 = vector.broadcast %cst_12 : f32 to vector<8x256xf32>
    %35 = arith.cmpf oge, %32, %34 : vector<8x256xf32>
    %36 = vector.broadcast %33 : f32 to vector<8x256xf32>
    %37 = arith.mulf %36, %32 : vector<8x256xf32>
    %38 = arith.select %35, %32, %37 : vector<8x256xi1>, vector<8x256xf32>
    %39 = arith.truncf %38 : vector<8x256xf32> to vector<8x256xbf16>
    %c0_13 = arith.constant 0 : index
    %c0_14 = arith.constant 0 : index
    %40 = vector.load %arg6[%c0_13, %c0_14] : memref<256x512xbf16, #tpu.memory_space<vmem>>, vector<256x512xbf16>
    %cst_15 = arith.constant dense<0.000000e+00> : vector<8x512xf32>
    %41 = tpu.matmul %39, %40, %cst_15 {dimension_numbers = #tpu.dot_dimension_numbers<[1], [0], [0], [1], [0, 0, 1, 1], [], []>} : vector<8x256xbf16>, vector<256x512xbf16>, vector<8x512xf32> -> vector<8x512xf32>
    %c0_16 = arith.constant 0 : index
    %c0_17 = arith.constant 0 : index
    %42 = vector.load %arg7[%c0_16, %c0_17] : memref<1x512xf32, #tpu.memory_space<vmem>>, vector<1x512xf32>
    %43 = vector.broadcast %42 : vector<1x512xf32> to vector<8x512xf32>
    %44 = arith.addf %41, %43 : vector<8x512xf32>
    %c2 = arith.constant 2 : index
    %45 = memref.load %arg14[%c2] : memref<5xf32, #tpu.memory_space<smem>>
    %cst_18 = arith.constant 0.000000e+00 : f32
    %46 = vector.broadcast %cst_18 : f32 to vector<8x512xf32>
    %47 = arith.cmpf oge, %44, %46 : vector<8x512xf32>
    %48 = vector.broadcast %45 : f32 to vector<8x512xf32>
    %49 = arith.mulf %48, %44 : vector<8x512xf32>
    %50 = arith.select %47, %44, %49 : vector<8x512xi1>, vector<8x512xf32>
    %51 = arith.truncf %50 : vector<8x512xf32> to vector<8x512xbf16>
    %c0_19 = arith.constant 0 : index
    %c0_20 = arith.constant 0 : index
    %52 = vector.load %arg8[%c0_19, %c0_20] : memref<512x256xbf16, #tpu.memory_space<vmem>>, vector<512x256xbf16>
    %cst_21 = arith.constant dense<0.000000e+00> : vector<8x256xf32>
    %53 = tpu.matmul %51, %52, %cst_21 {dimension_numbers = #tpu.dot_dimension_numbers<[1], [0], [0], [1], [0, 0, 1, 1], [], []>} : vector<8x512xbf16>, vector<512x256xbf16>, vector<8x256xf32> -> vector<8x256xf32>
    %c0_22 = arith.constant 0 : index
    %c0_23 = arith.constant 0 : index
    %54 = vector.load %arg9[%c0_22, %c0_23] : memref<1x256xf32, #tpu.memory_space<vmem>>, vector<1x256xf32>
    %55 = vector.broadcast %54 : vector<1x256xf32> to vector<8x256xf32>
    %56 = arith.addf %53, %55 : vector<8x256xf32>
    %c3 = arith.constant 3 : index
    %57 = memref.load %arg14[%c3] : memref<5xf32, #tpu.memory_space<smem>>
    %cst_24 = arith.constant 0.000000e+00 : f32
    %58 = vector.broadcast %cst_24 : f32 to vector<8x256xf32>
    %59 = arith.cmpf oge, %56, %58 : vector<8x256xf32>
    %60 = vector.broadcast %57 : f32 to vector<8x256xf32>
    %61 = arith.mulf %60, %56 : vector<8x256xf32>
    %62 = arith.select %59, %56, %61 : vector<8x256xi1>, vector<8x256xf32>
    %63 = arith.truncf %62 : vector<8x256xf32> to vector<8x256xbf16>
    %c0_25 = arith.constant 0 : index
    %c0_26 = arith.constant 0 : index
    %64 = vector.load %arg10[%c0_25, %c0_26] : memref<256x128xbf16, #tpu.memory_space<vmem>>, vector<256x128xbf16>
    %cst_27 = arith.constant dense<0.000000e+00> : vector<8x128xf32>
    %65 = tpu.matmul %63, %64, %cst_27 {dimension_numbers = #tpu.dot_dimension_numbers<[1], [0], [0], [1], [0, 0, 1, 1], [], []>} : vector<8x256xbf16>, vector<256x128xbf16>, vector<8x128xf32> -> vector<8x128xf32>
    %c0_28 = arith.constant 0 : index
    %c0_29 = arith.constant 0 : index
    %66 = vector.load %arg11[%c0_28, %c0_29] : memref<1x128xf32, #tpu.memory_space<vmem>>, vector<1x128xf32>
    %67 = vector.broadcast %66 : vector<1x128xf32> to vector<8x128xf32>
    %68 = arith.addf %65, %67 : vector<8x128xf32>
    %c4 = arith.constant 4 : index
    %69 = memref.load %arg14[%c4] : memref<5xf32, #tpu.memory_space<smem>>
    %cst_30 = arith.constant 0.000000e+00 : f32
    %70 = vector.broadcast %cst_30 : f32 to vector<8x128xf32>
    %71 = arith.cmpf oge, %68, %70 : vector<8x128xf32>
    %72 = vector.broadcast %69 : f32 to vector<8x128xf32>
    %73 = arith.mulf %72, %68 : vector<8x128xf32>
    %74 = arith.select %71, %68, %73 : vector<8x128xi1>, vector<8x128xf32>
    %75 = arith.truncf %74 : vector<8x128xf32> to vector<8x128xbf16>
    %c0_31 = arith.constant 0 : index
    %c0_32 = arith.constant 0 : index
    %76 = vector.load %arg12[%c0_31, %c0_32] : memref<128x128xbf16, #tpu.memory_space<vmem>>, vector<128x128xbf16>
    %cst_33 = arith.constant dense<0.000000e+00> : vector<8x128xf32>
    %77 = tpu.matmul %75, %76, %cst_33 {dimension_numbers = #tpu.dot_dimension_numbers<[1], [0], [0], [1], [0, 0, 1, 1], [], []>} : vector<8x128xbf16>, vector<128x128xbf16>, vector<8x128xf32> -> vector<8x128xf32>
    %c0_34 = arith.constant 0 : index
    %c0_35 = arith.constant 0 : index
    %78 = vector.load %arg13[%c0_34, %c0_35] : memref<1x128xf32, #tpu.memory_space<vmem>>, vector<1x128xf32>
    %79 = vector.broadcast %78 : vector<1x128xf32> to vector<8x128xf32>
    %80 = arith.addf %77, %79 : vector<8x128xf32>
    %c0_36 = arith.constant 0 : index
    %c0_37 = arith.constant 0 : index
    %81 = vector.load %arg15[%c0_36, %c0_37] : memref<8x128xf32, #tpu.memory_space<vmem>>, vector<8x128xf32>
    tpu.vector_store %arg15[%c0_36, %c0_37], %80 {strides = array<i32>} : memref<8x128xf32, #tpu.memory_space<vmem>>, vector<8x128xf32>,
    return
  }
  func.func @transform_0(%arg0: i32) -> (i32, i32) {
    %c0_i32 = arith.constant 0 : i32
    %c0_i32_0 = arith.constant 0 : i32
    return %arg0, %c0_i32 : i32, i32
  }
  func.func @transform_1(%arg0: i32) -> (i32, i32) {
    %c0_i32 = arith.constant 0 : i32
    %c0_i32_0 = arith.constant 0 : i32
    %c0_i32_1 = arith.constant 0 : i32
    return %c0_i32, %c0_i32_0 : i32, i32
  }
  func.func @transform_2(%arg0: i32) -> (i32, i32) {
    %c0_i32 = arith.constant 0 : i32
    %c0_i32_0 = arith.constant 0 : i32
    %c0_i32_1 = arith.constant 0 : i32
    return %c0_i32, %c0_i32_0 : i32, i32
  }
  func.func @transform_3(%arg0: i32) -> (i32, i32) {
    %c0_i32 = arith.constant 0 : i32
    %c0_i32_0 = arith.constant 0 : i32
    %c0_i32_1 = arith.constant 0 : i32
    return %c0_i32, %c0_i32_0 : i32, i32
  }
  func.func @transform_4(%arg0: i32) -> (i32, i32) {
    %c0_i32 = arith.constant 0 : i32
    %c0_i32_0 = arith.constant 0 : i32
    %c0_i32_1 = arith.constant 0 : i32
    return %c0_i32, %c0_i32_0 : i32, i32
  }
  func.func @transform_5(%arg0: i32) -> (i32, i32) {
    %c0_i32 = arith.constant 0 : i32
    %c0_i32_0 = arith.constant 0 : i32
    %c0_i32_1 = arith.constant 0 : i32
    return %c0_i32, %c0_i32_0 : i32, i32
  }
  func.func @transform_6(%arg0: i32) -> (i32, i32) {
    %c0_i32 = arith.constant 0 : i32
    %c0_i32_0 = arith.constant 0 : i32
    %c0_i32_1 = arith.constant 0 : i32
    return %c0_i32, %c0_i32_0 : i32, i32
  }
  func.func @transform_7(%arg0: i32) -> (i32, i32) {
    %c0_i32 = arith.constant 0 : i32
    %c0_i32_0 = arith.constant 0 : i32
    %c0_i32_1 = arith.constant 0 : i32
    return %c0_i32, %c0_i32_0 : i32, i32
  }
  func.func @transform_8(%arg0: i32) -> (i32, i32) {
    %c0_i32 = arith.constant 0 : i32
    %c0_i32_0 = arith.constant 0 : i32
    %c0_i32_1 = arith.constant 0 : i32
    return %c0_i32, %c0_i32_0 : i32, i32
  }
  func.func @transform_9(%arg0: i32) -> (i32, i32) {
    %c0_i32 = arith.constant 0 : i32
    %c0_i32_0 = arith.constant 0 : i32
    %c0_i32_1 = arith.constant 0 : i32
    return %c0_i32, %c0_i32_0 : i32, i32
  }
  func.func @transform_10(%arg0: i32) -> (i32, i32) {
    %c0_i32 = arith.constant 0 : i32
    %c0_i32_0 = arith.constant 0 : i32
    %c0_i32_1 = arith.constant 0 : i32
    return %c0_i32, %c0_i32_0 : i32, i32
  }
  func.func @transform_11(%arg0: i32) -> (i32, i32) {
    %c0_i32 = arith.constant 0 : i32
    %c0_i32_0 = arith.constant 0 : i32
    %c0_i32_1 = arith.constant 0 : i32
    return %c0_i32, %c0_i32_0 : i32, i32
  }
  func.func @transform_12(%arg0: i32) -> (i32, i32) {
    %c0_i32 = arith.constant 0 : i32
    %c0_i32_0 = arith.constant 0 : i32
    %c0_i32_1 = arith.constant 0 : i32
    return %c0_i32, %c0_i32_0 : i32, i32
  }
  func.func @transform_13(%arg0: i32) -> i32 {
    %c0_i32 = arith.constant 0 : i32
    %c0_i32_0 = arith.constant 0 : i32
    return %c0_i32 : i32
  }
  func.func @transform_14(%arg0: i32) -> (i32, i32) {
    %c0_i32 = arith.constant 0 : i32
    %c0_i32_0 = arith.constant 0 : i32
    return %arg0, %c0_i32 : i32, i32
  }
}

</mosaic_0001>

<llo_original>
// kernel: convo1dnet_s2_forward.1
$region0: #{convo1dnet_s2_forward.1}
  #allocation0 [shape = 'u32[]', space=smem, size = 0x4, offset = 0x4, fixed_abs, tag = 'smem constant byte address 0x4 - core index']
  #allocation1 [shape = 'u32[72,128]{1,0:T(1,128)}', space=vmem, size = 0x9000, scoped, tag = 'internal scratch']
  %s0 = inlined_call_operand.vmem [shape: f32[8,128], index: 0, kind: input, shape index: {}]
  %s1 = inlined_call_operand.hbm [shape: bf16[128,2560], index: 1, kind: input, shape index: {}]
  %s2 = inlined_call_operand.hbm [shape: f32[1,640], index: 2, kind: input, shape index: {}]
  %s3 = inlined_call_operand.hbm [shape: bf16[640,1024], index: 3, kind: input, shape index: {}]
  %s4 = inlined_call_operand.hbm [shape: f32[1,256], index: 4, kind: input, shape index: {}]
  %s5 = inlined_call_operand.hbm [shape: bf16[256,512], index: 5, kind: input, shape index: {}]
  %s6 = inlined_call_operand.hbm [shape: f32[1,512], index: 6, kind: input, shape index: {}]
  %s7 = inlined_call_operand.hbm [shape: bf16[512,256], index: 7, kind: input, shape index: {}]
  %s8 = inlined_call_operand.hbm [shape: f32[1,256], index: 8, kind: input, shape index: {}]
  %s9 = inlined_call_operand.hbm [shape: bf16[256,128], index: 9, kind: input, shape index: {}]
  %s10 = inlined_call_operand.hbm [shape: f32[1,128], index: 10, kind: input, shape index: {}]
  %s11 = inlined_call_operand.hbm [shape: bf16[128,128], index: 11, kind: input, shape index: {}]
  %s12 = inlined_call_operand.hbm [shape: f32[1,128], index: 12, kind: input, shape index: {}]
  %s13 = inlined_call_operand.hbm [shape: f32[5], index: 13, kind: input, shape index: {}]
  %s14 = inlined_call_operand.vmem [shape: f32[8,128], index: 14, kind: output, shape index: {}]
  %s15 = sld [smem:[#allocation0]]
  $region118: #{convo1dnet_s2_forward.1} parent=0
    _
  %s17 = ssub.s32 1, %s15
  %s18 = scalar_select 0, %s17, %s15
  $region1: #{convo1dnet_s2_forward.1} parent=0
    #allocation2 [shape = 'u8[655360]{0}', space=vmem, size = 0xa0000, scoped, tag = 'input window, operand 1, single buffered']
    #allocation3 [shape = 's32[1]{0}', space=sflag, size = 0x4, scoped, tag = 'scoped memory for convo1dnet_s2_forward.1']
    #allocation4 [shape = 's32[1]{0}', space=sflag, size = 0x4, scoped, tag = 'scoped memory for convo1dnet_s2_forward.1']
    #allocation5 [shape = 'u8[2560]{0}', space=vmem, size = 0xc00, scoped, tag = 'input window, operand 2, single buffered']
    #allocation6 [shape = 's32[1]{0}', space=sflag, size = 0x4, scoped, tag = 'scoped memory for convo1dnet_s2_forward.1']
    #allocation7 [shape = 'u8[1310720]{0}', space=vmem, size = 0x140000, scoped, tag = 'input window, operand 3, single buffered']
    #allocation8 [shape = 'u8[1024]{0}', space=vmem, size = 0x400, scoped, tag = 'input window, operand 4, single buffered']
    #allocation9 [shape = 's32[1]{0}', space=sflag, size = 0x4, scoped, tag = 'scoped memory for convo1dnet_s2_forward.1']
    #allocation10 [shape = 'u8[262144]{0}', space=vmem, size = 0x40000, scoped, tag = 'input window, operand 5, single buffered']
    #allocation11 [shape = 'u8[2048]{0}', space=vmem, size = 0x800, scoped, tag = 'input window, operand 6, single buffered']
    #allocation12 [shape = 's32[1]{0}', space=sflag, size = 0x4, scoped, tag = 'scoped memory for convo1dnet_s2_forward.1']
    #allocation13 [shape = 'u8[262144]{0}', space=vmem, size = 0x40000, scoped, tag = 'input window, operand 7, single buffered']
    #allocation14 [shape = 'u8[1024]{0}', space=vmem, size = 0x400, scoped, tag = 'input window, operand 8, single buffered']
    #allocation15 [shape = 's32[1]{0}', space=sflag, size = 0x4, scoped, tag = 'scoped memory for convo1dnet_s2_forward.1']
    #allocation16 [shape = 'u8[65536]{0}', space=vmem, size = 0x10000, scoped, tag = 'input window, operand 9, single buffered']
    #allocation17 [shape = 'u8[512]{0}', space=vmem, size = 0x400, scoped, tag = 'input window, operand 10, single buffered']
    #allocation18 [shape = 's32[1]{0}', space=sflag, size = 0x4, scoped, tag = 'scoped memory for convo1dnet_s2_forward.1']
    #allocation19 [shape = 'u8[32768]{0}', space=vmem, size = 0x8000, scoped, tag = 'input window, operand 11, single buffered']
    #allocation20 [shape = 'u8[512]{0}', space=vmem, size = 0x400, scoped, tag = 'input window, operand 12, single buffered']
    #allocation21 [shape = 's32[1]{0}', space=sflag, size = 0x4, scoped, tag = 'scoped memory for convo1dnet_s2_forward.1']
    #allocation22 [shape = 'u8[512]{0}', space=smem, size = 0x200, scoped, tag = 'input window, operand 13, single buffered']
    %19 = vsyncpa [#allocation3], 0
    %20 = vsyncpa [#allocation6], 0
    %21 = vsyncpa [#allocation9], 0
    %22 = vsyncpa [#allocation12], 0
    %23 = vsyncpa [#allocation15], 0
    %24 = vsyncpa [#allocation18], 0
    %25 = vsyncpa [#allocation21], 0
    %26 = vsyncpa [#allocation4], 0
    // Predicated region
    $region2: #{convo1dnet_s2_forward.1} parent=1 // pred_check
      _
    $region3: #{convo1dnet_s2_forward.1} parent=1 // pred_check_branch
      %28 = sbr.rel (0) target = $region5
    $region4: #{convo1dnet_s2_forward.1} parent=1 // pred_region
      _
    $region5: #{convo1dnet_s2_forward.1} parent=1 // pred_fallthru
      _
    // Predicated region
    $region6: #{convo1dnet_s2_forward.1} parent=1 // pred_check
      _
    $region7: #{convo1dnet_s2_forward.1} parent=1 // pred_check_branch
      %30 = sbr.rel (0) target = $region9
    $region8: #{convo1dnet_s2_forward.1} parent=1 // pred_region
      %32 = vsyncadd [#allocation3], 0
      %s33 = sshll.u32 %s1, 4
      %s34 = int_to_ptr.hbm [resolvable:$true] %s33
      %s35 = sshll.u32 [#allocation2], 4
      %s36 = int_to_ptr.vmem [resolvable:$true] %s35
      %41 = dma.hbm_to_vmem [thread:$0]  %s34, 20480, %s36, [#allocation3], 1280, 1280, 80
    $region9: #{convo1dnet_s2_forward.1} parent=1 // pred_fallthru
      _
    // Predicated region
    $region10: #{convo1dnet_s2_forward.1} parent=1 // pred_check
      _
    $region11: #{convo1dnet_s2_forward.1} parent=1 // pred_check_branch
      %43 = sbr.rel (0) target = $region13
    $region12: #{convo1dnet_s2_forward.1} parent=1 // pred_region
      %45 = vsyncadd [#allocation6], 0
      %s47 = sshll.u32 %s2, 4
      %s48 = int_to_ptr.hbm [resolvable:$true] %s47
      %s49 = sshll.u32 [#allocation5], 4
      %s50 = int_to_ptr.vmem [resolvable:$true] %s49
      %52 = dma.hbm_to_vmem [thread:$0]  %s48, 80, %s50, [#allocation6]
    $region13: #{convo1dnet_s2_forward.1} parent=1 // pred_fallthru
      _
    // Predicated region
    $region14: #{convo1dnet_s2_forward.1} parent=1 // pred_check
      _
    $region15: #{convo1dnet_s2_forward.1} parent=1 // pred_check_branch
      %54 = sbr.rel (0) target = $region17
    $region16: #{convo1dnet_s2_forward.1} parent=1 // pred_region
      %56 = vsyncadd [#allocation6], 0
      %s57 = sshll.u32 %s3, 4
      %s58 = int_to_ptr.hbm [resolvable:$true] %s57
      %s59 = sshll.u32 [#allocation7], 4
      %s60 = int_to_ptr.vmem [resolvable:$true] %s59
      %65 = dma.hbm_to_vmem [thread:$0]  %s58, 40960, %s60, [#allocation6], 512, 512, 32
    $region17: #{convo1dnet_s2_forward.1} parent=1 // pred_fallthru
      _
    // Predicated region
    $region18: #{convo1dnet_s2_forward.1} parent=1 // pred_check
      _
    $region19: #{convo1dnet_s2_forward.1} parent=1 // pred_check_branch
      %67 = sbr.rel (0) target = $region21
    $region20: #{convo1dnet_s2_forward.1} parent=1 // pred_region
      %69 = vsyncadd [#allocation9], 0
      %s71 = sshll.u32 %s4, 4
      %s72 = int_to_ptr.hbm [resolvable:$true] %s71
      %s73 = sshll.u32 [#allocation8], 4
      %s74 = int_to_ptr.vmem [resolvable:$true] %s73
      %76 = dma.hbm_to_vmem [thread:$0]  %s72, 32, %s74, [#allocation9]
    $region21: #{convo1dnet_s2_forward.1} parent=1 // pred_fallthru
      _
    // Predicated region
    $region22: #{convo1dnet_s2_forward.1} parent=1 // pred_check
      _
    $region23: #{convo1dnet_s2_forward.1} parent=1 // pred_check_branch
      %78 = sbr.rel (0) target = $region25
    $region24: #{convo1dnet_s2_forward.1} parent=1 // pred_region
      %80 = vsyncadd [#allocation9], 0
      %s81 = sshll.u32 %s5, 4
      %s82 = int_to_ptr.hbm [resolvable:$true] %s81
      %s83 = sshll.u32 [#allocation10], 4
      %s84 = int_to_ptr.vmem [resolvable:$true] %s83
      %89 = dma.hbm_to_vmem [thread:$0]  %s82, 8192, %s84, [#allocation9], 256, 256, 16
    $region25: #{convo1dnet_s2_forward.1} parent=1 // pred_fallthru
      _
    // Predicated region
    $region26: #{convo1dnet_s2_forward.1} parent=1 // pred_check
      _
    $region27: #{convo1dnet_s2_forward.1} parent=1 // pred_check_branch
      %91 = sbr.rel (0) target = $region29
    $region28: #{convo1dnet_s2_forward.1} parent=1 // pred_region
      %93 = vsyncadd [#allocation12], 0
      %s95 = sshll.u32 %s6, 4
      %s96 = int_to_ptr.hbm [resolvable:$true] %s95
      %s97 = sshll.u32 [#allocation11], 4
      %s98 = int_to_ptr.vmem [resolvable:$true] %s97
      %100 = dma.hbm_to_vmem [thread:$0]  %s96, 64, %s98, [#allocation12]
    $region29: #{convo1dnet_s2_forward.1} parent=1 // pred_fallthru
      _
    // Predicated region
    $region30: #{convo1dnet_s2_forward.1} parent=1 // pred_check
      _
    $region31: #{convo1dnet_s2_forward.1} parent=1 // pred_check_branch
      %102 = sbr.rel (0) target = $region33
    $region32: #{convo1dnet_s2_forward.1} parent=1 // pred_region
      %104 = vsyncadd [#allocation12], 0
      %s105 = sshll.u32 %s7, 4
      %s106 = int_to_ptr.hbm [resolvable:$true] %s105
      %s107 = sshll.u32 [#allocation13], 4
      %s108 = int_to_ptr.vmem [resolvable:$true] %s107
      %113 = dma.hbm_to_vmem [thread:$0]  %s106, 8192, %s108, [#allocation12], 128, 128, 8
    $region33: #{convo1dnet_s2_forward.1} parent=1 // pred_fallthru
      _
    // Predicated region
    $region34: #{convo1dnet_s2_forward.1} parent=1 // pred_check
      _
    $region35: #{convo1dnet_s2_forward.1} parent=1 // pred_check_branch
      %115 = sbr.rel (0) target = $region37
    $region36: #{convo1dnet_s2_forward.1} parent=1 // pred_region
      %117 = vsyncadd [#allocation15], 0
      %s119 = sshll.u32 %s8, 4
      %s120 = int_to_ptr.hbm [resolvable:$true] %s119
      %s121 = sshll.u32 [#allocation14], 4
      %s122 = int_to_ptr.vmem [resolvable:$true] %s121
      %124 = dma.hbm_to_vmem [thread:$0]  %s120, 32, %s122, [#allocation15]
    $region37: #{convo1dnet_s2_forward.1} parent=1 // pred_fallthru
      _
    // Predicated region
    $region38: #{convo1dnet_s2_forward.1} parent=1 // pred_check
      _
    $region39: #{convo1dnet_s2_forward.1} parent=1 // pred_check_branch
      %126 = sbr.rel (0) target = $region41
    $region40: #{convo1dnet_s2_forward.1} parent=1 // pred_region
      %128 = vsyncadd [#allocation15], 0
      %s129 = sshll.u32 %s9, 4
      %s130 = int_to_ptr.hbm [resolvable:$true] %s129
      %s131 = sshll.u32 [#allocation16], 4
      %s132 = int_to_ptr.vmem [resolvable:$true] %s131
      %137 = dma.hbm_to_vmem [thread:$0]  %s130, 2048, %s132, [#allocation15], 64, 64, 4
    $region41: #{convo1dnet_s2_forward.1} parent=1 // pred_fallthru
      _
    // Predicated region
    $region42: #{convo1dnet_s2_forward.1} parent=1 // pred_check
      _
    $region43: #{convo1dnet_s2_forward.1} parent=1 // pred_check_branch
      %139 = sbr.rel (0) target = $region45
    $region44: #{convo1dnet_s2_forward.1} parent=1 // pred_region
      %141 = vsyncadd [#allocation18], 0
      %s143 = sshll.u32 %s10, 4
      %s144 = int_to_ptr.hbm [resolvable:$true] %s143
      %s145 = sshll.u32 [#allocation17], 4
      %s146 = int_to_ptr.vmem [resolvable:$true] %s145
      %148 = dma.hbm_to_vmem [thread:$0]  %s144, 16, %s146, [#allocation18]
    $region45: #{convo1dnet_s2_forward.1} parent=1 // pred_fallthru
      _
    // Predicated region
    $region46: #{convo1dnet_s2_forward.1} parent=1 // pred_check
      _
    $region47: #{convo1dnet_s2_forward.1} parent=1 // pred_check_branch
      %150 = sbr.rel (0) target = $region49
    $region48: #{convo1dnet_s2_forward.1} parent=1 // pred_region
      %152 = vsyncadd [#allocation18], 0
      %s153 = sshll.u32 %s11, 4
      %s154 = int_to_ptr.hbm [resolvable:$true] %s153
      %s155 = sshll.u32 [#allocation19], 4
      %s156 = int_to_ptr.vmem [resolvable:$true] %s155
      %161 = dma.hbm_to_vmem [thread:$0]  %s154, 1024, %s156, [#allocation18], 64, 64, 4
    $region49: #{convo1dnet_s2_forward.1} parent=1 // pred_fallthru
      _
    // Predicated region
    $region50: #{convo1dnet_s2_forward.1} parent=1 // pred_check
      _
    $region51: #{convo1dnet_s2_forward.1} parent=1 // pred_check_branch
      %163 = sbr.rel (0) target = $region53
    $region52: #{convo1dnet_s2_forward.1} parent=1 // pred_region
      %165 = vsyncadd [#allocation21], 0
      %s167 = sshll.u32 %s12, 4
      %s168 = int_to_ptr.hbm [resolvable:$true] %s167
      %s169 = sshll.u32 [#allocation20], 4
      %s170 = int_to_ptr.vmem [resolvable:$true] %s169
      %172 = dma.hbm_to_vmem [thread:$0]  %s168, 16, %s170, [#allocation21]
    $region53: #{convo1dnet_s2_forward.1} parent=1 // pred_fallthru
      _
    // Predicated region
    $region54: #{convo1dnet_s2_forward.1} parent=1 // pred_check
      _
    $region55: #{convo1dnet_s2_forward.1} parent=1 // pred_check_branch
      %174 = sbr.rel (0) target = $region57
    $region56: #{convo1dnet_s2_forward.1} parent=1 // pred_region
      %176 = vsyncadd [#allocation4], 0
      %s178 = sshll.u32 %s13, 4
      %s179 = int_to_ptr.hbm [resolvable:$true] %s178
      %181 = dma.hbm_to_smem %s179, 16, [#allocation22], [#allocation4]
    $region57: #{convo1dnet_s2_forward.1} parent=1 // pred_fallthru
      _
    // Predicated region
    $region58: #{convo1dnet_s2_forward.1} parent=1 // pred_check
      _
    $region59: #{convo1dnet_s2_forward.1} parent=1 // pred_check_branch
      %183 = sbr.rel (0) target = $region61
    $region60: #{convo1dnet_s2_forward.1} parent=1 // pred_region
      %185 = dma.done [#allocation3], 20480
    $region61: #{convo1dnet_s2_forward.1} parent=1 // pred_fallthru
      _
    // Predicated region
    $region62: #{convo1dnet_s2_forward.1} parent=1 // pred_check
      _
    $region63: #{convo1dnet_s2_forward.1} parent=1 // pred_check_branch
      %187 = sbr.rel (0) target = $region65
    $region64: #{convo1dnet_s2_forward.1} parent=1 // pred_region
      %189 = dma.done [#allocation6], 80
    $region65: #{convo1dnet_s2_forward.1} parent=1 // pred_fallthru
      _
    // Predicated region
    $region66: #{convo1dnet_s2_forward.1} parent=1 // pred_check
      _
    $region67: #{convo1dnet_s2_forward.1} parent=1 // pred_check_branch
      %191 = sbr.rel (0) target = $region69
    $region68: #{convo1dnet_s2_forward.1} parent=1 // pred_region
      %193 = dma.done [#allocation6], 40960
    $region69: #{convo1dnet_s2_forward.1} parent=1 // pred_fallthru
      _
    // Predicated region
    $region70: #{convo1dnet_s2_forward.1} parent=1 // pred_check
      _
    $region71: #{convo1dnet_s2_forward.1} parent=1 // pred_check_branch
      %195 = sbr.rel (0) target = $region73
    $region72: #{convo1dnet_s2_forward.1} parent=1 // pred_region
      %197 = dma.done [#allocation9], 32
    $region73: #{convo1dnet_s2_forward.1} parent=1 // pred_fallthru
      _
    // Predicated region
    $region74: #{convo1dnet_s2_forward.1} parent=1 // pred_check
      _
    $region75: #{convo1dnet_s2_forward.1} parent=1 // pred_check_branch
      %199 = sbr.rel (0) target = $region77
    $region76: #{convo1dnet_s2_forward.1} parent=1 // pred_region
      %201 = dma.done [#allocation9], 8192
    $region77: #{convo1dnet_s2_forward.1} parent=1 // pred_fallthru
      _
    // Predicated region
    $region78: #{convo1dnet_s2_forward.1} parent=1 // pred_check
      _
    $region79: #{convo1dnet_s2_forward.1} parent=1 // pred_check_branch
      %203 = sbr.rel (0) target = $region81
    $region80: #{convo1dnet_s2_forward.1} parent=1 // pred_region
      %205 = dma.done [#allocation12], 64
    $region81: #{convo1dnet_s2_forward.1} parent=1 // pred_fallthru
      _
    // Predicated region
    $region82: #{convo1dnet_s2_forward.1} parent=1 // pred_check
      _
    $region83: #{convo1dnet_s2_forward.1} parent=1 // pred_check_branch
      %207 = sbr.rel (0) target = $region85
    $region84: #{convo1dnet_s2_forward.1} parent=1 // pred_region
      %209 = dma.done [#allocation12], 8192
    $region85: #{convo1dnet_s2_forward.1} parent=1 // pred_fallthru
      _
    // Predicated region
    $region86: #{convo1dnet_s2_forward.1} parent=1 // pred_check
      _
    $region87: #{convo1dnet_s2_forward.1} parent=1 // pred_check_branch
      %211 = sbr.rel (0) target = $region89
    $region88: #{convo1dnet_s2_forward.1} parent=1 // pred_region
      %213 = dma.done [#allocation15], 32
    $region89: #{convo1dnet_s2_forward.1} parent=1 // pred_fallthru
      _
    // Predicated region
    $region90: #{convo1dnet_s2_forward.1} parent=1 // pred_check
      _
    $region91: #{convo1dnet_s2_forward.1} parent=1 // pred_check_branch
      %215 = sbr.rel (0) target = $region93
    $region92: #{convo1dnet_s2_forward.1} parent=1 // pred_region
      %217 = dma.done [#allocation15], 2048
    $region93: #{convo1dnet_s2_forward.1} parent=1 // pred_fallthru
      _
    // Predicated region
    $region94: #{convo1dnet_s2_forward.1} parent=1 // pred_check
      _
    $region95: #{convo1dnet_s2_forward.1} parent=1 // pred_check_branch
      %219 = sbr.rel (0) target = $region97
    $region96: #{convo1dnet_s2_forward.1} parent=1 // pred_region
      %221 = dma.done [#allocation18], 16
    $region97: #{convo1dnet_s2_forward.1} parent=1 // pred_fallthru
      _
    // Predicated region
    $region98: #{convo1dnet_s2_forward.1} parent=1 // pred_check
      _
    $region99: #{convo1dnet_s2_forward.1} parent=1 // pred_check_branch
      %223 = sbr.rel (0) target = $region101
    $region100: #{convo1dnet_s2_forward.1} parent=1 // pred_region
      %225 = dma.done [#allocation18], 1024
    $region101: #{convo1dnet_s2_forward.1} parent=1 // pred_fallthru
      _
    // Predicated region
    $region102: #{convo1dnet_s2_forward.1} parent=1 // pred_check
      _
    $region103: #{convo1dnet_s2_forward.1} parent=1 // pred_check_branch
      %227 = sbr.rel (0) target = $region105
    $region104: #{convo1dnet_s2_forward.1} parent=1 // pred_region
      %229 = dma.done [#allocation21], 16
    $region105: #{convo1dnet_s2_forward.1} parent=1 // pred_fallthru
      _
    // Predicated region
    $region106: #{convo1dnet_s2_forward.1} parent=1 // pred_check
      _
    $region107: #{convo1dnet_s2_forward.1} parent=1 // pred_check_branch
      %231 = sbr.rel (0) target = $region109
    $region108: #{convo1dnet_s2_forward.1} parent=1 // pred_region
      %233 = dma.done [#allocation4], 16
    $region109: #{convo1dnet_s2_forward.1} parent=1 // pred_fallthru
      _
    %234 = sfence
    %v235 = vld [vmem:[%s0] sm:$0xff]
    %v236 = vpack.c.bf16 %v235, %v235
    %v237 = vld [vmem:[#allocation2] sm:$0xff]
    %v238 = vld [vmem:[#allocation2 + $0x8] sm:$0xff]
    %v239 = vld [vmem:[#allocation2 + $0x10] sm:$0xff]
    %v240 = vld [vmem:[#allocation2 + $0x18] sm:$0xff]
    %v241 = vld [vmem:[#allocation2 + $0x20] sm:$0xff]
    %v242 = vld [vmem:[#allocation2 + $0x28] sm:$0xff]
    %v243 = vld [vmem:[#allocation2 + $0x30] sm:$0xff]
    %v244 = vld [vmem:[#allocation2 + $0x38] sm:$0xff]
    %v245 = vld [vmem:[#allocation2 + $0x40] sm:$0xff]
    %v246 = vld [vmem:[#allocation2 + $0x48] sm:$0xff]
    %v247 = vld [vmem:[#allocation2 + $0x50] sm:$0xff]
    %v248 = vld [vmem:[#allocation2 + $0x58] sm:$0xff]
    %v249 = vld [vmem:[#allocation2 + $0x60] sm:$0xff]
    %v250 = vld [vmem:[#allocation2 + $0x68] sm:$0xff]
    %v251 = vld [vmem:[#allocation2 + $0x70] sm:$0xff]
    %v252 = vld [vmem:[#allocation2 + $0x78] sm:$0xff]
    %v253 = vld [vmem:[#allocation2 + $0x80] sm:$0xff]
    %v254 = vld [vmem:[#allocation2 + $0x88] sm:$0xff]
    %v255 = vld [vmem:[#allocation2 + $0x90] sm:$0xff]
    %v256 = vld [vmem:[#allocation2 + $0x98] sm:$0xff]
    %v257 = vld [vmem:[#allocation2 + $0xa0] sm:$0xff]
    %v258 = vld [vmem:[#allocation2 + $0xa8] sm:$0xff]
    %v259 = vld [vmem:[#allocation2 + $0xb0] sm:$0xff]
    %v260 = vld [vmem:[#allocation2 + $0xb8] sm:$0xff]
    %v261 = vld [vmem:[#allocation2 + $0xc0] sm:$0xff]
    %v262 = vld [vmem:[#allocation2 + $0xc8] sm:$0xff]
    %v263 = vld [vmem:[#allocation2 + $0xd0] sm:$0xff]
    %v264 = vld [vmem:[#allocation2 + $0xd8] sm:$0xff]
    %v265 = vld [vmem:[#allocation2 + $0xe0] sm:$0xff]
    %v266 = vld [vmem:[#allocation2 + $0xe8] sm:$0xff]
    %v267 = vld [vmem:[#allocation2 + $0xf0] sm:$0xff]
    %v268 = vld [vmem:[#allocation2 + $0xf8] sm:$0xff]
    %v269 = vld [vmem:[#allocation2 + $0x100] sm:$0xff]
    %v270 = vld [vmem:[#allocation2 + $0x108] sm:$0xff]
    %v271 = vld [vmem:[#allocation2 + $0x110] sm:$0xff]
    %v272 = vld [vmem:[#allocation2 + $0x118] sm:$0xff]
    %v273 = vld [vmem:[#allocation2 + $0x120] sm:$0xff]
    %v274 = vld [vmem:[#allocation2 + $0x128] sm:$0xff]
    %v275 = vld [vmem:[#allocation2 + $0x130] sm:$0xff]
    %v276 = vld [vmem:[#allocation2 + $0x138] sm:$0xff]
    %v277 = vld [vmem:[#allocation2 + $0x140] sm:$0xff]
    %v278 = vld [vmem:[#allocation2 + $0x148] sm:$0xff]
    %v279 = vld [vmem:[#allocation2 + $0x150] sm:$0xff]
    %v280 = vld [vmem:[#allocation2 + $0x158] sm:$0xff]
    %v281 = vld [vmem:[#allocation2 + $0x160] sm:$0xff]
    %v282 = vld [vmem:[#allocation2 + $0x168] sm:$0xff]
    %v283 = vld [vmem:[#allocation2 + $0x170] sm:$0xff]
    %v284 = vld [vmem:[#allocation2 + $0x178] sm:$0xff]
    %v285 = vld [vmem:[#allocation2 + $0x180] sm:$0xff]
    %v286 = vld [vmem:[#allocation2 + $0x188] sm:$0xff]
    %v287 = vld [vmem:[#allocation2 + $0x190] sm:$0xff]
    %v288 = vld [vmem:[#allocation2 + $0x198] sm:$0xff]
    %v289 = vld [vmem:[#allocation2 + $0x1a0] sm:$0xff]
    %v290 = vld [vmem:[#allocation2 + $0x1a8] sm:$0xff]
    %v291 = vld [vmem:[#allocation2 + $0x1b0] sm:$0xff]
    %v292 = vld [vmem:[#allocation2 + $0x1b8] sm:$0xff]
    %v293 = vld [vmem:[#allocation2 + $0x1c0] sm:$0xff]
    %v294 = vld [vmem:[#allocation2 + $0x1c8] sm:$0xff]
    %v295 = vld [vmem:[#allocation2 + $0x1d0] sm:$0xff]
    %v296 = vld [vmem:[#allocation2 + $0x1d8] sm:$0xff]
    %v297 = vld [vmem:[#allocation2 + $0x1e0] sm:$0xff]
    %v298 = vld [vmem:[#allocation2 + $0x1e8] sm:$0xff]
    %v299 = vld [vmem:[#allocation2 + $0x1f0] sm:$0xff]
    %v300 = vld [vmem:[#allocation2 + $0x1f8] sm:$0xff]
    %v301 = vld [vmem:[#allocation2 + $0x200] sm:$0xff]
    %v302 = vld [vmem:[#allocation2 + $0x208] sm:$0xff]
    %v303 = vld [vmem:[#allocation2 + $0x210] sm:$0xff]
    %v304 = vld [vmem:[#allocation2 + $0x218] sm:$0xff]
    %v305 = vld [vmem:[#allocation2 + $0x220] sm:$0xff]
    %v306 = vld [vmem:[#allocation2 + $0x228] sm:$0xff]
    %v307 = vld [vmem:[#allocation2 + $0x230] sm:$0xff]
    %v308 = vld [vmem:[#allocation2 + $0x238] sm:$0xff]
    %v309 = vld [vmem:[#allocation2 + $0x240] sm:$0xff]
    %v310 = vld [vmem:[#allocation2 + $0x248] sm:$0xff]
    %v311 = vld [vmem:[#allocation2 + $0x250] sm:$0xff]
    %v312 = vld [vmem:[#allocation2 + $0x258] sm:$0xff]
    %v313 = vld [vmem:[#allocation2 + $0x260] sm:$0xff]
    %v314 = vld [vmem:[#allocation2 + $0x268] sm:$0xff]
    %v315 = vld [vmem:[#allocation2 + $0x270] sm:$0xff]
    %v316 = vld [vmem:[#allocation2 + $0x278] sm:$0xff]
    %v317 = vld [vmem:[#allocation2 + $0x280] sm:$0xff]
    %v318 = vld [vmem:[#allocation2 + $0x288] sm:$0xff]
    %v319 = vld [vmem:[#allocation2 + $0x290] sm:$0xff]
    %v320 = vld [vmem:[#allocation2 + $0x298] sm:$0xff]
    %v321 = vld [vmem:[#allocation2 + $0x2a0] sm:$0xff]
    %v322 = vld [vmem:[#allocation2 + $0x2a8] sm:$0xff]
    %v323 = vld [vmem:[#allocation2 + $0x2b0] sm:$0xff]
    %v324 = vld [vmem:[#allocation2 + $0x2b8] sm:$0xff]
    %v325 = vld [vmem:[#allocation2 + $0x2c0] sm:$0xff]
    %v326 = vld [vmem:[#allocation2 + $0x2c8] sm:$0xff]
    %v327 = vld [vmem:[#allocation2 + $0x2d0] sm:$0xff]
    %v328 = vld [vmem:[#allocation2 + $0x2d8] sm:$0xff]
    %v329 = vld [vmem:[#allocation2 + $0x2e0] sm:$0xff]
    %v330 = vld [vmem:[#allocation2 + $0x2e8] sm:$0xff]
    %v331 = vld [vmem:[#allocation2 + $0x2f0] sm:$0xff]
    %v332 = vld [vmem:[#allocation2 + $0x2f8] sm:$0xff]
    %v333 = vld [vmem:[#allocation2 + $0x300] sm:$0xff]
    %v334 = vld [vmem:[#allocation2 + $0x308] sm:$0xff]
    %v335 = vld [vmem:[#allocation2 + $0x310] sm:$0xff]
    %v336 = vld [vmem:[#allocation2 + $0x318] sm:$0xff]
    %v337 = vld [vmem:[#allocation2 + $0x320] sm:$0xff]
    %v338 = vld [vmem:[#allocation2 + $0x328] sm:$0xff]
    %v339 = vld [vmem:[#allocation2 + $0x330] sm:$0xff]
    %v340 = vld [vmem:[#allocation2 + $0x338] sm:$0xff]
    %v341 = vld [vmem:[#allocation2 + $0x340] sm:$0xff]
    %v342 = vld [vmem:[#allocation2 + $0x348] sm:$0xff]
    %v343 = vld [vmem:[#allocation2 + $0x350] sm:$0xff]
    %v344 = vld [vmem:[#allocation2 + $0x358] sm:$0xff]
    %v345 = vld [vmem:[#allocation2 + $0x360] sm:$0xff]
    %v346 = vld [vmem:[#allocation2 + $0x368] sm:$0xff]
    %v347 = vld [vmem:[#allocation2 + $0x370] sm:$0xff]
    %v348 = vld [vmem:[#allocation2 + $0x378] sm:$0xff]
    %v349 = vld [vmem:[#allocation2 + $0x380] sm:$0xff]
    %v350 = vld [vmem:[#allocation2 + $0x388] sm:$0xff]
    %v351 = vld [vmem:[#allocation2 + $0x390] sm:$0xff]
    %v352 = vld [vmem:[#allocation2 + $0x398] sm:$0xff]
    %v353 = vld [vmem:[#allocation2 + $0x3a0] sm:$0xff]
    %v354 = vld [vmem:[#allocation2 + $0x3a8] sm:$0xff]
    %v355 = vld [vmem:[#allocation2 + $0x3b0] sm:$0xff]
    %v356 = vld [vmem:[#allocation2 + $0x3b8] sm:$0xff]
    %v357 = vld [vmem:[#allocation2 + $0x3c0] sm:$0xff]
    %v358 = vld [vmem:[#allocation2 + $0x3c8] sm:$0xff]
    %v359 = vld [vmem:[#allocation2 + $0x3d0] sm:$0xff]
    %v360 = vld [vmem:[#allocation2 + $0x3d8] sm:$0xff]
    %v361 = vld [vmem:[#allocation2 + $0x3e0] sm:$0xff]
    %v362 = vld [vmem:[#allocation2 + $0x3e8] sm:$0xff]
    %v363 = vld [vmem:[#allocation2 + $0x3f0] sm:$0xff]
    %v364 = vld [vmem:[#allocation2 + $0x3f8] sm:$0xff]
    %v365 = vld [vmem:[#allocation2 + $0x400] sm:$0xff]
    %v366 = vld [vmem:[#allocation2 + $0x408] sm:$0xff]
    %v367 = vld [vmem:[#allocation2 + $0x410] sm:$0xff]
    %v368 = vld [vmem:[#allocation2 + $0x418] sm:$0xff]
    %v369 = vld [vmem:[#allocation2 + $0x420] sm:$0xff]
    %v370 = vld [vmem:[#allocation2 + $0x428] sm:$0xff]
    %v371 = vld [vmem:[#allocation2 + $0x430] sm:$0xff]
    %v372 = vld [vmem:[#allocation2 + $0x438] sm:$0xff]
    %v373 = vld [vmem:[#allocation2 + $0x440] sm:$0xff]
    %v374 = vld [vmem:[#allocation2 + $0x448] sm:$0xff]
    %v375 = vld [vmem:[#allocation2 + $0x450] sm:$0xff]
    %v376 = vld [vmem:[#allocation2 + $0x458] sm:$0xff]
    %v377 = vld [vmem:[#allocation2 + $0x460] sm:$0xff]
    %v378 = vld [vmem:[#allocation2 + $0x468] sm:$0xff]
    %v379 = vld [vmem:[#allocation2 + $0x470] sm:$0xff]
    %v380 = vld [vmem:[#allocation2 + $0x478] sm:$0xff]
    %v381 = vld [vmem:[#allocation2 + $0x480] sm:$0xff]
    %v382 = vld [vmem:[#allocation2 + $0x488] sm:$0xff]
    %v383 = vld [vmem:[#allocation2 + $0x490] sm:$0xff]
    %v384 = vld [vmem:[#allocation2 + $0x498] sm:$0xff]
    %v385 = vld [vmem:[#allocation2 + $0x4a0] sm:$0xff]
    %v386 = vld [vmem:[#allocation2 + $0x4a8] sm:$0xff]
    %v387 = vld [vmem:[#allocation2 + $0x4b0] sm:$0xff]
    %v388 = vld [vmem:[#allocation2 + $0x4b8] sm:$0xff]
    %v389 = vld [vmem:[#allocation2 + $0x4c0] sm:$0xff]
    %v390 = vld [vmem:[#allocation2 + $0x4c8] sm:$0xff]
    %v391 = vld [vmem:[#allocation2 + $0x4d0] sm:$0xff]
    %v392 = vld [vmem:[#allocation2 + $0x4d8] sm:$0xff]
    %v393 = vld [vmem:[#allocation2 + $0x4e0] sm:$0xff]
    %v394 = vld [vmem:[#allocation2 + $0x4e8] sm:$0xff]
    %v395 = vld [vmem:[#allocation2 + $0x4f0] sm:$0xff]
    %v396 = vld [vmem:[#allocation2 + $0x4f8] sm:$0xff]
    %v557 = vunpack.c.l.b16 %v237
    %v558 = vunpack.c.h.b16 %v237
    %v559 = vunpack.c.l.b16 %v238
    %v560 = vunpack.c.h.b16 %v238
    %v561 = vunpack.c.l.b16 %v239
    %v562 = vunpack.c.h.b16 %v239
    %v563 = vunpack.c.l.b16 %v240
    %v564 = vunpack.c.h.b16 %v240
    %v565 = vunpack.c.l.b16 %v241
    %v566 = vunpack.c.h.b16 %v241
    %v567 = vunpack.c.l.b16 %v242
    %v568 = vunpack.c.h.b16 %v242
    %v569 = vunpack.c.l.b16 %v243
    %v570 = vunpack.c.h.b16 %v243
    %v571 = vunpack.c.l.b16 %v244
    %v572 = vunpack.c.h.b16 %v244
    %v573 = vunpack.c.l.b16 %v245
    %v574 = vunpack.c.h.b16 %v245
    %v575 = vunpack.c.l.b16 %v246
    %v576 = vunpack.c.h.b16 %v246
    %v577 = vunpack.c.l.b16 %v247
    %v578 = vunpack.c.h.b16 %v247
    %v579 = vunpack.c.l.b16 %v248
    %v580 = vunpack.c.h.b16 %v248
    %v581 = vunpack.c.l.b16 %v249
    %v582 = vunpack.c.h.b16 %v249
    %v583 = vunpack.c.l.b16 %v250
    %v584 = vunpack.c.h.b16 %v250
    %v585 = vunpack.c.l.b16 %v251
    %v586 = vunpack.c.h.b16 %v251
    %v587 = vunpack.c.l.b16 %v252
    %v588 = vunpack.c.h.b16 %v252
    %v589 = vunpack.c.l.b16 %v253
    %v590 = vunpack.c.h.b16 %v253
    %v591 = vunpack.c.l.b16 %v254
    %v592 = vunpack.c.h.b16 %v254
    %v593 = vunpack.c.l.b16 %v255
    %v594 = vunpack.c.h.b16 %v255
    %v595 = vunpack.c.l.b16 %v256
    %v596 = vunpack.c.h.b16 %v256
    %v597 = vunpack.c.l.b16 %v257
    %v598 = vunpack.c.h.b16 %v257
    %v599 = vunpack.c.l.b16 %v258
    %v600 = vunpack.c.h.b16 %v258
    %v601 = vunpack.c.l.b16 %v259
    %v602 = vunpack.c.h.b16 %v259
    %v603 = vunpack.c.l.b16 %v260
    %v604 = vunpack.c.h.b16 %v260
    %v605 = vunpack.c.l.b16 %v261
    %v606 = vunpack.c.h.b16 %v261
    %v607 = vunpack.c.l.b16 %v262
    %v608 = vunpack.c.h.b16 %v262
    %v609 = vunpack.c.l.b16 %v263
    %v610 = vunpack.c.h.b16 %v263
    %v611 = vunpack.c.l.b16 %v264
    %v612 = vunpack.c.h.b16 %v264
    %v613 = vunpack.c.l.b16 %v265
    %v614 = vunpack.c.h.b16 %v265
    %v615 = vunpack.c.l.b16 %v266
    %v616 = vunpack.c.h.b16 %v266
    %v617 = vunpack.c.l.b16 %v267
    %v618 = vunpack.c.h.b16 %v267
    %v619 = vunpack.c.l.b16 %v268
    %v620 = vunpack.c.h.b16 %v268
    %v621 = vunpack.c.l.b16 %v269
    %v622 = vunpack.c.h.b16 %v269
    %v623 = vunpack.c.l.b16 %v270
    %v624 = vunpack.c.h.b16 %v270
    %v625 = vunpack.c.l.b16 %v271
    %v626 = vunpack.c.h.b16 %v271
    %v627 = vunpack.c.l.b16 %v272
    %v628 = vunpack.c.h.b16 %v272
    %v629 = vunpack.c.l.b16 %v273
    %v630 = vunpack.c.h.b16 %v273
    %v631 = vunpack.c.l.b16 %v274
    %v632 = vunpack.c.h.b16 %v274
    %v633 = vunpack.c.l.b16 %v275
    %v634 = vunpack.c.h.b16 %v275
    %v635 = vunpack.c.l.b16 %v276
    %v636 = vunpack.c.h.b16 %v276
    %v637 = vunpack.c.l.b16 %v277
    %v638 = vunpack.c.h.b16 %v277
    %v639 = vunpack.c.l.b16 %v278
    %v640 = vunpack.c.h.b16 %v278
    %v641 = vunpack.c.l.b16 %v279
    %v642 = vunpack.c.h.b16 %v279
    %v643 = vunpack.c.l.b16 %v280
    %v644 = vunpack.c.h.b16 %v280
    %v645 = vunpack.c.l.b16 %v281
    %v646 = vunpack.c.h.b16 %v281
    %v647 = vunpack.c.l.b16 %v282
    %v648 = vunpack.c.h.b16 %v282
    %v649 = vunpack.c.l.b16 %v283
    %v650 = vunpack.c.h.b16 %v283
    %v651 = vunpack.c.l.b16 %v284
    %v652 = vunpack.c.h.b16 %v284
    %v653 = vunpack.c.l.b16 %v285
    %v654 = vunpack.c.h.b16 %v285
    %v655 = vunpack.c.l.b16 %v286
    %v656 = vunpack.c.h.b16 %v286
    %v657 = vunpack.c.l.b16 %v287
    %v658 = vunpack.c.h.b16 %v287
    %v659 = vunpack.c.l.b16 %v288
    %v660 = vunpack.c.h.b16 %v288
    %v661 = vunpack.c.l.b16 %v289
    %v662 = vunpack.c.h.b16 %v289
    %v663 = vunpack.c.l.b16 %v290
    %v664 = vunpack.c.h.b16 %v290
    %v665 = vunpack.c.l.b16 %v291
    %v666 = vunpack.c.h.b16 %v291
    %v667 = vunpack.c.l.b16 %v292
    %v668 = vunpack.c.h.b16 %v292
    %v669 = vunpack.c.l.b16 %v293
    %v670 = vunpack.c.h.b16 %v293
    %v671 = vunpack.c.l.b16 %v294
    %v672 = vunpack.c.h.b16 %v294
    %v673 = vunpack.c.l.b16 %v295
    %v674 = vunpack.c.h.b16 %v295
    %v675 = vunpack.c.l.b16 %v296
    %v676 = vunpack.c.h.b16 %v296
    %v677 = vunpack.c.l.b16 %v297
    %v678 = vunpack.c.h.b16 %v297
    %v679 = vunpack.c.l.b16 %v298
    %v680 = vunpack.c.h.b16 %v298
    %v681 = vunpack.c.l.b16 %v299
    %v682 = vunpack.c.h.b16 %v299
    %v683 = vunpack.c.l.b16 %v300
    %v684 = vunpack.c.h.b16 %v300
    %v685 = vunpack.c.l.b16 %v301
    %v686 = vunpack.c.h.b16 %v301
    %v687 = vunpack.c.l.b16 %v302
    %v688 = vunpack.c.h.b16 %v302
    %v689 = vunpack.c.l.b16 %v303
    %v690 = vunpack.c.h.b16 %v303
    %v691 = vunpack.c.l.b16 %v304
    %v692 = vunpack.c.h.b16 %v304
    %v693 = vunpack.c.l.b16 %v305
    %v694 = vunpack.c.h.b16 %v305
    %v695 = vunpack.c.l.b16 %v306
    %v696 = vunpack.c.h.b16 %v306
    %v697 = vunpack.c.l.b16 %v307
    %v698 = vunpack.c.h.b16 %v307
    %v699 = vunpack.c.l.b16 %v308
    %v700 = vunpack.c.h.b16 %v308
    %v701 = vunpack.c.l.b16 %v309
    %v702 = vunpack.c.h.b16 %v309
    %v703 = vunpack.c.l.b16 %v310
    %v704 = vunpack.c.h.b16 %v310
    %v705 = vunpack.c.l.b16 %v311
    %v706 = vunpack.c.h.b16 %v311
    %v707 = vunpack.c.l.b16 %v312
    %v708 = vunpack.c.h.b16 %v312
    %v709 = vunpack.c.l.b16 %v313
    %v710 = vunpack.c.h.b16 %v313
    %v711 = vunpack.c.l.b16 %v314
    %v712 = vunpack.c.h.b16 %v314
    %v713 = vunpack.c.l.b16 %v315
    %v714 = vunpack.c.h.b16 %v315
    %v715 = vunpack.c.l.b16 %v316
    %v716 = vunpack.c.h.b16 %v316
    %v717 = vunpack.c.l.b16 %v317
    %v718 = vunpack.c.h.b16 %v317
    %v719 = vunpack.c.l.b16 %v318
    %v720 = vunpack.c.h.b16 %v318
    %v721 = vunpack.c.l.b16 %v319
    %v722 = vunpack.c.h.b16 %v319
    %v723 = vunpack.c.l.b16 %v320
    %v724 = vunpack.c.h.b16 %v320
    %v725 = vunpack.c.l.b16 %v321
    %v726 = vunpack.c.h.b16 %v321
    %v727 = vunpack.c.l.b16 %v322
    %v728 = vunpack.c.h.b16 %v322
    %v729 = vunpack.c.l.b16 %v323
    %v730 = vunpack.c.h.b16 %v323
    %v731 = vunpack.c.l.b16 %v324
    %v732 = vunpack.c.h.b16 %v324
    %v733 = vunpack.c.l.b16 %v325
    %v734 = vunpack.c.h.b16 %v325
    %v735 = vunpack.c.l.b16 %v326
    %v736 = vunpack.c.h.b16 %v326
    %v737 = vunpack.c.l.b16 %v327
    %v738 = vunpack.c.h.b16 %v327
    %v739 = vunpack.c.l.b16 %v328
    %v740 = vunpack.c.h.b16 %v328
    %v741 = vunpack.c.l.b16 %v329
    %v742 = vunpack.c.h.b16 %v329
    %v743 = vunpack.c.l.b16 %v330
    %v744 = vunpack.c.h.b16 %v330
    %v745 = vunpack.c.l.b16 %v331
    %v746 = vunpack.c.h.b16 %v331
    %v747 = vunpack.c.l.b16 %v332
    %v748 = vunpack.c.h.b16 %v332
    %v749 = vunpack.c.l.b16 %v333
    %v750 = vunpack.c.h.b16 %v333
    %v751 = vunpack.c.l.b16 %v334
    %v752 = vunpack.c.h.b16 %v334
    %v753 = vunpack.c.l.b16 %v335
    %v754 = vunpack.c.h.b16 %v335
    %v755 = vunpack.c.l.b16 %v336
    %v756 = vunpack.c.h.b16 %v336
    %v757 = vunpack.c.l.b16 %v337
    %v758 = vunpack.c.h.b16 %v337
    %v759 = vunpack.c.l.b16 %v338
    %v760 = vunpack.c.h.b16 %v338
    %v761 = vunpack.c.l.b16 %v339
    %v762 = vunpack.c.h.b16 %v339
    %v763 = vunpack.c.l.b16 %v340
    %v764 = vunpack.c.h.b16 %v340
    %v765 = vunpack.c.l.b16 %v341
    %v766 = vunpack.c.h.b16 %v341
    %v767 = vunpack.c.l.b16 %v342
    %v768 = vunpack.c.h.b16 %v342
    %v769 = vunpack.c.l.b16 %v343
    %v770 = vunpack.c.h.b16 %v343
    %v771 = vunpack.c.l.b16 %v344
    %v772 = vunpack.c.h.b16 %v344
    %v773 = vunpack.c.l.b16 %v345
    %v774 = vunpack.c.h.b16 %v345
    %v775 = vunpack.c.l.b16 %v346
    %v776 = vunpack.c.h.b16 %v346
    %v777 = vunpack.c.l.b16 %v347
    %v778 = vunpack.c.h.b16 %v347
    %v779 = vunpack.c.l.b16 %v348
    %v780 = vunpack.c.h.b16 %v348
    %v781 = vunpack.c.l.b16 %v349
    %v782 = vunpack.c.h.b16 %v349
    %v783 = vunpack.c.l.b16 %v350
    %v784 = vunpack.c.h.b16 %v350
    %v785 = vunpack.c.l.b16 %v351
    %v786 = vunpack.c.h.b16 %v351
    %v787 = vunpack.c.l.b16 %v352
    %v788 = vunpack.c.h.b16 %v352
    %v789 = vunpack.c.l.b16 %v353
    %v790 = vunpack.c.h.b16 %v353
    %v791 = vunpack.c.l.b16 %v354
    %v792 = vunpack.c.h.b16 %v354
    %v793 = vunpack.c.l.b16 %v355
    %v794 = vunpack.c.h.b16 %v355
    %v795 = vunpack.c.l.b16 %v356
    %v796 = vunpack.c.h.b16 %v356
    %v797 = vunpack.c.l.b16 %v357
    %v798 = vunpack.c.h.b16 %v357
    %v799 = vunpack.c.l.b16 %v358
    %v800 = vunpack.c.h.b16 %v358
    %v801 = vunpack.c.l.b16 %v359
    %v802 = vunpack.c.h.b16 %v359
    %v803 = vunpack.c.l.b16 %v360
    %v804 = vunpack.c.h.b16 %v360
    %v805 = vunpack.c.l.b16 %v361
    %v806 = vunpack.c.h.b16 %v361
    %v807 = vunpack.c.l.b16 %v362
    %v808 = vunpack.c.h.b16 %v362
    %v809 = vunpack.c.l.b16 %v363
    %v810 = vunpack.c.h.b16 %v363
    %v811 = vunpack.c.l.b16 %v364
    %v812 = vunpack.c.h.b16 %v364
    %v813 = vunpack.c.l.b16 %v365
    %v814 = vunpack.c.h.b16 %v365
    %v815 = vunpack.c.l.b16 %v366
    %v816 = vunpack.c.h.b16 %v366
    %v817 = vunpack.c.l.b16 %v367
    %v818 = vunpack.c.h.b16 %v367
    %v819 = vunpack.c.l.b16 %v368
    %v820 = vunpack.c.h.b16 %v368
    %v821 = vunpack.c.l.b16 %v369
    %v822 = vunpack.c.h.b16 %v369
    %v823 = vunpack.c.l.b16 %v370
    %v824 = vunpack.c.h.b16 %v370
    %v825 = vunpack.c.l.b16 %v371
    %v826 = vunpack.c.h.b16 %v371
    %v827 = vunpack.c.l.b16 %v372
    %v828 = vunpack.c.h.b16 %v372
    %v829 = vunpack.c.l.b16 %v373
    %v830 = vunpack.c.h.b16 %v373
    %v831 = vunpack.c.l.b16 %v374
    %v832 = vunpack.c.h.b16 %v374
    %v833 = vunpack.c.l.b16 %v375
    %v834 = vunpack.c.h.b16 %v375
    %v835 = vunpack.c.l.b16 %v376
    %v836 = vunpack.c.h.b16 %v376
    %v837 = vunpack.c.l.b16 %v377
    %v838 = vunpack.c.h.b16 %v377
    %v839 = vunpack.c.l.b16 %v378
    %v840 = vunpack.c.h.b16 %v378
    %v841 = vunpack.c.l.b16 %v379
    %v842 = vunpack.c.h.b16 %v379
    %v843 = vunpack.c.l.b16 %v380
    %v844 = vunpack.c.h.b16 %v380
    %v845 = vunpack.c.l.b16 %v381
    %v846 = vunpack.c.h.b16 %v381
    %v847 = vunpack.c.l.b16 %v382
    %v848 = vunpack.c.h.b16 %v382
    %v849 = vunpack.c.l.b16 %v383
    %v850 = vunpack.c.h.b16 %v383
    %v851 = vunpack.c.l.b16 %v384
    %v852 = vunpack.c.h.b16 %v384
    %v853 = vunpack.c.l.b16 %v385
    %v854 = vunpack.c.h.b16 %v385
    %v855 = vunpack.c.l.b16 %v386
    %v856 = vunpack.c.h.b16 %v386
    %v857 = vunpack.c.l.b16 %v387
    %v858 = vunpack.c.h.b16 %v387
    %v859 = vunpack.c.l.b16 %v388
    %v860 = vunpack.c.h.b16 %v388
    %v861 = vunpack.c.l.b16 %v389
    %v862 = vunpack.c.h.b16 %v389
    %v863 = vunpack.c.l.b16 %v390
    %v864 = vunpack.c.h.b16 %v390
    %v865 = vunpack.c.l.b16 %v391
    %v866 = vunpack.c.h.b16 %v391
    %v867 = vunpack.c.l.b16 %v392
    %v868 = vunpack.c.h.b16 %v392
    %v869 = vunpack.c.l.b16 %v393
    %v870 = vunpack.c.h.b16 %v393
    %v871 = vunpack.c.l.b16 %v394
    %v872 = vunpack.c.h.b16 %v394
    %v873 = vunpack.c.l.b16 %v395
    %v874 = vunpack.c.h.b16 %v395
    %v875 = vunpack.c.l.b16 %v396
    %v876 = vunpack.c.h.b16 %v396
    %v877 = vpack.c.b16 %v577, %v557
    %v878 = vpack.c.b16 %v578, %v558
    %v879 = vpack.c.b16 %v579, %v559
    %v880 = vpack.c.b16 %v580, %v560
    %v881 = vpack.c.b16 %v581, %v561
    %v882 = vpack.c.b16 %v582, %v562
    %v883 = vpack.c.b16 %v583, %v563
    %v884 = vpack.c.b16 %v584, %v564
    %v885 = vpack.c.b16 %v585, %v565
    %v886 = vpack.c.b16 %v586, %v566
    %v887 = vpack.c.b16 %v587, %v567
    %v888 = vpack.c.b16 %v588, %v568
    %v889 = vpack.c.b16 %v589, %v569
    %v890 = vpack.c.b16 %v590, %v570
    %v891 = vpack.c.b16 %v591, %v571
    %v892 = vpack.c.b16 %v592, %v572
    %v893 = vpack.c.b16 %v593, %v573
    %v894 = vpack.c.b16 %v594, %v574
    %v895 = vpack.c.b16 %v595, %v575
    %v896 = vpack.c.b16 %v596, %v576
    %v897 = vpack.c.b16 %v617, %v597
    %v898 = vpack.c.b16 %v618, %v598
    %v899 = vpack.c.b16 %v619, %v599
    %v900 = vpack.c.b16 %v620, %v600
    %v901 = vpack.c.b16 %v621, %v601
    %v902 = vpack.c.b16 %v622, %v602
    %v903 = vpack.c.b16 %v623, %v603
    %v904 = vpack.c.b16 %v624, %v604
    %v905 = vpack.c.b16 %v625, %v605
    %v906 = vpack.c.b16 %v626, %v606
    %v907 = vpack.c.b16 %v627, %v607
    %v908 = vpack.c.b16 %v628, %v608
    %v909 = vpack.c.b16 %v629, %v609
    %v910 = vpack.c.b16 %v630, %v610
    %v911 = vpack.c.b16 %v631, %v611
    %v912 = vpack.c.b16 %v632, %v612
    %v913 = vpack.c.b16 %v633, %v613
    %v914 = vpack.c.b16 %v634, %v614
    %v915 = vpack.c.b16 %v635, %v615
    %v916 = vpack.c.b16 %v636, %v616
    %v917 = vpack.c.b16 %v657, %v637
    %v918 = vpack.c.b16 %v658, %v638
    %v919 = vpack.c.b16 %v659, %v639
    %v920 = vpack.c.b16 %v660, %v640
    %v921 = vpack.c.b16 %v661, %v641
    %v922 = vpack.c.b16 %v662, %v642
    %v923 = vpack.c.b16 %v663, %v643
    %v924 = vpack.c.b16 %v664, %v644
    %v925 = vpack.c.b16 %v665, %v645
    %v926 = vpack.c.b16 %v666, %v646
    %v927 = vpack.c.b16 %v667, %v647
    %v928 = vpack.c.b16 %v668, %v648
    %v929 = vpack.c.b16 %v669, %v649
    %v930 = vpack.c.b16 %v670, %v650
    %v931 = vpack.c.b16 %v671, %v651
    %v932 = vpack.c.b16 %v672, %v652
    %v933 = vpack.c.b16 %v673, %v653
    %v934 = vpack.c.b16 %v674, %v654
    %v935 = vpack.c.b16 %v675, %v655
    %v936 = vpack.c.b16 %v676, %v656
    %v937 = vpack.c.b16 %v697, %v677
    %v938 = vpack.c.b16 %v698, %v678
    %v939 = vpack.c.b16 %v699, %v679
    %v940 = vpack.c.b16 %v700, %v680
    %v941 = vpack.c.b16 %v701, %v681
    %v942 = vpack.c.b16 %v702, %v682
    %v943 = vpack.c.b16 %v703, %v683
    %v944 = vpack.c.b16 %v704, %v684
    %v945 = vpack.c.b16 %v705, %v685
    %v946 = vpack.c.b16 %v706, %v686
    %v947 = vpack.c.b16 %v707, %v687
    %v948 = vpack.c.b16 %v708, %v688
    %v949 = vpack.c.b16 %v709, %v689
    %v950 = vpack.c.b16 %v710, %v690
    %v951 = vpack.c.b16 %v711, %v691
    %v952 = vpack.c.b16 %v712, %v692
    %v953 = vpack.c.b16 %v713, %v693
    %v954 = vpack.c.b16 %v714, %v694
    %v955 = vpack.c.b16 %v715, %v695
    %v956 = vpack.c.b16 %v716, %v696
    %v957 = vpack.c.b16 %v737, %v717
    %v958 = vpack.c.b16 %v738, %v718
    %v959 = vpack.c.b16 %v739, %v719
    %v960 = vpack.c.b16 %v740, %v720
    %v961 = vpack.c.b16 %v741, %v721
    %v962 = vpack.c.b16 %v742, %v722
    %v963 = vpack.c.b16 %v743, %v723
    %v964 = vpack.c.b16 %v744, %v724
    %v965 = vpack.c.b16 %v745, %v725
    %v966 = vpack.c.b16 %v746, %v726
    %v967 = vpack.c.b16 %v747, %v727
    %v968 = vpack.c.b16 %v748, %v728
    %v969 = vpack.c.b16 %v749, %v729
    %v970 = vpack.c.b16 %v750, %v730
    %v971 = vpack.c.b16 %v751, %v731
    %v972 = vpack.c.b16 %v752, %v732
    %v973 = vpack.c.b16 %v753, %v733
    %v974 = vpack.c.b16 %v754, %v734
    %v975 = vpack.c.b16 %v755, %v735
    %v976 = vpack.c.b16 %v756, %v736
    %v977 = vpack.c.b16 %v777, %v757
    %v978 = vpack.c.b16 %v778, %v758
    %v979 = vpack.c.b16 %v779, %v759
    %v980 = vpack.c.b16 %v780, %v760
    %v981 = vpack.c.b16 %v781, %v761
    %v982 = vpack.c.b16 %v782, %v762
    %v983 = vpack.c.b16 %v783, %v763
    %v984 = vpack.c.b16 %v784, %v764
    %v985 = vpack.c.b16 %v785, %v765
    %v986 = vpack.c.b16 %v786, %v766
    %v987 = vpack.c.b16 %v787, %v767
    %v988 = vpack.c.b16 %v788, %v768
    %v989 = vpack.c.b16 %v789, %v769
    %v990 = vpack.c.b16 %v790, %v770
    %v991 = vpack.c.b16 %v791, %v771
    %v992 = vpack.c.b16 %v792, %v772
    %v993 = vpack.c.b16 %v793, %v773
    %v994 = vpack.c.b16 %v794, %v774
    %v995 = vpack.c.b16 %v795, %v775
    %v996 = vpack.c.b16 %v796, %v776
    %v997 = vpack.c.b16 %v817, %v797
    %v998 = vpack.c.b16 %v818, %v798
    %v999 = vpack.c.b16 %v819, %v799
    %v1000 = vpack.c.b16 %v820, %v800
    %v1001 = vpack.c.b16 %v821, %v801
    %v1002 = vpack.c.b16 %v822, %v802
    %v1003 = vpack.c.b16 %v823, %v803
    %v1004 = vpack.c.b16 %v824, %v804
    %v1005 = vpack.c.b16 %v825, %v805
    %v1006 = vpack.c.b16 %v826, %v806
    %v1007 = vpack.c.b16 %v827, %v807
    %v1008 = vpack.c.b16 %v828, %v808
    %v1009 = vpack.c.b16 %v829, %v809
    %v1010 = vpack.c.b16 %v830, %v810
    %v1011 = vpack.c.b16 %v831, %v811
    %v1012 = vpack.c.b16 %v832, %v812
    %v1013 = vpack.c.b16 %v833, %v813
    %v1014 = vpack.c.b16 %v834, %v814
    %v1015 = vpack.c.b16 %v835, %v815
    %v1016 = vpack.c.b16 %v836, %v816
    %v1017 = vpack.c.b16 %v857, %v837
    %v1018 = vpack.c.b16 %v858, %v838
    %v1019 = vpack.c.b16 %v859, %v839
    %v1020 = vpack.c.b16 %v860, %v840
    %v1021 = vpack.c.b16 %v861, %v841
    %v1022 = vpack.c.b16 %v862, %v842
    %v1023 = vpack.c.b16 %v863, %v843
    %v1024 = vpack.c.b16 %v864, %v844
    %v1025 = vpack.c.b16 %v865, %v845
    %v1026 = vpack.c.b16 %v866, %v846
    %v1027 = vpack.c.b16 %v867, %v847
    %v1028 = vpack.c.b16 %v868, %v848
    %v1029 = vpack.c.b16 %v869, %v849
    %v1030 = vpack.c.b16 %v870, %v850
    %v1031 = vpack.c.b16 %v871, %v851
    %v1032 = vpack.c.b16 %v872, %v852
    %v1033 = vpack.c.b16 %v873, %v853
    %v1034 = vpack.c.b16 %v874, %v854
    %v1035 = vpack.c.b16 %v875, %v855
    %v1036 = vpack.c.b16 %v876, %v856
    %1197 = vmatpush.bf16.msra.mxu0 %v1017
    %1198 = vmatpush.bf16.msra.mxu0 %v997
    %1199 = vmatpush.bf16.msra.mxu0 %v977
    %1200 = vmatpush.bf16.msra.mxu0 %v957
    %1201 = vmatpush.bf16.msra.mxu0 %v937
    %1202 = vmatpush.bf16.msra.mxu0 %v917
    %1203 = vmatpush.bf16.msra.mxu0 %v897
    %1204 = vmatpush.bf16.msra.mxu0 %v877
    %1205 = vmatmul.bf16.gmra.mxu0 %v236
    %v1206 = vpop.f32.mrf.mxu0
    %v1207 = vadd.f32 0.0, %v1206
    %v1208 = vpop.f32.mrf.mxu0
    %1209 = vdwg.mxu0
    %1210 = vmatpush.bf16.msra.mxu0 %v1018
    %1211 = vmatpush.bf16.msra.mxu0 %v998
    %1212 = vmatpush.bf16.msra.mxu0 %v978
    %1213 = vmatpush.bf16.msra.mxu0 %v958
    %1214 = vmatpush.bf16.msra.mxu0 %v938
    %1215 = vmatpush.bf16.msra.mxu0 %v918
    %1216 = vmatpush.bf16.msra.mxu0 %v898
    %1217 = vmatpush.bf16.msra.mxu0 %v878
    %1218 = vmatmul.bf16.gmra.mxu0 %v236
    %v1219 = vpop.f32.mrf.mxu0
    %v1220 = vadd.f32 0.0, %v1219
    %v1221 = vpop.f32.mrf.mxu0
    %1222 = vdwg.mxu0
    %1223 = vmatpush.bf16.msra.mxu0 %v1019
    %1224 = vmatpush.bf16.msra.mxu0 %v999
    %1225 = vmatpush.bf16.msra.mxu0 %v979
    %1226 = vmatpush.bf16.msra.mxu0 %v959
    %1227 = vmatpush.bf16.msra.mxu0 %v939
    %1228 = vmatpush.bf16.msra.mxu0 %v919
    %1229 = vmatpush.bf16.msra.mxu0 %v899
    %1230 = vmatpush.bf16.msra.mxu0 %v879
    %1231 = vmatmul.bf16.gmra.mxu0 %v236
    %v1232 = vpop.f32.mrf.mxu0
    %v1233 = vadd.f32 0.0, %v1232
    %v1234 = vpop.f32.mrf.mxu0
    %1235 = vdwg.mxu0
    %1236 = vmatpush.bf16.msra.mxu0 %v1020
    %1237 = vmatpush.bf16.msra.mxu0 %v1000
    %1238 = vmatpush.bf16.msra.mxu0 %v980
    %1239 = vmatpush.bf16.msra.mxu0 %v960
    %1240 = vmatpush.bf16.msra.mxu0 %v940
    %1241 = vmatpush.bf16.msra.mxu0 %v920
    %1242 = vmatpush.bf16.msra.mxu0 %v900
    %1243 = vmatpush.bf16.msra.mxu0 %v880
    %1244 = vmatmul.bf16.gmra.mxu0 %v236
    %v1245 = vpop.f32.mrf.mxu0
    %v1246 = vadd.f32 0.0, %v1245
    %v1247 = vpop.f32.mrf.mxu0
    %1248 = vdwg.mxu0
    %1249 = vmatpush.bf16.msra.mxu0 %v1021
    %1250 = vmatpush.bf16.msra.mxu0 %v1001
    %1251 = vmatpush.bf16.msra.mxu0 %v981
    %1252 = vmatpush.bf16.msra.mxu0 %v961
    %1253 = vmatpush.bf16.msra.mxu0 %v941
    %1254 = vmatpush.bf16.msra.mxu0 %v921
    %1255 = vmatpush.bf16.msra.mxu0 %v901
    %1256 = vmatpush.bf16.msra.mxu0 %v881
    %1257 = vmatmul.bf16.gmra.mxu0 %v236
    %v1258 = vpop.f32.mrf.mxu0
    %v1259 = vadd.f32 0.0, %v1258
    %v1260 = vpop.f32.mrf.mxu0
    %1261 = vdwg.mxu0
    %1262 = vmatpush.bf16.msra.mxu0 %v1022
    %1263 = vmatpush.bf16.msra.mxu0 %v1002
    %1264 = vmatpush.bf16.msra.mxu0 %v982
    %1265 = vmatpush.bf16.msra.mxu0 %v962
    %1266 = vmatpush.bf16.msra.mxu0 %v942
    %1267 = vmatpush.bf16.msra.mxu0 %v922
    %1268 = vmatpush.bf16.msra.mxu0 %v902
    %1269 = vmatpush.bf16.msra.mxu0 %v882
    %1270 = vmatmul.bf16.gmra.mxu0 %v236
    %v1271 = vpop.f32.mrf.mxu0
    %v1272 = vadd.f32 0.0, %v1271
    %v1273 = vpop.f32.mrf.mxu0
    %1274 = vdwg.mxu0
    %1275 = vmatpush.bf16.msra.mxu0 %v1023
    %1276 = vmatpush.bf16.msra.mxu0 %v1003
    %1277 = vmatpush.bf16.msra.mxu0 %v983
    %1278 = vmatpush.bf16.msra.mxu0 %v963
    %1279 = vmatpush.bf16.msra.mxu0 %v943
    %1280 = vmatpush.bf16.msra.mxu0 %v923
    %1281 = vmatpush.bf16.msra.mxu0 %v903
    %1282 = vmatpush.bf16.msra.mxu0 %v883
    %1283 = vmatmul.bf16.gmra.mxu0 %v236
    %v1284 = vpop.f32.mrf.mxu0
    %v1285 = vadd.f32 0.0, %v1284
    %v1286 = vpop.f32.mrf.mxu0
    %1287 = vdwg.mxu0
    %1288 = vmatpush.bf16.msra.mxu0 %v1024
    %1289 = vmatpush.bf16.msra.mxu0 %v1004
    %1290 = vmatpush.bf16.msra.mxu0 %v984
    %1291 = vmatpush.bf16.msra.mxu0 %v964
    %1292 = vmatpush.bf16.msra.mxu0 %v944
    %1293 = vmatpush.bf16.msra.mxu0 %v924
    %1294 = vmatpush.bf16.msra.mxu0 %v904
    %1295 = vmatpush.bf16.msra.mxu0 %v884
    %1296 = vmatmul.bf16.gmra.mxu0 %v236
    %v1297 = vpop.f32.mrf.mxu0
    %v1298 = vadd.f32 0.0, %v1297
    %v1299 = vpop.f32.mrf.mxu0
    %1300 = vdwg.mxu0
    %1301 = vmatpush.bf16.msra.mxu0 %v1025
    %1302 = vmatpush.bf16.msra.mxu0 %v1005
    %1303 = vmatpush.bf16.msra.mxu0 %v985
    %1304 = vmatpush.bf16.msra.mxu0 %v965
    %1305 = vmatpush.bf16.msra.mxu0 %v945
    %1306 = vmatpush.bf16.msra.mxu0 %v925
    %1307 = vmatpush.bf16.msra.mxu0 %v905
    %1308 = vmatpush.bf16.msra.mxu0 %v885
    %1309 = vmatmul.bf16.gmra.mxu0 %v236
    %v1310 = vpop.f32.mrf.mxu0
    %v1311 = vadd.f32 0.0, %v1310
    %v1312 = vpop.f32.mrf.mxu0
    %1313 = vdwg.mxu0
    %1314 = vmatpush.bf16.msra.mxu0 %v1026
    %1315 = vmatpush.bf16.msra.mxu0 %v1006
    %1316 = vmatpush.bf16.msra.mxu0 %v986
    %1317 = vmatpush.bf16.msra.mxu0 %v966
    %1318 = vmatpush.bf16.msra.mxu0 %v946
    %1319 = vmatpush.bf16.msra.mxu0 %v926
    %1320 = vmatpush.bf16.msra.mxu0 %v906
    %1321 = vmatpush.bf16.msra.mxu0 %v886
    %1322 = vmatmul.bf16.gmra.mxu0 %v236
    %v1323 = vpop.f32.mrf.mxu0
    %v1324 = vadd.f32 0.0, %v1323
    %v1325 = vpop.f32.mrf.mxu0
    %1326 = vdwg.mxu0
    %1327 = vmatpush.bf16.msra.mxu0 %v1027
    %1328 = vmatpush.bf16.msra.mxu0 %v1007
    %1329 = vmatpush.bf16.msra.mxu0 %v987
    %1330 = vmatpush.bf16.msra.mxu0 %v967
    %1331 = vmatpush.bf16.msra.mxu0 %v947
    %1332 = vmatpush.bf16.msra.mxu0 %v927
    %1333 = vmatpush.bf16.msra.mxu0 %v907
    %1334 = vmatpush.bf16.msra.mxu0 %v887
    %1335 = vmatmul.bf16.gmra.mxu0 %v236
    %v1336 = vpop.f32.mrf.mxu0
    %v1337 = vadd.f32 0.0, %v1336
    %v1338 = vpop.f32.mrf.mxu0
    %1339 = vdwg.mxu0
    %1340 = vmatpush.bf16.msra.mxu0 %v1028
    %1341 = vmatpush.bf16.msra.mxu0 %v1008
    %1342 = vmatpush.bf16.msra.mxu0 %v988
    %1343 = vmatpush.bf16.msra.mxu0 %v968
    %1344 = vmatpush.bf16.msra.mxu0 %v948
    %1345 = vmatpush.bf16.msra.mxu0 %v928
    %1346 = vmatpush.bf16.msra.mxu0 %v908
    %1347 = vmatpush.bf16.msra.mxu0 %v888
    %1348 = vmatmul.bf16.gmra.mxu0 %v236
    %v1349 = vpop.f32.mrf.mxu0
    %v1350 = vadd.f32 0.0, %v1349
    %v1351 = vpop.f32.mrf.mxu0
    %1352 = vdwg.mxu0
    %1353 = vmatpush.bf16.msra.mxu0 %v1029
    %1354 = vmatpush.bf16.msra.mxu0 %v1009
    %1355 = vmatpush.bf16.msra.mxu0 %v989
    %1356 = vmatpush.bf16.msra.mxu0 %v969
    %1357 = vmatpush.bf16.msra.mxu0 %v949
    %1358 = vmatpush.bf16.msra.mxu0 %v929
    %1359 = vmatpush.bf16.msra.mxu0 %v909
    %1360 = vmatpush.bf16.msra.mxu0 %v889
    %1361 = vmatmul.bf16.gmra.mxu0 %v236
    %v1362 = vpop.f32.mrf.mxu0
    %v1363 = vadd.f32 0.0, %v1362
    %v1364 = vpop.f32.mrf.mxu0
    %1365 = vdwg.mxu0
    %1366 = vmatpush.bf16.msra.mxu0 %v1030
    %1367 = vmatpush.bf16.msra.mxu0 %v1010
    %1368 = vmatpush.bf16.msra.mxu0 %v990
    %1369 = vmatpush.bf16.msra.mxu0 %v970
    %1370 = vmatpush.bf16.msra.mxu0 %v950
    %1371 = vmatpush.bf16.msra.mxu0 %v930
    %1372 = vmatpush.bf16.msra.mxu0 %v910
    %1373 = vmatpush.bf16.msra.mxu0 %v890
    %1374 = vmatmul.bf16.gmra.mxu0 %v236
    %v1375 = vpop.f32.mrf.mxu0
    %v1376 = vadd.f32 0.0, %v1375
    %v1377 = vpop.f32.mrf.mxu0
    %1378 = vdwg.mxu0
    %1379 = vmatpush.bf16.msra.mxu0 %v1031
    %1380 = vmatpush.bf16.msra.mxu0 %v1011
    %1381 = vmatpush.bf16.msra.mxu0 %v991
    %1382 = vmatpush.bf16.msra.mxu0 %v971
    %1383 = vmatpush.bf16.msra.mxu0 %v951
    %1384 = vmatpush.bf16.msra.mxu0 %v931
    %1385 = vmatpush.bf16.msra.mxu0 %v911
    %1386 = vmatpush.bf16.msra.mxu0 %v891
    %1387 = vmatmul.bf16.gmra.mxu0 %v236
    %v1388 = vpop.f32.mrf.mxu0
    %v1389 = vadd.f32 0.0, %v1388
    %v1390 = vpop.f32.mrf.mxu0
    %1391 = vdwg.mxu0
    %1392 = vmatpush.bf16.msra.mxu0 %v1032
    %1393 = vmatpush.bf16.msra.mxu0 %v1012
    %1394 = vmatpush.bf16.msra.mxu0 %v992
    %1395 = vmatpush.bf16.msra.mxu0 %v972
    %1396 = vmatpush.bf16.msra.mxu0 %v952
    %1397 = vmatpush.bf16.msra.mxu0 %v932
    %1398 = vmatpush.bf16.msra.mxu0 %v912
    %1399 = vmatpush.bf16.msra.mxu0 %v892
    %1400 = vmatmul.bf16.gmra.mxu0 %v236
    %v1401 = vpop.f32.mrf.mxu0
    %v1402 = vadd.f32 0.0, %v1401
    %v1403 = vpop.f32.mrf.mxu0
    %1404 = vdwg.mxu0
    %1405 = vmatpush.bf16.msra.mxu0 %v1033
    %1406 = vmatpush.bf16.msra.mxu0 %v1013
    %1407 = vmatpush.bf16.msra.mxu0 %v993
    %1408 = vmatpush.bf16.msra.mxu0 %v973
    %1409 = vmatpush.bf16.msra.mxu0 %v953
    %1410 = vmatpush.bf16.msra.mxu0 %v933
    %1411 = vmatpush.bf16.msra.mxu0 %v913
    %1412 = vmatpush.bf16.msra.mxu0 %v893
    %1413 = vmatmul.bf16.gmra.mxu0 %v236
    %v1414 = vpop.f32.mrf.mxu0
    %v1415 = vadd.f32 0.0, %v1414
    %v1416 = vpop.f32.mrf.mxu0
    %1417 = vdwg.mxu0
    %1418 = vmatpush.bf16.msra.mxu0 %v1034
    %1419 = vmatpush.bf16.msra.mxu0 %v1014
    %1420 = vmatpush.bf16.msra.mxu0 %v994
    %1421 = vmatpush.bf16.msra.mxu0 %v974
    %1422 = vmatpush.bf16.msra.mxu0 %v954
    %1423 = vmatpush.bf16.msra.mxu0 %v934
    %1424 = vmatpush.bf16.msra.mxu0 %v914
    %1425 = vmatpush.bf16.msra.mxu0 %v894
    %1426 = vmatmul.bf16.gmra.mxu0 %v236
    %v1427 = vpop.f32.mrf.mxu0
    %v1428 = vadd.f32 0.0, %v1427
    %v1429 = vpop.f32.mrf.mxu0
    %1430 = vdwg.mxu0
    %1431 = vmatpush.bf16.msra.mxu0 %v1035
    %1432 = vmatpush.bf16.msra.mxu0 %v1015
    %1433 = vmatpush.bf16.msra.mxu0 %v995
    %1434 = vmatpush.bf16.msra.mxu0 %v975
    %1435 = vmatpush.bf16.msra.mxu0 %v955
    %1436 = vmatpush.bf16.msra.mxu0 %v935
    %1437 = vmatpush.bf16.msra.mxu0 %v915
    %1438 = vmatpush.bf16.msra.mxu0 %v895
    %1439 = vmatmul.bf16.gmra.mxu0 %v236
    %v1440 = vpop.f32.mrf.mxu0
    %v1441 = vadd.f32 0.0, %v1440
    %v1442 = vpop.f32.mrf.mxu0
    %1443 = vdwg.mxu0
    %1444 = vmatpush.bf16.msra.mxu0 %v1036
    %1445 = vmatpush.bf16.msra.mxu0 %v1016
    %1446 = vmatpush.bf16.msra.mxu0 %v996
    %1447 = vmatpush.bf16.msra.mxu0 %v976
    %1448 = vmatpush.bf16.msra.mxu0 %v956
    %1449 = vmatpush.bf16.msra.mxu0 %v936
    %1450 = vmatpush.bf16.msra.mxu0 %v916
    %1451 = vmatpush.bf16.msra.mxu0 %v896
    %1452 = vmatmul.bf16.gmra.mxu0 %v236
    %v1453 = vpop.f32.mrf.mxu0
    %v1454 = vadd.f32 0.0, %v1453
    %v1455 = vpop.f32.mrf.mxu0
    %1456 = vdwg.mxu0
    %v1457 = vmax.f32 %v1207, %v1272
    %v1458 = vmax.f32 %v1220, %v1285
    %v1459 = vmax.f32 %v1233, %v1298
    %v1460 = vmax.f32 %v1246, %v1311
    %v1461 = vmax.f32 %v1259, %v1324
    %v1462 = vmax.f32 %v1337, %v1402
    %v1463 = vmax.f32 %v1350, %v1415
    %v1464 = vmax.f32 %v1363, %v1428
    %v1465 = vmax.f32 %v1376, %v1441
    %v1466 = vmax.f32 %v1389, %v1454
    %v1467 = vmax.f32 %v1457, %v1462
    %v1468 = vmax.f32 %v1458, %v1463
    %v1469 = vmax.f32 %v1459, %v1464
    %v1470 = vmax.f32 %v1460, %v1465
    %v1471 = vmax.f32 %v1461, %v1466
    %v1472 = vld [vmem:[#allocation5] sm:$0x1f]
    %v1474 = vperm.slane %v1472, 0
    %v1475 = vperm.slane %v1472, 1
    %v1476 = vperm.slane %v1472, 2
    %v1477 = vperm.slane %v1472, 3
    %v1478 = vperm.slane %v1472, 4
    %v1484 = vadd.f32 %v1467, %v1474
    %v1485 = vadd.f32 %v1468, %v1475
    %v1486 = vadd.f32 %v1469, %v1476
    %v1487 = vadd.f32 %v1470, %v1477
    %v1488 = vadd.f32 %v1471, %v1478
    %s1489 = sld [smem:[#allocation22]]
    %vm1490 = vcmp.ge.f32.partialorder %v1484, 0.0
    %vm1491 = vcmp.ge.f32.partialorder %v1485, 0.0
    %vm1492 = vcmp.ge.f32.partialorder %v1486, 0.0
    %vm1493 = vcmp.ge.f32.partialorder %v1487, 0.0
    %vm1494 = vcmp.ge.f32.partialorder %v1488, 0.0
    %v1495 = vstv %s1489
    %v1496 = vmul.f32 %v1495, %v1484
    %v1497 = vmul.f32 %v1495, %v1485
    %v1498 = vmul.f32 %v1495, %v1486
    %v1499 = vmul.f32 %v1495, %v1487
    %v1500 = vmul.f32 %v1495, %v1488
    %v1501 = vsel %vm1490, %v1484, %v1496
    %v1502 = vsel %vm1491, %v1485, %v1497
    %v1503 = vsel %vm1492, %v1486, %v1498
    %v1504 = vsel %vm1493, %v1487, %v1499
    %v1505 = vsel %vm1494, %v1488, %v1500
    %v1506 = vpack.c.bf16 %v1501, %v1501
    %v1507 = vpack.c.bf16 %v1502, %v1502
    %v1508 = vpack.c.bf16 %v1503, %v1503
    %v1509 = vpack.c.bf16 %v1504, %v1504
    %v1510 = vpack.c.bf16 %v1505, %v1505
    %v1511 = vld [vmem:[#allocation7] sm:$0xff]
    %v1512 = vld [vmem:[#allocation7 + $0x8] sm:$0xff]
    %v1513 = vld [vmem:[#allocation7 + $0x10] sm:$0xff]
    %v1514 = vld [vmem:[#allocation7 + $0x18] sm:$0xff]
    %v1515 = vld [vmem:[#allocation7 + $0x20] sm:$0xff]
    %v1516 = vld [vmem:[#allocation7 + $0x28] sm:$0xff]
    %v1517 = vld [vmem:[#allocation7 + $0x30] sm:$0xff]
    %v1518 = vld [vmem:[#allocation7 + $0x38] sm:$0xff]
    %v1519 = vld [vmem:[#allocation7 + $0x40] sm:$0xff]
    %v1520 = vld [vmem:[#allocation7 + $0x48] sm:$0xff]
    %v1521 = vld [vmem:[#allocation7 + $0x50] sm:$0xff]
    %v1522 = vld [vmem:[#allocation7 + $0x58] sm:$0xff]
    %v1523 = vld [vmem:[#allocation7 + $0x60] sm:$0xff]
    %v1524 = vld [vmem:[#allocation7 + $0x68] sm:$0xff]
    %v1525 = vld [vmem:[#allocation7 + $0x70] sm:$0xff]
    %v1526 = vld [vmem:[#allocation7 + $0x78] sm:$0xff]
    %v1527 = vld [vmem:[#allocation7 + $0x80] sm:$0xff]
    %v1528 = vld [vmem:[#allocation7 + $0x88] sm:$0xff]
    %v1529 = vld [vmem:[#allocation7 + $0x90] sm:$0xff]
    %v1530 = vld [vmem:[#allocation7 + $0x98] sm:$0xff]
    %v1531 = vld [vmem:[#allocation7 + $0xa0] sm:$0xff]
    %v1532 = vld [vmem:[#allocation7 + $0xa8] sm:$0xff]
    %v1533 = vld [vmem:[#allocation7 + $0xb0] sm:$0xff]
    %v1534 = vld [vmem:[#allocation7 + $0xb8] sm:$0xff]
    %v1535 = vld [vmem:[#allocation7 + $0xc0] sm:$0xff]
    %v1536 = vld [vmem:[#allocation7 + $0xc8] sm:$0xff]
    %v1537 = vld [vmem:[#allocation7 + $0xd0] sm:$0xff]
    %v1538 = vld [vmem:[#allocation7 + $0xd8] sm:$0xff]
    %v1539 = vld [vmem:[#allocation7 + $0xe0] sm:$0xff]
    %v1540 = vld [vmem:[#allocation7 + $0xe8] sm:$0xff]
    %v1541 = vld [vmem:[#allocation7 + $0xf0] sm:$0xff]
    %v1542 = vld [vmem:[#allocation7 + $0xf8] sm:$0xff]
    %v1543 = vld [vmem:[#allocation7 + $0x100] sm:$0xff]
    %v1544 = vld [vmem:[#allocation7 + $0x108] sm:$0xff]
    %v1545 = vld [vmem:[#allocation7 + $0x110] sm:$0xff]
    %v1546 = vld [vmem:[#allocation7 + $0x118] sm:$0xff]
    %v1547 = vld [vmem:[#allocation7 + $0x120] sm:$0xff]
    %v1548 = vld [vmem:[#allocation7 + $0x128] sm:$0xff]
    %v1549 = vld [vmem:[#allocation7 + $0x130] sm:$0xff]
    %v1550 = vld [vmem:[#allocation7 + $0x138] sm:$0xff]
    %v1551 = vld [vmem:[#allocation7 + $0x140] sm:$0xff]
    %v1552 = vld [vmem:[#allocation7 + $0x148] sm:$0xff]
    %v1553 = vld [vmem:[#allocation7 + $0x150] sm:$0xff]
    %v1554 = vld [vmem:[#allocation7 + $0x158] sm:$0xff]
    %v1555 = vld [vmem:[#allocation7 + $0x160] sm:$0xff]
    %v1556 = vld [vmem:[#allocation7 + $0x168] sm:$0xff]
    %v1557 = vld [vmem:[#allocation7 + $0x170] sm:$0xff]
    %v1558 = vld [vmem:[#allocation7 + $0x178] sm:$0xff]
    %v1559 = vld [vmem:[#allocation7 + $0x180] sm:$0xff]
    %v1560 = vld [vmem:[#allocation7 + $0x188] sm:$0xff]
    %v1561 = vld [vmem:[#allocation7 + $0x190] sm:$0xff]
    %v1562 = vld [vmem:[#allocation7 + $0x198] sm:$0xff]
    %v1563 = vld [vmem:[#allocation7 + $0x1a0] sm:$0xff]
    %v1564 = vld [vmem:[#allocation7 + $0x1a8] sm:$0xff]
    %v1565 = vld [vmem:[#allocation7 + $0x1b0] sm:$0xff]
    %v1566 = vld [vmem:[#allocation7 + $0x1b8] sm:$0xff]
    %v1567 = vld [vmem:[#allocation7 + $0x1c0] sm:$0xff]
    %v1568 = vld [vmem:[#allocation7 + $0x1c8] sm:$0xff]
    %v1569 = vld [vmem:[#allocation7 + $0x1d0] sm:$0xff]
    %v1570 = vld [vmem:[#allocation7 + $0x1d8] sm:$0xff]
    %v1571 = vld [vmem:[#allocation7 + $0x1e0] sm:$0xff]
    %v1572 = vld [vmem:[#allocation7 + $0x1e8] sm:$0xff]
    %v1573 = vld [vmem:[#allocation7 + $0x1f0] sm:$0xff]
    %v1574 = vld [vmem:[#allocation7 + $0x1f8] sm:$0xff]
    %v1575 = vld [vmem:[#allocation7 + $0x200] sm:$0xff]
    %v1576 = vld [vmem:[#allocation7 + $0x208] sm:$0xff]
    %v1577 = vld [vmem:[#allocation7 + $0x210] sm:$0xff]
    %v1578 = vld [vmem:[#allocation7 + $0x218] sm:$0xff]
    %v1579 = vld [vmem:[#allocation7 + $0x220] sm:$0xff]
    %v1580 = vld [vmem:[#allocation7 + $0x228] sm:$0xff]
    %v1581 = vld [vmem:[#allocation7 + $0x230] sm:$0xff]
    %v1582 = vld [vmem:[#allocation7 + $0x238] sm:$0xff]
    %v1583 = vld [vmem:[#allocation7 + $0x240] sm:$0xff]
    %v1584 = vld [vmem:[#allocation7 + $0x248] sm:$0xff]
    %v1585 = vld [vmem:[#allocation7 + $0x250] sm:$0xff]
    %v1586 = vld [vmem:[#allocation7 + $0x258] sm:$0xff]
    %v1587 = vld [vmem:[#allocation7 + $0x260] sm:$0xff]
    %v1588 = vld [vmem:[#allocation7 + $0x268] sm:$0xff]
    %v1589 = vld [vmem:[#allocation7 + $0x270] sm:$0xff]
    %v1590 = vld [vmem:[#allocation7 + $0x278] sm:$0xff]
    %v1591 = vld [vmem:[#allocation7 + $0x280] sm:$0xff]
    %v1592 = vld [vmem:[#allocation7 + $0x288] sm:$0xff]
    %v1593 = vld [vmem:[#allocation7 + $0x290] sm:$0xff]
    %v1594 = vld [vmem:[#allocation7 + $0x298] sm:$0xff]
    %v1595 = vld [vmem:[#allocation7 + $0x2a0] sm:$0xff]
    %v1596 = vld [vmem:[#allocation7 + $0x2a8] sm:$0xff]
    %v1597 = vld [vmem:[#allocation7 + $0x2b0] sm:$0xff]
    %v1598 = vld [vmem:[#allocation7 + $0x2b8] sm:$0xff]
    %v1599 = vld [vmem:[#allocation7 + $0x2c0] sm:$0xff]
    %v1600 = vld [vmem:[#allocation7 + $0x2c8] sm:$0xff]
    %v1601 = vld [vmem:[#allocation7 + $0x2d0] sm:$0xff]
    %v1602 = vld [vmem:[#allocation7 + $0x2d8] sm:$0xff]
    %v1603 = vld [vmem:[#allocation7 + $0x2e0] sm:$0xff]
    %v1604 = vld [vmem:[#allocation7 + $0x2e8] sm:$0xff]
    %v1605 = vld [vmem:[#allocation7 + $0x2f0] sm:$0xff]
    %v1606 = vld [vmem:[#allocation7 + $0x2f8] sm:$0xff]
    %v1607 = vld [vmem:[#allocation7 + $0x300] sm:$0xff]
    %v1608 = vld [vmem:[#allocation7 + $0x308] sm:$0xff]
    %v1609 = vld [vmem:[#allocation7 + $0x310] sm:$0xff]
    %v1610 = vld [vmem:[#allocation7 + $0x318] sm:$0xff]
    %v1611 = vld [vmem:[#allocation7 + $0x320] sm:$0xff]
    %v1612 = vld [vmem:[#allocation7 + $0x328] sm:$0xff]
    %v1613 = vld [vmem:[#allocation7 + $0x330] sm:$0xff]
    %v1614 = vld [vmem:[#allocation7 + $0x338] sm:$0xff]
    %v1615 = vld [vmem:[#allocation7 + $0x340] sm:$0xff]
    %v1616 = vld [vmem:[#allocation7 + $0x348] sm:$0xff]
    %v1617 = vld [vmem:[#allocation7 + $0x350] sm:$0xff]
    %v1618 = vld [vmem:[#allocation7 + $0x358] sm:$0xff]
    %v1619 = vld [vmem:[#allocation7 + $0x360] sm:$0xff]
    %v1620 = vld [vmem:[#allocation7 + $0x368] sm:$0xff]
    %v1621 = vld [vmem:[#allocation7 + $0x370] sm:$0xff]
    %v1622 = vld [vmem:[#allocation7 + $0x378] sm:$0xff]
    %v1623 = vld [vmem:[#allocation7 + $0x380] sm:$0xff]
    %v1624 = vld [vmem:[#allocation7 + $0x388] sm:$0xff]
    %v1625 = vld [vmem:[#allocation7 + $0x390] sm:$0xff]
    %v1626 = vld [vmem:[#allocation7 + $0x398] sm:$0xff]
    %v1627 = vld [vmem:[#allocation7 + $0x3a0] sm:$0xff]
    %v1628 = vld [vmem:[#allocation7 + $0x3a8] sm:$0xff]
    %v1629 = vld [vmem:[#allocation7 + $0x3b0] sm:$0xff]
    %v1630 = vld [vmem:[#allocation7 + $0x3b8] sm:$0xff]
    %v1631 = vld [vmem:[#allocation7 + $0x3c0] sm:$0xff]
    %v1632 = vld [vmem:[#allocation7 + $0x3c8] sm:$0xff]
    %v1633 = vld [vmem:[#allocation7 + $0x3d0] sm:$0xff]
    %v1634 = vld [vmem:[#allocation7 + $0x3d8] sm:$0xff]
    %v1635 = vld [vmem:[#allocation7 + $0x3e0] sm:$0xff]
    %v1636 = vld [vmem:[#allocation7 + $0x3e8] sm:$0xff]
    %v1637 = vld [vmem:[#allocation7 + $0x3f0] sm:$0xff]
    %v1638 = vld [vmem:[#allocation7 + $0x3f8] sm:$0xff]
    %v1639 = vld [vmem:[#allocation7 + $0x400] sm:$0xff]
    %v1640 = vld [vmem:[#allocation7 + $0x408] sm:$0xff]
    %v1641 = vld [vmem:[#allocation7 + $0x410] sm:$0xff]
    %v1642 = vld [vmem:[#allocation7 + $0x418] sm:$0xff]
    %v1643 = vld [vmem:[#allocation7 + $0x420] sm:$0xff]
    %v1644 = vld [vmem:[#allocation7 + $0x428] sm:$0xff]
    %v1645 = vld [vmem:[#allocation7 + $0x430] sm:$0xff]
    %v1646 = vld [vmem:[#allocation7 + $0x438] sm:$0xff]
    %v1647 = vld [vmem:[#allocation7 + $0x440] sm:$0xff]
    %v1648 = vld [vmem:[#allocation7 + $0x448] sm:$0xff]
    %v1649 = vld [vmem:[#allocation7 + $0x450] sm:$0xff]
    %v1650 = vld [vmem:[#allocation7 + $0x458] sm:$0xff]
    %v1651 = vld [vmem:[#allocation7 + $0x460] sm:$0xff]
    %v1652 = vld [vmem:[#allocation7 + $0x468] sm:$0xff]
    %v1653 = vld [vmem:[#allocation7 + $0x470] sm:$0xff]
    %v1654 = vld [vmem:[#allocation7 + $0x478] sm:$0xff]
    %v1655 = vld [vmem:[#allocation7 + $0x480] sm:$0xff]
    %v1656 = vld [vmem:[#allocation7 + $0x488] sm:$0xff]
    %v1657 = vld [vmem:[#allocation7 + $0x490] sm:$0xff]
    %v1658 = vld [vmem:[#allocation7 + $0x498] sm:$0xff]
    %v1659 = vld [vmem:[#allocation7 + $0x4a0] sm:$0xff]
    %v1660 = vld [vmem:[#allocation7 + $0x4a8] sm:$0xff]
    %v1661 = vld [vmem:[#allocation7 + $0x4b0] sm:$0xff]
    %v1662 = vld [vmem:[#allocation7 + $0x4b8] sm:$0xff]
    %v1663 = vld [vmem:[#allocation7 + $0x4c0] sm:$0xff]
    %v1664 = vld [vmem:[#allocation7 + $0x4c8] sm:$0xff]
    %v1665 = vld [vmem:[#allocation7 + $0x4d0] sm:$0xff]
    %v1666 = vld [vmem:[#allocation7 + $0x4d8] sm:$0xff]
    %v1667 = vld [vmem:[#allocation7 + $0x4e0] sm:$0xff]
    %v1668 = vld [vmem:[#allocation7 + $0x4e8] sm:$0xff]
    %v1669 = vld [vmem:[#allocation7 + $0x4f0] sm:$0xff]
    %v1670 = vld [vmem:[#allocation7 + $0x4f8] sm:$0xff]
    %v1671 = vld [vmem:[#allocation7 + $0x500] sm:$0xff]
    %v1672 = vld [vmem:[#allocation7 + $0x508] sm:$0xff]
    %v1673 = vld [vmem:[#allocation7 + $0x510] sm:$0xff]
    %v1674 = vld [vmem:[#allocation7 + $0x518] sm:$0xff]
    %v1675 = vld [vmem:[#allocation7 + $0x520] sm:$0xff]
    %v1676 = vld [vmem:[#allocation7 + $0x528] sm:$0xff]
    %v1677 = vld [vmem:[#allocation7 + $0x530] sm:$0xff]
    %v1678 = vld [vmem:[#allocation7 + $0x538] sm:$0xff]
    %v1679 = vld [vmem:[#allocation7 + $0x540] sm:$0xff]
    %v1680 = vld [vmem:[#allocation7 + $0x548] sm:$0xff]
    %v1681 = vld [vmem:[#allocation7 + $0x550] sm:$0xff]
    %v1682 = vld [vmem:[#allocation7 + $0x558] sm:$0xff]
    %v1683 = vld [vmem:[#allocation7 + $0x560] sm:$0xff]
    %v1684 = vld [vmem:[#allocation7 + $0x568] sm:$0xff]
    %v1685 = vld [vmem:[#allocation7 + $0x570] sm:$0xff]
    %v1686 = vld [vmem:[#allocation7 + $0x578] sm:$0xff]
    %v1687 = vld [vmem:[#allocation7 + $0x580] sm:$0xff]
    %v1688 = vld [vmem:[#allocation7 + $0x588] sm:$0xff]
    %v1689 = vld [vmem:[#allocation7 + $0x590] sm:$0xff]
    %v1690 = vld [vmem:[#allocation7 + $0x598] sm:$0xff]
    %v1691 = vld [vmem:[#allocation7 + $0x5a0] sm:$0xff]
    %v1692 = vld [vmem:[#allocation7 + $0x5a8] sm:$0xff]
    %v1693 = vld [vmem:[#allocation7 + $0x5b0] sm:$0xff]
    %v1694 = vld [vmem:[#allocation7 + $0x5b8] sm:$0xff]
    %v1695 = vld [vmem:[#allocation7 + $0x5c0] sm:$0xff]
    %v1696 = vld [vmem:[#allocation7 + $0x5c8] sm:$0xff]
    %v1697 = vld [vmem:[#allocation7 + $0x5d0] sm:$0xff]
    %v1698 = vld [vmem:[#allocation7 + $0x5d8] sm:$0xff]
    %v1699 = vld [vmem:[#allocation7 + $0x5e0] sm:$0xff]
    %v1700 = vld [vmem:[#allocation7 + $0x5e8] sm:$0xff]
    %v1701 = vld [vmem:[#allocation7 + $0x5f0] sm:$0xff]
    %v1702 = vld [vmem:[#allocation7 + $0x5f8] sm:$0xff]
    %v1703 = vld [vmem:[#allocation7 + $0x600] sm:$0xff]
    %v1704 = vld [vmem:[#allocation7 + $0x608] sm:$0xff]
    %v1705 = vld [vmem:[#allocation7 + $0x610] sm:$0xff]
    %v1706 = vld [vmem:[#allocation7 + $0x618] sm:$0xff]
    %v1707 = vld [vmem:[#allocation7 + $0x620] sm:$0xff]
    %v1708 = vld [vmem:[#allocation7 + $0x628] sm:$0xff]
    %v1709 = vld [vmem:[#allocation7 + $0x630] sm:$0xff]
    %v1710 = vld [vmem:[#allocation7 + $0x638] sm:$0xff]
    %v1711 = vld [vmem:[#allocation7 + $0x640] sm:$0xff]
    %v1712 = vld [vmem:[#allocation7 + $0x648] sm:$0xff]
    %v1713 = vld [vmem:[#allocation7 + $0x650] sm:$0xff]
    %v1714 = vld [vmem:[#allocation7 + $0x658] sm:$0xff]
    %v1715 = vld [vmem:[#allocation7 + $0x660] sm:$0xff]
    %v1716 = vld [vmem:[#allocation7 + $0x668] sm:$0xff]
    %v1717 = vld [vmem:[#allocation7 + $0x670] sm:$0xff]
    %v1718 = vld [vmem:[#allocation7 + $0x678] sm:$0xff]
    %v1719 = vld [vmem:[#allocation7 + $0x680] sm:$0xff]
    %v1720 = vld [vmem:[#allocation7 + $0x688] sm:$0xff]
    %v1721 = vld [vmem:[#allocation7 + $0x690] sm:$0xff]
    %v1722 = vld [vmem:[#allocation7 + $0x698] sm:$0xff]
    %v1723 = vld [vmem:[#allocation7 + $0x6a0] sm:$0xff]
    %v1724 = vld [vmem:[#allocation7 + $0x6a8] sm:$0xff]
    %v1725 = vld [vmem:[#allocation7 + $0x6b0] sm:$0xff]
    %v1726 = vld [vmem:[#allocation7 + $0x6b8] sm:$0xff]
    %v1727 = vld [vmem:[#allocation7 + $0x6c0] sm:$0xff]
    %v1728 = vld [vmem:[#allocation7 + $0x6c8] sm:$0xff]
    %v1729 = vld [vmem:[#allocation7 + $0x6d0] sm:$0xff]
    %v1730 = vld [vmem:[#allocation7 + $0x6d8] sm:$0xff]
    %v1731 = vld [vmem:[#allocation7 + $0x6e0] sm:$0xff]
    %v1732 = vld [vmem:[#allocation7 + $0x6e8] sm:$0xff]
    %v1733 = vld [vmem:[#allocation7 + $0x6f0] sm:$0xff]
    %v1734 = vld [vmem:[#allocation7 + $0x6f8] sm:$0xff]
    %v1735 = vld [vmem:[#allocation7 + $0x700] sm:$0xff]
    %v1736 = vld [vmem:[#allocation7 + $0x708] sm:$0xff]
    %v1737 = vld [vmem:[#allocation7 + $0x710] sm:$0xff]
    %v1738 = vld [vmem:[#allocation7 + $0x718] sm:$0xff]
    %v1739 = vld [vmem:[#allocation7 + $0x720] sm:$0xff]
    %v1740 = vld [vmem:[#allocation7 + $0x728] sm:$0xff]
    %v1741 = vld [vmem:[#allocation7 + $0x730] sm:$0xff]
    %v1742 = vld [vmem:[#allocation7 + $0x738] sm:$0xff]
    %v1743 = vld [vmem:[#allocation7 + $0x740] sm:$0xff]
    %v1744 = vld [vmem:[#allocation7 + $0x748] sm:$0xff]
    %v1745 = vld [vmem:[#allocation7 + $0x750] sm:$0xff]
    %v1746 = vld [vmem:[#allocation7 + $0x758] sm:$0xff]
    %v1747 = vld [vmem:[#allocation7 + $0x760] sm:$0xff]
    %v1748 = vld [vmem:[#allocation7 + $0x768] sm:$0xff]
    %v1749 = vld [vmem:[#allocation7 + $0x770] sm:$0xff]
    %v1750 = vld [vmem:[#allocation7 + $0x778] sm:$0xff]
    %v1751 = vld [vmem:[#allocation7 + $0x780] sm:$0xff]
    %v1752 = vld [vmem:[#allocation7 + $0x788] sm:$0xff]
    %v1753 = vld [vmem:[#allocation7 + $0x790] sm:$0xff]
    %v1754 = vld [vmem:[#allocation7 + $0x798] sm:$0xff]
    %v1755 = vld [vmem:[#allocation7 + $0x7a0] sm:$0xff]
    %v1756 = vld [vmem:[#allocation7 + $0x7a8] sm:$0xff]
    %v1757 = vld [vmem:[#allocation7 + $0x7b0] sm:$0xff]
    %v1758 = vld [vmem:[#allocation7 + $0x7b8] sm:$0xff]
    %v1759 = vld [vmem:[#allocation7 + $0x7c0] sm:$0xff]
    %v1760 = vld [vmem:[#allocation7 + $0x7c8] sm:$0xff]
    %v1761 = vld [vmem:[#allocation7 + $0x7d0] sm:$0xff]
    %v1762 = vld [vmem:[#allocation7 + $0x7d8] sm:$0xff]
    %v1763 = vld [vmem:[#allocation7 + $0x7e0] sm:$0xff]
    %v1764 = vld [vmem:[#allocation7 + $0x7e8] sm:$0xff]
    %v1765 = vld [vmem:[#allocation7 + $0x7f0] sm:$0xff]
    %v1766 = vld [vmem:[#allocation7 + $0x7f8] sm:$0xff]
    %v1767 = vld [vmem:[#allocation7 + $0x800] sm:$0xff]
    %v1768 = vld [vmem:[#allocation7 + $0x808] sm:$0xff]
    %v1769 = vld [vmem:[#allocation7 + $0x810] sm:$0xff]
    %v1770 = vld [vmem:[#allocation7 + $0x818] sm:$0xff]
    %v1771 = vld [vmem:[#allocation7 + $0x820] sm:$0xff]
    %v1772 = vld [vmem:[#allocation7 + $0x828] sm:$0xff]
    %v1773 = vld [vmem:[#allocation7 + $0x830] sm:$0xff]
    %v1774 = vld [vmem:[#allocation7 + $0x838] sm:$0xff]
    %v1775 = vld [vmem:[#allocation7 + $0x840] sm:$0xff]
    %v1776 = vld [vmem:[#allocation7 + $0x848] sm:$0xff]
    %v1777 = vld [vmem:[#allocation7 + $0x850] sm:$0xff]
    %v1778 = vld [vmem:[#allocation7 + $0x858] sm:$0xff]
    %v1779 = vld [vmem:[#allocation7 + $0x860] sm:$0xff]
    %v1780 = vld [vmem:[#allocation7 + $0x868] sm:$0xff]
    %v1781 = vld [vmem:[#allocation7 + $0x870] sm:$0xff]
    %v1782 = vld [vmem:[#allocation7 + $0x878] sm:$0xff]
    %v1783 = vld [vmem:[#allocation7 + $0x880] sm:$0xff]
    %v1784 = vld [vmem:[#allocation7 + $0x888] sm:$0xff]
    %v1785 = vld [vmem:[#allocation7 + $0x890] sm:$0xff]
    %v1786 = vld [vmem:[#allocation7 + $0x898] sm:$0xff]
    %v1787 = vld [vmem:[#allocation7 + $0x8a0] sm:$0xff]
    %v1788 = vld [vmem:[#allocation7 + $0x8a8] sm:$0xff]
    %v1789 = vld [vmem:[#allocation7 + $0x8b0] sm:$0xff]
    %v1790 = vld [vmem:[#allocation7 + $0x8b8] sm:$0xff]
    %v1791 = vld [vmem:[#allocation7 + $0x8c0] sm:$0xff]
    %v1792 = vld [vmem:[#allocation7 + $0x8c8] sm:$0xff]
    %v1793 = vld [vmem:[#allocation7 + $0x8d0] sm:$0xff]
    %v1794 = vld [vmem:[#allocation7 + $0x8d8] sm:$0xff]
    %v1795 = vld [vmem:[#allocation7 + $0x8e0] sm:$0xff]
    %v1796 = vld [vmem:[#allocation7 + $0x8e8] sm:$0xff]
    %v1797 = vld [vmem:[#allocation7 + $0x8f0] sm:$0xff]
    %v1798 = vld [vmem:[#allocation7 + $0x8f8] sm:$0xff]
    %v1799 = vld [vmem:[#allocation7 + $0x900] sm:$0xff]
    %v1800 = vld [vmem:[#allocation7 + $0x908] sm:$0xff]
    %v1801 = vld [vmem:[#allocation7 + $0x910] sm:$0xff]
    %v1802 = vld [vmem:[#allocation7 + $0x918] sm:$0xff]
    %v1803 = vld [vmem:[#allocation7 + $0x920] sm:$0xff]
    %v1804 = vld [vmem:[#allocation7 + $0x928] sm:$0xff]
    %v1805 = vld [vmem:[#allocation7 + $0x930] sm:$0xff]
    %v1806 = vld [vmem:[#allocation7 + $0x938] sm:$0xff]
    %v1807 = vld [vmem:[#allocation7 + $0x940] sm:$0xff]
    %v1808 = vld [vmem:[#allocation7 + $0x948] sm:$0xff]
    %v1809 = vld [vmem:[#allocation7 + $0x950] sm:$0xff]
    %v1810 = vld [vmem:[#allocation7 + $0x958] sm:$0xff]
    %v1811 = vld [vmem:[#allocation7 + $0x960] sm:$0xff]
    %v1812 = vld [vmem:[#allocation7 + $0x968] sm:$0xff]
    %v1813 = vld [vmem:[#allocation7 + $0x970] sm:$0xff]
    %v1814 = vld [vmem:[#allocation7 + $0x978] sm:$0xff]
    %v1815 = vld [vmem:[#allocation7 + $0x980] sm:$0xff]
    %v1816 = vld [vmem:[#allocation7 + $0x988] sm:$0xff]
    %v1817 = vld [vmem:[#allocation7 + $0x990] sm:$0xff]
    %v1818 = vld [vmem:[#allocation7 + $0x998] sm:$0xff]
    %v1819 = vld [vmem:[#allocation7 + $0x9a0] sm:$0xff]
    %v1820 = vld [vmem:[#allocation7 + $0x9a8] sm:$0xff]
    %v1821 = vld [vmem:[#allocation7 + $0x9b0] sm:$0xff]
    %v1822 = vld [vmem:[#allocation7 + $0x9b8] sm:$0xff]
    %v1823 = vld [vmem:[#allocation7 + $0x9c0] sm:$0xff]
    %v1824 = vld [vmem:[#allocation7 + $0x9c8] sm:$0xff]
    %v1825 = vld [vmem:[#allocation7 + $0x9d0] sm:$0xff]
    %v1826 = vld [vmem:[#allocation7 + $0x9d8] sm:$0xff]
    %v1827 = vld [vmem:[#allocation7 + $0x9e0] sm:$0xff]
    %v1828 = vld [vmem:[#allocation7 + $0x9e8] sm:$0xff]
    %v1829 = vld [vmem:[#allocation7 + $0x9f0] sm:$0xff]
    %v1830 = vld [vmem:[#allocation7 + $0x9f8] sm:$0xff]
    %v2151 = vunpack.c.l.b16 %v1511
    %v2152 = vunpack.c.h.b16 %v1511
    %v2153 = vunpack.c.l.b16 %v1512
    %v2154 = vunpack.c.h.b16 %v1512
    %v2155 = vunpack.c.l.b16 %v1513
    %v2156 = vunpack.c.h.b16 %v1513
    %v2157 = vunpack.c.l.b16 %v1514
    %v2158 = vunpack.c.h.b16 %v1514
    %v2159 = vunpack.c.l.b16 %v1515
    %v2160 = vunpack.c.h.b16 %v1515
    %v2161 = vunpack.c.l.b16 %v1516
    %v2162 = vunpack.c.h.b16 %v1516
    %v2163 = vunpack.c.l.b16 %v1517
    %v2164 = vunpack.c.h.b16 %v1517
    %v2165 = vunpack.c.l.b16 %v1518
    %v2166 = vunpack.c.h.b16 %v1518
    %v2167 = vunpack.c.l.b16 %v1519
    %v2168 = vunpack.c.h.b16 %v1519
    %v2169 = vunpack.c.l.b16 %v1520
    %v2170 = vunpack.c.h.b16 %v1520
    %v2171 = vunpack.c.l.b16 %v1521
    %v2172 = vunpack.c.h.b16 %v1521
    %v2173 = vunpack.c.l.b16 %v1522
    %v2174 = vunpack.c.h.b16 %v1522
    %v2175 = vunpack.c.l.b16 %v1523
    %v2176 = vunpack.c.h.b16 %v1523
    %v2177 = vunpack.c.l.b16 %v1524
    %v2178 = vunpack.c.h.b16 %v1524
    %v2179 = vunpack.c.l.b16 %v1525
    %v2180 = vunpack.c.h.b16 %v1525
    %v2181 = vunpack.c.l.b16 %v1526
    %v2182 = vunpack.c.h.b16 %v1526
    %v2183 = vunpack.c.l.b16 %v1527
    %v2184 = vunpack.c.h.b16 %v1527
    %v2185 = vunpack.c.l.b16 %v1528
    %v2186 = vunpack.c.h.b16 %v1528
    %v2187 = vunpack.c.l.b16 %v1529
    %v2188 = vunpack.c.h.b16 %v1529
    %v2189 = vunpack.c.l.b16 %v1530
    %v2190 = vunpack.c.h.b16 %v1530
    %v2191 = vunpack.c.l.b16 %v1531
    %v2192 = vunpack.c.h.b16 %v1531
    %v2193 = vunpack.c.l.b16 %v1532
    %v2194 = vunpack.c.h.b16 %v1532
    %v2195 = vunpack.c.l.b16 %v1533
    %v2196 = vunpack.c.h.b16 %v1533
    %v2197 = vunpack.c.l.b16 %v1534
    %v2198 = vunpack.c.h.b16 %v1534
    %v2199 = vunpack.c.l.b16 %v1535
    %v2200 = vunpack.c.h.b16 %v1535
    %v2201 = vunpack.c.l.b16 %v1536
    %v2202 = vunpack.c.h.b16 %v1536
    %v2203 = vunpack.c.l.b16 %v1537
    %v2204 = vunpack.c.h.b16 %v1537
    %v2205 = vunpack.c.l.b16 %v1538
    %v2206 = vunpack.c.h.b16 %v1538
    %v2207 = vunpack.c.l.b16 %v1539
    %v2208 = vunpack.c.h.b16 %v1539
    %v2209 = vunpack.c.l.b16 %v1540
    %v2210 = vunpack.c.h.b16 %v1540
    %v2211 = vunpack.c.l.b16 %v1541
    %v2212 = vunpack.c.h.b16 %v1541
    %v2213 = vunpack.c.l.b16 %v1542
    %v2214 = vunpack.c.h.b16 %v1542
    %v2215 = vunpack.c.l.b16 %v1543
    %v2216 = vunpack.c.h.b16 %v1543
    %v2217 = vunpack.c.l.b16 %v1544
    %v2218 = vunpack.c.h.b16 %v1544
    %v2219 = vunpack.c.l.b16 %v1545
    %v2220 = vunpack.c.h.b16 %v1545
    %v2221 = vunpack.c.l.b16 %v1546
    %v2222 = vunpack.c.h.b16 %v1546
    %v2223 = vunpack.c.l.b16 %v1547
    %v2224 = vunpack.c.h.b16 %v1547
    %v2225 = vunpack.c.l.b16 %v1548
    %v2226 = vunpack.c.h.b16 %v1548
    %v2227 = vunpack.c.l.b16 %v1549
    %v2228 = vunpack.c.h.b16 %v1549
    %v2229 = vunpack.c.l.b16 %v1550
    %v2230 = vunpack.c.h.b16 %v1550
    %v2231 = vunpack.c.l.b16 %v1551
    %v2232 = vunpack.c.h.b16 %v1551
    %v2233 = vunpack.c.l.b16 %v1552
    %v2234 = vunpack.c.h.b16 %v1552
    %v2235 = vunpack.c.l.b16 %v1553
    %v2236 = vunpack.c.h.b16 %v1553
    %v2237 = vunpack.c.l.b16 %v1554
    %v2238 = vunpack.c.h.b16 %v1554
    %v2239 = vunpack.c.l.b16 %v1555
    %v2240 = vunpack.c.h.b16 %v1555
    %v2241 = vunpack.c.l.b16 %v1556
    %v2242 = vunpack.c.h.b16 %v1556
    %v2243 = vunpack.c.l.b16 %v1557
    %v2244 = vunpack.c.h.b16 %v1557
    %v2245 = vunpack.c.l.b16 %v1558
    %v2246 = vunpack.c.h.b16 %v1558
    %v2247 = vunpack.c.l.b16 %v1559
    %v2248 = vunpack.c.h.b16 %v1559
    %v2249 = vunpack.c.l.b16 %v1560
    %v2250 = vunpack.c.h.b16 %v1560
    %v2251 = vunpack.c.l.b16 %v1561
    %v2252 = vunpack.c.h.b16 %v1561
    %v2253 = vunpack.c.l.b16 %v1562
    %v2254 = vunpack.c.h.b16 %v1562
    %v2255 = vunpack.c.l.b16 %v1563
    %v2256 = vunpack.c.h.b16 %v1563
    %v2257 = vunpack.c.l.b16 %v1564
    %v2258 = vunpack.c.h.b16 %v1564
    %v2259 = vunpack.c.l.b16 %v1565
    %v2260 = vunpack.c.h.b16 %v1565
    %v2261 = vunpack.c.l.b16 %v1566
    %v2262 = vunpack.c.h.b16 %v1566
    %v2263 = vunpack.c.l.b16 %v1567
    %v2264 = vunpack.c.h.b16 %v1567
    %v2265 = vunpack.c.l.b16 %v1568
    %v2266 = vunpack.c.h.b16 %v1568
    %v2267 = vunpack.c.l.b16 %v1569
    %v2268 = vunpack.c.h.b16 %v1569
    %v2269 = vunpack.c.l.b16 %v1570
    %v2270 = vunpack.c.h.b16 %v1570
    %v2271 = vunpack.c.l.b16 %v1571
    %v2272 = vunpack.c.h.b16 %v1571
    %v2273 = vunpack.c.l.b16 %v1572
    %v2274 = vunpack.c.h.b16 %v1572
    %v2275 = vunpack.c.l.b16 %v1573
    %v2276 = vunpack.c.h.b16 %v1573
    %v2277 = vunpack.c.l.b16 %v1574
    %v2278 = vunpack.c.h.b16 %v1574
    %v2279 = vunpack.c.l.b16 %v1575
    %v2280 = vunpack.c.h.b16 %v1575
    %v2281 = vunpack.c.l.b16 %v1576
    %v2282 = vunpack.c.h.b16 %v1576
    %v2283 = vunpack.c.l.b16 %v1577
    %v2284 = vunpack.c.h.b16 %v1577
    %v2285 = vunpack.c.l.b16 %v1578
    %v2286 = vunpack.c.h.b16 %v1578
    %v2287 = vunpack.c.l.b16 %v1579
    %v2288 = vunpack.c.h.b16 %v1579
    %v2289 = vunpack.c.l.b16 %v1580
    %v2290 = vunpack.c.h.b16 %v1580
    %v2291 = vunpack.c.l.b16 %v1581
    %v2292 = vunpack.c.h.b16 %v1581
    %v2293 = vunpack.c.l.b16 %v1582
    %v2294 = vunpack.c.h.b16 %v1582
    %v2295 = vunpack.c.l.b16 %v1583
    %v2296 = vunpack.c.h.b16 %v1583
    %v2297 = vunpack.c.l.b16 %v1584
    %v2298 = vunpack.c.h.b16 %v1584
    %v2299 = vunpack.c.l.b16 %v1585
    %v2300 = vunpack.c.h.b16 %v1585
    %v2301 = vunpack.c.l.b16 %v1586
    %v2302 = vunpack.c.h.b16 %v1586
    %v2303 = vunpack.c.l.b16 %v1587
    %v2304 = vunpack.c.h.b16 %v1587
    %v2305 = vunpack.c.l.b16 %v1588
    %v2306 = vunpack.c.h.b16 %v1588
    %v2307 = vunpack.c.l.b16 %v1589
    %v2308 = vunpack.c.h.b16 %v1589
    %v2309 = vunpack.c.l.b16 %v1590
    %v2310 = vunpack.c.h.b16 %v1590
    %v2311 = vunpack.c.l.b16 %v1591
    %v2312 = vunpack.c.h.b16 %v1591
    %v2313 = vunpack.c.l.b16 %v1592
    %v2314 = vunpack.c.h.b16 %v1592
    %v2315 = vunpack.c.l.b16 %v1593
    %v2316 = vunpack.c.h.b16 %v1593
    %v2317 = vunpack.c.l.b16 %v1594
    %v2318 = vunpack.c.h.b16 %v1594
    %v2319 = vunpack.c.l.b16 %v1595
    %v2320 = vunpack.c.h.b16 %v1595
    %v2321 = vunpack.c.l.b16 %v1596
    %v2322 = vunpack.c.h.b16 %v1596
    %v2323 = vunpack.c.l.b16 %v1597
    %v2324 = vunpack.c.h.b16 %v1597
    %v2325 = vunpack.c.l.b16 %v1598
    %v2326 = vunpack.c.h.b16 %v1598
    %v2327 = vunpack.c.l.b16 %v1599
    %v2328 = vunpack.c.h.b16 %v1599
    %v2329 = vunpack.c.l.b16 %v1600
    %v2330 = vunpack.c.h.b16 %v1600
    %v2331 = vunpack.c.l.b16 %v1601
    %v2332 = vunpack.c.h.b16 %v1601
    %v2333 = vunpack.c.l.b16 %v1602
    %v2334 = vunpack.c.h.b16 %v1602
    %v2335 = vunpack.c.l.b16 %v1603
    %v2336 = vunpack.c.h.b16 %v1603
    %v2337 = vunpack.c.l.b16 %v1604
    %v2338 = vunpack.c.h.b16 %v1604
    %v2339 = vunpack.c.l.b16 %v1605
    %v2340 = vunpack.c.h.b16 %v1605
    %v2341 = vunpack.c.l.b16 %v1606
    %v2342 = vunpack.c.h.b16 %v1606
    %v2343 = vunpack.c.l.b16 %v1607
    %v2344 = vunpack.c.h.b16 %v1607
    %v2345 = vunpack.c.l.b16 %v1608
    %v2346 = vunpack.c.h.b16 %v1608
    %v2347 = vunpack.c.l.b16 %v1609
    %v2348 = vunpack.c.h.b16 %v1609
    %v2349 = vunpack.c.l.b16 %v1610
    %v2350 = vunpack.c.h.b16 %v1610
    %v2351 = vunpack.c.l.b16 %v1611
    %v2352 = vunpack.c.h.b16 %v1611
    %v2353 = vunpack.c.l.b16 %v1612
    %v2354 = vunpack.c.h.b16 %v1612
    %v2355 = vunpack.c.l.b16 %v1613
    %v2356 = vunpack.c.h.b16 %v1613
    %v2357 = vunpack.c.l.b16 %v1614
    %v2358 = vunpack.c.h.b16 %v1614
    %v2359 = vunpack.c.l.b16 %v1615
    %v2360 = vunpack.c.h.b16 %v1615
    %v2361 = vunpack.c.l.b16 %v1616
    %v2362 = vunpack.c.h.b16 %v1616
    %v2363 = vunpack.c.l.b16 %v1617
    %v2364 = vunpack.c.h.b16 %v1617
    %v2365 = vunpack.c.l.b16 %v1618
    %v2366 = vunpack.c.h.b16 %v1618
    %v2367 = vunpack.c.l.b16 %v1619
    %v2368 = vunpack.c.h.b16 %v1619
    %v2369 = vunpack.c.l.b16 %v1620
    %v2370 = vunpack.c.h.b16 %v1620
    %v2371 = vunpack.c.l.b16 %v1621
    %v2372 = vunpack.c.h.b16 %v1621
    %v2373 = vunpack.c.l.b16 %v1622
    %v2374 = vunpack.c.h.b16 %v1622
    %v2375 = vunpack.c.l.b16 %v1623
    %v2376 = vunpack.c.h.b16 %v1623
    %v2377 = vunpack.c.l.b16 %v1624
    %v2378 = vunpack.c.h.b16 %v1624
    %v2379 = vunpack.c.l.b16 %v1625
    %v2380 = vunpack.c.h.b16 %v1625
    %v2381 = vunpack.c.l.b16 %v1626
    %v2382 = vunpack.c.h.b16 %v1626
    %v2383 = vunpack.c.l.b16 %v1627
    %v2384 = vunpack.c.h.b16 %v1627
    %v2385 = vunpack.c.l.b16 %v1628
    %v2386 = vunpack.c.h.b16 %v1628
    %v2387 = vunpack.c.l.b16 %v1629
    %v2388 = vunpack.c.h.b16 %v1629
    %v2389 = vunpack.c.l.b16 %v1630
    %v2390 = vunpack.c.h.b16 %v1630
    %v2391 = vunpack.c.l.b16 %v1631
    %v2392 = vunpack.c.h.b16 %v1631
    %v2393 = vunpack.c.l.b16 %v1632
    %v2394 = vunpack.c.h.b16 %v1632
    %v2395 = vunpack.c.l.b16 %v1633
    %v2396 = vunpack.c.h.b16 %v1633
    %v2397 = vunpack.c.l.b16 %v1634
    %v2398 = vunpack.c.h.b16 %v1634
    %v2399 = vunpack.c.l.b16 %v1635
    %v2400 = vunpack.c.h.b16 %v1635
    %v2401 = vunpack.c.l.b16 %v1636
    %v2402 = vunpack.c.h.b16 %v1636
    %v2403 = vunpack.c.l.b16 %v1637
    %v2404 = vunpack.c.h.b16 %v1637
    %v2405 = vunpack.c.l.b16 %v1638
    %v2406 = vunpack.c.h.b16 %v1638
    %v2407 = vunpack.c.l.b16 %v1639
    %v2408 = vunpack.c.h.b16 %v1639
    %v2409 = vunpack.c.l.b16 %v1640
    %v2410 = vunpack.c.h.b16 %v1640
    %v2411 = vunpack.c.l.b16 %v1641
    %v2412 = vunpack.c.h.b16 %v1641
    %v2413 = vunpack.c.l.b16 %v1642
    %v2414 = vunpack.c.h.b16 %v1642
    %v2415 = vunpack.c.l.b16 %v1643
    %v2416 = vunpack.c.h.b16 %v1643
    %v2417 = vunpack.c.l.b16 %v1644
    %v2418 = vunpack.c.h.b16 %v1644
    %v2419 = vunpack.c.l.b16 %v1645
    %v2420 = vunpack.c.h.b16 %v1645
    %v2421 = vunpack.c.l.b16 %v1646
    %v2422 = vunpack.c.h.b16 %v1646
    %v2423 = vunpack.c.l.b16 %v1647
    %v2424 = vunpack.c.h.b16 %v1647
    %v2425 = vunpack.c.l.b16 %v1648
    %v2426 = vunpack.c.h.b16 %v1648
    %v2427 = vunpack.c.l.b16 %v1649
    %v2428 = vunpack.c.h.b16 %v1649
    %v2429 = vunpack.c.l.b16 %v1650
    %v2430 = vunpack.c.h.b16 %v1650
    %v2431 = vunpack.c.l.b16 %v1651
    %v2432 = vunpack.c.h.b16 %v1651
    %v2433 = vunpack.c.l.b16 %v1652
    %v2434 = vunpack.c.h.b16 %v1652
    %v2435 = vunpack.c.l.b16 %v1653
    %v2436 = vunpack.c.h.b16 %v1653
    %v2437 = vunpack.c.l.b16 %v1654
    %v2438 = vunpack.c.h.b16 %v1654
    %v2439 = vunpack.c.l.b16 %v1655
    %v2440 = vunpack.c.h.b16 %v1655
    %v2441 = vunpack.c.l.b16 %v1656
    %v2442 = vunpack.c.h.b16 %v1656
    %v2443 = vunpack.c.l.b16 %v1657
    %v2444 = vunpack.c.h.b16 %v1657
    %v2445 = vunpack.c.l.b16 %v1658
    %v2446 = vunpack.c.h.b16 %v1658
    %v2447 = vunpack.c.l.b16 %v1659
    %v2448 = vunpack.c.h.b16 %v1659
    %v2449 = vunpack.c.l.b16 %v1660
    %v2450 = vunpack.c.h.b16 %v1660
    %v2451 = vunpack.c.l.b16 %v1661
    %v2452 = vunpack.c.h.b16 %v1661
    %v2453 = vunpack.c.l.b16 %v1662
    %v2454 = vunpack.c.h.b16 %v1662
    %v2455 = vunpack.c.l.b16 %v1663
    %v2456 = vunpack.c.h.b16 %v1663
    %v2457 = vunpack.c.l.b16 %v1664
    %v2458 = vunpack.c.h.b16 %v1664
    %v2459 = vunpack.c.l.b16 %v1665
    %v2460 = vunpack.c.h.b16 %v1665
    %v2461 = vunpack.c.l.b16 %v1666
    %v2462 = vunpack.c.h.b16 %v1666
    %v2463 = vunpack.c.l.b16 %v1667
    %v2464 = vunpack.c.h.b16 %v1667
    %v2465 = vunpack.c.l.b16 %v1668
    %v2466 = vunpack.c.h.b16 %v1668
    %v2467 = vunpack.c.l.b16 %v1669
    %v2468 = vunpack.c.h.b16 %v1669
    %v2469 = vunpack.c.l.b16 %v1670
    %v2470 = vunpack.c.h.b16 %v1670
    %v2471 = vunpack.c.l.b16 %v1671
    %v2472 = vunpack.c.h.b16 %v1671
    %v2473 = vunpack.c.l.b16 %v1672
    %v2474 = vunpack.c.h.b16 %v1672
    %v2475 = vunpack.c.l.b16 %v1673
    %v2476 = vunpack.c.h.b16 %v1673
    %v2477 = vunpack.c.l.b16 %v1674
    %v2478 = vunpack.c.h.b16 %v1674
    %v2479 = vunpack.c.l.b16 %v1675
    %v2480 = vunpack.c.h.b16 %v1675
    %v2481 = vunpack.c.l.b16 %v1676
    %v2482 = vunpack.c.h.b16 %v1676
    %v2483 = vunpack.c.l.b16 %v1677
    %v2484 = vunpack.c.h.b16 %v1677
    %v2485 = vunpack.c.l.b16 %v1678
    %v2486 = vunpack.c.h.b16 %v1678
    %v2487 = vunpack.c.l.b16 %v1679
    %v2488 = vunpack.c.h.b16 %v1679
    %v2489 = vunpack.c.l.b16 %v1680
    %v2490 = vunpack.c.h.b16 %v1680
    %v2491 = vunpack.c.l.b16 %v1681
    %v2492 = vunpack.c.h.b16 %v1681
    %v2493 = vunpack.c.l.b16 %v1682
    %v2494 = vunpack.c.h.b16 %v1682
    %v2495 = vunpack.c.l.b16 %v1683
    %v2496 = vunpack.c.h.b16 %v1683
    %v2497 = vunpack.c.l.b16 %v1684
    %v2498 = vunpack.c.h.b16 %v1684
    %v2499 = vunpack.c.l.b16 %v1685
    %v2500 = vunpack.c.h.b16 %v1685
    %v2501 = vunpack.c.l.b16 %v1686
    %v2502 = vunpack.c.h.b16 %v1686
    %v2503 = vunpack.c.l.b16 %v1687
    %v2504 = vunpack.c.h.b16 %v1687
    %v2505 = vunpack.c.l.b16 %v1688
    %v2506 = vunpack.c.h.b16 %v1688
    %v2507 = vunpack.c.l.b16 %v1689
    %v2508 = vunpack.c.h.b16 %v1689
    %v2509 = vunpack.c.l.b16 %v1690
    %v2510 = vunpack.c.h.b16 %v1690
    %v2511 = vunpack.c.l.b16 %v1691
    %v2512 = vunpack.c.h.b16 %v1691
    %v2513 = vunpack.c.l.b16 %v1692
    %v2514 = vunpack.c.h.b16 %v1692
    %v2515 = vunpack.c.l.b16 %v1693
    %v2516 = vunpack.c.h.b16 %v1693
    %v2517 = vunpack.c.l.b16 %v1694
    %v2518 = vunpack.c.h.b16 %v1694
    %v2519 = vunpack.c.l.b16 %v1695
    %v2520 = vunpack.c.h.b16 %v1695
    %v2521 = vunpack.c.l.b16 %v1696
    %v2522 = vunpack.c.h.b16 %v1696
    %v2523 = vunpack.c.l.b16 %v1697
    %v2524 = vunpack.c.h.b16 %v1697
    %v2525 = vunpack.c.l.b16 %v1698
    %v2526 = vunpack.c.h.b16 %v1698
    %v2527 = vunpack.c.l.b16 %v1699
    %v2528 = vunpack.c.h.b16 %v1699
    %v2529 = vunpack.c.l.b16 %v1700
    %v2530 = vunpack.c.h.b16 %v1700
    %v2531 = vunpack.c.l.b16 %v1701
    %v2532 = vunpack.c.h.b16 %v1701
    %v2533 = vunpack.c.l.b16 %v1702
    %v2534 = vunpack.c.h.b16 %v1702
    %v2535 = vunpack.c.l.b16 %v1703
    %v2536 = vunpack.c.h.b16 %v1703
    %v2537 = vunpack.c.l.b16 %v1704
    %v2538 = vunpack.c.h.b16 %v1704
    %v2539 = vunpack.c.l.b16 %v1705
    %v2540 = vunpack.c.h.b16 %v1705
    %v2541 = vunpack.c.l.b16 %v1706
    %v2542 = vunpack.c.h.b16 %v1706
    %v2543 = vunpack.c.l.b16 %v1707
    %v2544 = vunpack.c.h.b16 %v1707
    %v2545 = vunpack.c.l.b16 %v1708
    %v2546 = vunpack.c.h.b16 %v1708
    %v2547 = vunpack.c.l.b16 %v1709
    %v2548 = vunpack.c.h.b16 %v1709
    %v2549 = vunpack.c.l.b16 %v1710
    %v2550 = vunpack.c.h.b16 %v1710
    %v2551 = vunpack.c.l.b16 %v1711
    %v2552 = vunpack.c.h.b16 %v1711
    %v2553 = vunpack.c.l.b16 %v1712
    %v2554 = vunpack.c.h.b16 %v1712
    %v2555 = vunpack.c.l.b16 %v1713
    %v2556 = vunpack.c.h.b16 %v1713
    %v2557 = vunpack.c.l.b16 %v1714
    %v2558 = vunpack.c.h.b16 %v1714
    %v2559 = vunpack.c.l.b16 %v1715
    %v2560 = vunpack.c.h.b16 %v1715
    %v2561 = vunpack.c.l.b16 %v1716
    %v2562 = vunpack.c.h.b16 %v1716
    %v2563 = vunpack.c.l.b16 %v1717
    %v2564 = vunpack.c.h.b16 %v1717
    %v2565 = vunpack.c.l.b16 %v1718
    %v2566 = vunpack.c.h.b16 %v1718
    %v2567 = vunpack.c.l.b16 %v1719
    %v2568 = vunpack.c.h.b16 %v1719
    %v2569 = vunpack.c.l.b16 %v1720
    %v2570 = vunpack.c.h.b16 %v1720
    %v2571 = vunpack.c.l.b16 %v1721
    %v2572 = vunpack.c.h.b16 %v1721
    %v2573 = vunpack.c.l.b16 %v1722
    %v2574 = vunpack.c.h.b16 %v1722
    %v2575 = vunpack.c.l.b16 %v1723
    %v2576 = vunpack.c.h.b16 %v1723
    %v2577 = vunpack.c.l.b16 %v1724
    %v2578 = vunpack.c.h.b16 %v1724
    %v2579 = vunpack.c.l.b16 %v1725
    %v2580 = vunpack.c.h.b16 %v1725
    %v2581 = vunpack.c.l.b16 %v1726
    %v2582 = vunpack.c.h.b16 %v1726
    %v2583 = vunpack.c.l.b16 %v1727
    %v2584 = vunpack.c.h.b16 %v1727
    %v2585 = vunpack.c.l.b16 %v1728
    %v2586 = vunpack.c.h.b16 %v1728
    %v2587 = vunpack.c.l.b16 %v1729
    %v2588 = vunpack.c.h.b16 %v1729
    %v2589 = vunpack.c.l.b16 %v1730
    %v2590 = vunpack.c.h.b16 %v1730
    %v2591 = vunpack.c.l.b16 %v1731
    %v2592 = vunpack.c.h.b16 %v1731
    %v2593 = vunpack.c.l.b16 %v1732
    %v2594 = vunpack.c.h.b16 %v1732
    %v2595 = vunpack.c.l.b16 %v1733
    %v2596 = vunpack.c.h.b16 %v1733
    %v2597 = vunpack.c.l.b16 %v1734
    %v2598 = vunpack.c.h.b16 %v1734
    %v2599 = vunpack.c.l.b16 %v1735
    %v2600 = vunpack.c.h.b16 %v1735
    %v2601 = vunpack.c.l.b16 %v1736
    %v2602 = vunpack.c.h.b16 %v1736
    %v2603 = vunpack.c.l.b16 %v1737
    %v2604 = vunpack.c.h.b16 %v1737
    %v2605 = vunpack.c.l.b16 %v1738
    %v2606 = vunpack.c.h.b16 %v1738
    %v2607 = vunpack.c.l.b16 %v1739
    %v2608 = vunpack.c.h.b16 %v1739
    %v2609 = vunpack.c.l.b16 %v1740
    %v2610 = vunpack.c.h.b16 %v1740
    %v2611 = vunpack.c.l.b16 %v1741
    %v2612 = vunpack.c.h.b16 %v1741
    %v2613 = vunpack.c.l.b16 %v1742
    %v2614 = vunpack.c.h.b16 %v1742
    %v2615 = vunpack.c.l.b16 %v1743
    %v2616 = vunpack.c.h.b16 %v1743
    %v2617 = vunpack.c.l.b16 %v1744
    %v2618 = vunpack.c.h.b16 %v1744
    %v2619 = vunpack.c.l.b16 %v1745
    %v2620 = vunpack.c.h.b16 %v1745
    %v2621 = vunpack.c.l.b16 %v1746
    %v2622 = vunpack.c.h.b16 %v1746
    %v2623 = vunpack.c.l.b16 %v1747
    %v2624 = vunpack.c.h.b16 %v1747
    %v2625 = vunpack.c.l.b16 %v1748
    %v2626 = vunpack.c.h.b16 %v1748
    %v2627 = vunpack.c.l.b16 %v1749
    %v2628 = vunpack.c.h.b16 %v1749
    %v2629 = vunpack.c.l.b16 %v1750
    %v2630 = vunpack.c.h.b16 %v1750
    %v2631 = vunpack.c.l.b16 %v1751
    %v2632 = vunpack.c.h.b16 %v1751
    %v2633 = vunpack.c.l.b16 %v1752
    %v2634 = vunpack.c.h.b16 %v1752
    %v2635 = vunpack.c.l.b16 %v1753
    %v2636 = vunpack.c.h.b16 %v1753
    %v2637 = vunpack.c.l.b16 %v1754
    %v2638 = vunpack.c.h.b16 %v1754
    %v2639 = vunpack.c.l.b16 %v1755
    %v2640 = vunpack.c.h.b16 %v1755
    %v2641 = vunpack.c.l.b16 %v1756
    %v2642 = vunpack.c.h.b16 %v1756
    %v2643 = vunpack.c.l.b16 %v1757
    %v2644 = vunpack.c.h.b16 %v1757
    %v2645 = vunpack.c.l.b16 %v1758
    %v2646 = vunpack.c.h.b16 %v1758
    %v2647 = vunpack.c.l.b16 %v1759
    %v2648 = vunpack.c.h.b16 %v1759
    %v2649 = vunpack.c.l.b16 %v1760
    %v2650 = vunpack.c.h.b16 %v1760
    %v2651 = vunpack.c.l.b16 %v1761
    %v2652 = vunpack.c.h.b16 %v1761
    %v2653 = vunpack.c.l.b16 %v1762
    %v2654 = vunpack.c.h.b16 %v1762
    %v2655 = vunpack.c.l.b16 %v1763
    %v2656 = vunpack.c.h.b16 %v1763
    %v2657 = vunpack.c.l.b16 %v1764
    %v2658 = vunpack.c.h.b16 %v1764
    %v2659 = vunpack.c.l.b16 %v1765
    %v2660 = vunpack.c.h.b16 %v1765
    %v2661 = vunpack.c.l.b16 %v1766
    %v2662 = vunpack.c.h.b16 %v1766
    %v2663 = vunpack.c.l.b16 %v1767
    %v2664 = vunpack.c.h.b16 %v1767
    %v2665 = vunpack.c.l.b16 %v1768
    %v2666 = vunpack.c.h.b16 %v1768
    %v2667 = vunpack.c.l.b16 %v1769
    %v2668 = vunpack.c.h.b16 %v1769
    %v2669 = vunpack.c.l.b16 %v1770
    %v2670 = vunpack.c.h.b16 %v1770
    %v2671 = vunpack.c.l.b16 %v1771
    %v2672 = vunpack.c.h.b16 %v1771
    %v2673 = vunpack.c.l.b16 %v1772
    %v2674 = vunpack.c.h.b16 %v1772
    %v2675 = vunpack.c.l.b16 %v1773
    %v2676 = vunpack.c.h.b16 %v1773
    %v2677 = vunpack.c.l.b16 %v1774
    %v2678 = vunpack.c.h.b16 %v1774
    %v2679 = vunpack.c.l.b16 %v1775
    %v2680 = vunpack.c.h.b16 %v1775
    %v2681 = vunpack.c.l.b16 %v1776
    %v2682 = vunpack.c.h.b16 %v1776
    %v2683 = vunpack.c.l.b16 %v1777
    %v2684 = vunpack.c.h.b16 %v1777
    %v2685 = vunpack.c.l.b16 %v1778
    %v2686 = vunpack.c.h.b16 %v1778
    %v2687 = vunpack.c.l.b16 %v1779
    %v2688 = vunpack.c.h.b16 %v1779
    %v2689 = vunpack.c.l.b16 %v1780
    %v2690 = vunpack.c.h.b16 %v1780
    %v2691 = vunpack.c.l.b16 %v1781
    %v2692 = vunpack.c.h.b16 %v1781
    %v2693 = vunpack.c.l.b16 %v1782
    %v2694 = vunpack.c.h.b16 %v1782
    %v2695 = vunpack.c.l.b16 %v1783
    %v2696 = vunpack.c.h.b16 %v1783
    %v2697 = vunpack.c.l.b16 %v1784
    %v2698 = vunpack.c.h.b16 %v1784
    %v2699 = vunpack.c.l.b16 %v1785
    %v2700 = vunpack.c.h.b16 %v1785
    %v2701 = vunpack.c.l.b16 %v1786
    %v2702 = vunpack.c.h.b16 %v1786
    %v2703 = vunpack.c.l.b16 %v1787
    %v2704 = vunpack.c.h.b16 %v1787
    %v2705 = vunpack.c.l.b16 %v1788
    %v2706 = vunpack.c.h.b16 %v1788
    %v2707 = vunpack.c.l.b16 %v1789
    %v2708 = vunpack.c.h.b16 %v1789
    %v2709 = vunpack.c.l.b16 %v1790
    %v2710 = vunpack.c.h.b16 %v1790
    %v2711 = vunpack.c.l.b16 %v1791
    %v2712 = vunpack.c.h.b16 %v1791
    %v2713 = vunpack.c.l.b16 %v1792
    %v2714 = vunpack.c.h.b16 %v1792
    %v2715 = vunpack.c.l.b16 %v1793
    %v2716 = vunpack.c.h.b16 %v1793
    %v2717 = vunpack.c.l.b16 %v1794
    %v2718 = vunpack.c.h.b16 %v1794
    %v2719 = vunpack.c.l.b16 %v1795
    %v2720 = vunpack.c.h.b16 %v1795
    %v2721 = vunpack.c.l.b16 %v1796
    %v2722 = vunpack.c.h.b16 %v1796
    %v2723 = vunpack.c.l.b16 %v1797
    %v2724 = vunpack.c.h.b16 %v1797
    %v2725 = vunpack.c.l.b16 %v1798
    %v2726 = vunpack.c.h.b16 %v1798
    %v2727 = vunpack.c.l.b16 %v1799
    %v2728 = vunpack.c.h.b16 %v1799
    %v2729 = vunpack.c.l.b16 %v1800
    %v2730 = vunpack.c.h.b16 %v1800
    %v2731 = vunpack.c.l.b16 %v1801
    %v2732 = vunpack.c.h.b16 %v1801
    %v2733 = vunpack.c.l.b16 %v1802
    %v2734 = vunpack.c.h.b16 %v1802
    %v2735 = vunpack.c.l.b16 %v1803
    %v2736 = vunpack.c.h.b16 %v1803
    %v2737 = vunpack.c.l.b16 %v1804
    %v2738 = vunpack.c.h.b16 %v1804
    %v2739 = vunpack.c.l.b16 %v1805
    %v2740 = vunpack.c.h.b16 %v1805
    %v2741 = vunpack.c.l.b16 %v1806
    %v2742 = vunpack.c.h.b16 %v1806
    %v2743 = vunpack.c.l.b16 %v1807
    %v2744 = vunpack.c.h.b16 %v1807
    %v2745 = vunpack.c.l.b16 %v1808
    %v2746 = vunpack.c.h.b16 %v1808
    %v2747 = vunpack.c.l.b16 %v1809
    %v2748 = vunpack.c.h.b16 %v1809
    %v2749 = vunpack.c.l.b16 %v1810
    %v2750 = vunpack.c.h.b16 %v1810
    %v2751 = vunpack.c.l.b16 %v1811
    %v2752 = vunpack.c.h.b16 %v1811
    %v2753 = vunpack.c.l.b16 %v1812
    %v2754 = vunpack.c.h.b16 %v1812
    %v2755 = vunpack.c.l.b16 %v1813
    %v2756 = vunpack.c.h.b16 %v1813
    %v2757 = vunpack.c.l.b16 %v1814
    %v2758 = vunpack.c.h.b16 %v1814
    %v2759 = vunpack.c.l.b16 %v1815
    %v2760 = vunpack.c.h.b16 %v1815
    %v2761 = vunpack.c.l.b16 %v1816
    %v2762 = vunpack.c.h.b16 %v1816
    %v2763 = vunpack.c.l.b16 %v1817
    %v2764 = vunpack.c.h.b16 %v1817
    %v2765 = vunpack.c.l.b16 %v1818
    %v2766 = vunpack.c.h.b16 %v1818
    %v2767 = vunpack.c.l.b16 %v1819
    %v2768 = vunpack.c.h.b16 %v1819
    %v2769 = vunpack.c.l.b16 %v1820
    %v2770 = vunpack.c.h.b16 %v1820
    %v2771 = vunpack.c.l.b16 %v1821
    %v2772 = vunpack.c.h.b16 %v1821
    %v2773 = vunpack.c.l.b16 %v1822
    %v2774 = vunpack.c.h.b16 %v1822
    %v2775 = vunpack.c.l.b16 %v1823
    %v2776 = vunpack.c.h.b16 %v1823
    %v2777 = vunpack.c.l.b16 %v1824
    %v2778 = vunpack.c.h.b16 %v1824
    %v2779 = vunpack.c.l.b16 %v1825
    %v2780 = vunpack.c.h.b16 %v1825
    %v2781 = vunpack.c.l.b16 %v1826
    %v2782 = vunpack.c.h.b16 %v1826
    %v2783 = vunpack.c.l.b16 %v1827
    %v2784 = vunpack.c.h.b16 %v1827
    %v2785 = vunpack.c.l.b16 %v1828
    %v2786 = vunpack.c.h.b16 %v1828
    %v2787 = vunpack.c.l.b16 %v1829
    %v2788 = vunpack.c.h.b16 %v1829
    %v2789 = vunpack.c.l.b16 %v1830
    %v2790 = vunpack.c.h.b16 %v1830
    %v2791 = vpack.c.b16 %v2159, %v2151
    %v2792 = vpack.c.b16 %v2160, %v2152
    %v2793 = vpack.c.b16 %v2161, %v2153
    %v2794 = vpack.c.b16 %v2162, %v2154
    %v2795 = vpack.c.b16 %v2163, %v2155
    %v2796 = vpack.c.b16 %v2164, %v2156
    %v2797 = vpack.c.b16 %v2165, %v2157
    %v2798 = vpack.c.b16 %v2166, %v2158
    %v2799 = vpack.c.b16 %v2175, %v2167
    %v2800 = vpack.c.b16 %v2176, %v2168
    %v2801 = vpack.c.b16 %v2177, %v2169
    %v2802 = vpack.c.b16 %v2178, %v2170
    %v2803 = vpack.c.b16 %v2179, %v2171
    %v2804 = vpack.c.b16 %v2180, %v2172
    %v2805 = vpack.c.b16 %v2181, %v2173
    %v2806 = vpack.c.b16 %v2182, %v2174
    %v2807 = vpack.c.b16 %v2191, %v2183
    %v2808 = vpack.c.b16 %v2192, %v2184
    %v2809 = vpack.c.b16 %v2193, %v2185
    %v2810 = vpack.c.b16 %v2194, %v2186
    %v2811 = vpack.c.b16 %v2195, %v2187
    %v2812 = vpack.c.b16 %v2196, %v2188
    %v2813 = vpack.c.b16 %v2197, %v2189
    %v2814 = vpack.c.b16 %v2198, %v2190
    %v2815 = vpack.c.b16 %v2207, %v2199
    %v2816 = vpack.c.b16 %v2208, %v2200
    %v2817 = vpack.c.b16 %v2209, %v2201
    %v2818 = vpack.c.b16 %v2210, %v2202
    %v2819 = vpack.c.b16 %v2211, %v2203
    %v2820 = vpack.c.b16 %v2212, %v2204
    %v2821 = vpack.c.b16 %v2213, %v2205
    %v2822 = vpack.c.b16 %v2214, %v2206
    %v2823 = vpack.c.b16 %v2223, %v2215
    %v2824 = vpack.c.b16 %v2224, %v2216
    %v2825 = vpack.c.b16 %v2225, %v2217
    %v2826 = vpack.c.b16 %v2226, %v2218
    %v2827 = vpack.c.b16 %v2227, %v2219
    %v2828 = vpack.c.b16 %v2228, %v2220
    %v2829 = vpack.c.b16 %v2229, %v2221
    %v2830 = vpack.c.b16 %v2230, %v2222
    %v2831 = vpack.c.b16 %v2239, %v2231
    %v2832 = vpack.c.b16 %v2240, %v2232
    %v2833 = vpack.c.b16 %v2241, %v2233
    %v2834 = vpack.c.b16 %v2242, %v2234
    %v2835 = vpack.c.b16 %v2243, %v2235
    %v2836 = vpack.c.b16 %v2244, %v2236
    %v2837 = vpack.c.b16 %v2245, %v2237
    %v2838 = vpack.c.b16 %v2246, %v2238
    %v2839 = vpack.c.b16 %v2255, %v2247
    %v2840 = vpack.c.b16 %v2256, %v2248
    %v2841 = vpack.c.b16 %v2257, %v2249
    %v2842 = vpack.c.b16 %v2258, %v2250
    %v2843 = vpack.c.b16 %v2259, %v2251
    %v2844 = vpack.c.b16 %v2260, %v2252
    %v2845 = vpack.c.b16 %v2261, %v2253
    %v2846 = vpack.c.b16 %v2262, %v2254
    %v2847 = vpack.c.b16 %v2271, %v2263
    %v2848 = vpack.c.b16 %v2272, %v2264
    %v2849 = vpack.c.b16 %v2273, %v2265
    %v2850 = vpack.c.b16 %v2274, %v2266
    %v2851 = vpack.c.b16 %v2275, %v2267
    %v2852 = vpack.c.b16 %v2276, %v2268
    %v2853 = vpack.c.b16 %v2277, %v2269
    %v2854 = vpack.c.b16 %v2278, %v2270
    %v2855 = vpack.c.b16 %v2287, %v2279
    %v2856 = vpack.c.b16 %v2288, %v2280
    %v2857 = vpack.c.b16 %v2289, %v2281
    %v2858 = vpack.c.b16 %v2290, %v2282
    %v2859 = vpack.c.b16 %v2291, %v2283
    %v2860 = vpack.c.b16 %v2292, %v2284
    %v2861 = vpack.c.b16 %v2293, %v2285
    %v2862 = vpack.c.b16 %v2294, %v2286
    %v2863 = vpack.c.b16 %v2303, %v2295
    %v2864 = vpack.c.b16 %v2304, %v2296
    %v2865 = vpack.c.b16 %v2305, %v2297
    %v2866 = vpack.c.b16 %v2306, %v2298
    %v2867 = vpack.c.b16 %v2307, %v2299
    %v2868 = vpack.c.b16 %v2308, %v2300
    %v2869 = vpack.c.b16 %v2309, %v2301
    %v2870 = vpack.c.b16 %v2310, %v2302
    %v2871 = vpack.c.b16 %v2319, %v2311
    %v2872 = vpack.c.b16 %v2320, %v2312
    %v2873 = vpack.c.b16 %v2321, %v2313
    %v2874 = vpack.c.b16 %v2322, %v2314
    %v2875 = vpack.c.b16 %v2323, %v2315
    %v2876 = vpack.c.b16 %v2324, %v2316
    %v2877 = vpack.c.b16 %v2325, %v2317
    %v2878 = vpack.c.b16 %v2326, %v2318
    %v2879 = vpack.c.b16 %v2335, %v2327
    %v2880 = vpack.c.b16 %v2336, %v2328
    %v2881 = vpack.c.b16 %v2337, %v2329
    %v2882 = vpack.c.b16 %v2338, %v2330
    %v2883 = vpack.c.b16 %v2339, %v2331
    %v2884 = vpack.c.b16 %v2340, %v2332
    %v2885 = vpack.c.b16 %v2341, %v2333
    %v2886 = vpack.c.b16 %v2342, %v2334
    %v2887 = vpack.c.b16 %v2351, %v2343
    %v2888 = vpack.c.b16 %v2352, %v2344
    %v2889 = vpack.c.b16 %v2353, %v2345
    %v2890 = vpack.c.b16 %v2354, %v2346
    %v2891 = vpack.c.b16 %v2355, %v2347
    %v2892 = vpack.c.b16 %v2356, %v2348
    %v2893 = vpack.c.b16 %v2357, %v2349
    %v2894 = vpack.c.b16 %v2358, %v2350
    %v2895 = vpack.c.b16 %v2367, %v2359
    %v2896 = vpack.c.b16 %v2368, %v2360
    %v2897 = vpack.c.b16 %v2369, %v2361
    %v2898 = vpack.c.b16 %v2370, %v2362
    %v2899 = vpack.c.b16 %v2371, %v2363
    %v2900 = vpack.c.b16 %v2372, %v2364
    %v2901 = vpack.c.b16 %v2373, %v2365
    %v2902 = vpack.c.b16 %v2374, %v2366
    %v2903 = vpack.c.b16 %v2383, %v2375
    %v2904 = vpack.c.b16 %v2384, %v2376
    %v2905 = vpack.c.b16 %v2385, %v2377
    %v2906 = vpack.c.b16 %v2386, %v2378
    %v2907 = vpack.c.b16 %v2387, %v2379
    %v2908 = vpack.c.b16 %v2388, %v2380
    %v2909 = vpack.c.b16 %v2389, %v2381
    %v2910 = vpack.c.b16 %v2390, %v2382
    %v2911 = vpack.c.b16 %v2399, %v2391
    %v2912 = vpack.c.b16 %v2400, %v2392
    %v2913 = vpack.c.b16 %v2401, %v2393
    %v2914 = vpack.c.b16 %v2402, %v2394
    %v2915 = vpack.c.b16 %v2403, %v2395
    %v2916 = vpack.c.b16 %v2404, %v2396
    %v2917 = vpack.c.b16 %v2405, %v2397
    %v2918 = vpack.c.b16 %v2406, %v2398
    %v2919 = vpack.c.b16 %v2415, %v2407
    %v2920 = vpack.c.b16 %v2416, %v2408
    %v2921 = vpack.c.b16 %v2417, %v2409
    %v2922 = vpack.c.b16 %v2418, %v2410
    %v2923 = vpack.c.b16 %v2419, %v2411
    %v2924 = vpack.c.b16 %v2420, %v2412
    %v2925 = vpack.c.b16 %v2421, %v2413
    %v2926 = vpack.c.b16 %v2422, %v2414
    %v2927 = vpack.c.b16 %v2431, %v2423
    %v2928 = vpack.c.b16 %v2432, %v2424
    %v2929 = vpack.c.b16 %v2433, %v2425
    %v2930 = vpack.c.b16 %v2434, %v2426
    %v2931 = vpack.c.b16 %v2435, %v2427
    %v2932 = vpack.c.b16 %v2436, %v2428
    %v2933 = vpack.c.b16 %v2437, %v2429
    %v2934 = vpack.c.b16 %v2438, %v2430
    %v2935 = vpack.c.b16 %v2447, %v2439
    %v2936 = vpack.c.b16 %v2448, %v2440
    %v2937 = vpack.c.b16 %v2449, %v2441
    %v2938 = vpack.c.b16 %v2450, %v2442
    %v2939 = vpack.c.b16 %v2451, %v2443
    %v2940 = vpack.c.b16 %v2452, %v2444
    %v2941 = vpack.c.b16 %v2453, %v2445
    %v2942 = vpack.c.b16 %v2454, %v2446
    %v2943 = vpack.c.b16 %v2463, %v2455
    %v2944 = vpack.c.b16 %v2464, %v2456
    %v2945 = vpack.c.b16 %v2465, %v2457
    %v2946 = vpack.c.b16 %v2466, %v2458
    %v2947 = vpack.c.b16 %v2467, %v2459
    %v2948 = vpack.c.b16 %v2468, %v2460
    %v2949 = vpack.c.b16 %v2469, %v2461
    %v2950 = vpack.c.b16 %v2470, %v2462
    %v2951 = vpack.c.b16 %v2479, %v2471
    %v2952 = vpack.c.b16 %v2480, %v2472
    %v2953 = vpack.c.b16 %v2481, %v2473
    %v2954 = vpack.c.b16 %v2482, %v2474
    %v2955 = vpack.c.b16 %v2483, %v2475
    %v2956 = vpack.c.b16 %v2484, %v2476
    %v2957 = vpack.c.b16 %v2485, %v2477
    %v2958 = vpack.c.b16 %v2486, %v2478
    %v2959 = vpack.c.b16 %v2495, %v2487
    %v2960 = vpack.c.b16 %v2496, %v2488
    %v2961 = vpack.c.b16 %v2497, %v2489
    %v2962 = vpack.c.b16 %v2498, %v2490
    %v2963 = vpack.c.b16 %v2499, %v2491
    %v2964 = vpack.c.b16 %v2500, %v2492
    %v2965 = vpack.c.b16 %v2501, %v2493
    %v2966 = vpack.c.b16 %v2502, %v2494
    %v2967 = vpack.c.b16 %v2511, %v2503
    %v2968 = vpack.c.b16 %v2512, %v2504
    %v2969 = vpack.c.b16 %v2513, %v2505
    %v2970 = vpack.c.b16 %v2514, %v2506
    %v2971 = vpack.c.b16 %v2515, %v2507
    %v2972 = vpack.c.b16 %v2516, %v2508
    %v2973 = vpack.c.b16 %v2517, %v2509
    %v2974 = vpack.c.b16 %v2518, %v2510
    %v2975 = vpack.c.b16 %v2527, %v2519
    %v2976 = vpack.c.b16 %v2528, %v2520
    %v2977 = vpack.c.b16 %v2529, %v2521
    %v2978 = vpack.c.b16 %v2530, %v2522
    %v2979 = vpack.c.b16 %v2531, %v2523
    %v2980 = vpack.c.b16 %v2532, %v2524
    %v2981 = vpack.c.b16 %v2533, %v2525
    %v2982 = vpack.c.b16 %v2534, %v2526
    %v2983 = vpack.c.b16 %v2543, %v2535
    %v2984 = vpack.c.b16 %v2544, %v2536
    %v2985 = vpack.c.b16 %v2545, %v2537
    %v2986 = vpack.c.b16 %v2546, %v2538
    %v2987 = vpack.c.b16 %v2547, %v2539
    %v2988 = vpack.c.b16 %v2548, %v2540
    %v2989 = vpack.c.b16 %v2549, %v2541
    %v2990 = vpack.c.b16 %v2550, %v2542
    %v2991 = vpack.c.b16 %v2559, %v2551
    %v2992 = vpack.c.b16 %v2560, %v2552
    %v2993 = vpack.c.b16 %v2561, %v2553
    %v2994 = vpack.c.b16 %v2562, %v2554
    %v2995 = vpack.c.b16 %v2563, %v2555
    %v2996 = vpack.c.b16 %v2564, %v2556
    %v2997 = vpack.c.b16 %v2565, %v2557
    %v2998 = vpack.c.b16 %v2566, %v2558
    %v2999 = vpack.c.b16 %v2575, %v2567
    %v3000 = vpack.c.b16 %v2576, %v2568
    %v3001 = vpack.c.b16 %v2577, %v2569
    %v3002 = vpack.c.b16 %v2578, %v2570
    %v3003 = vpack.c.b16 %v2579, %v2571
    %v3004 = vpack.c.b16 %v2580, %v2572
    %v3005 = vpack.c.b16 %v2581, %v2573
    %v3006 = vpack.c.b16 %v2582, %v2574
    %v3007 = vpack.c.b16 %v2591, %v2583
    %v3008 = vpack.c.b16 %v2592, %v2584
    %v3009 = vpack.c.b16 %v2593, %v2585
    %v3010 = vpack.c.b16 %v2594, %v2586
    %v3011 = vpack.c.b16 %v2595, %v2587
    %v3012 = vpack.c.b16 %v2596, %v2588
    %v3013 = vpack.c.b16 %v2597, %v2589
    %v3014 = vpack.c.b16 %v2598, %v2590
    %v3015 = vpack.c.b16 %v2607, %v2599
    %v3016 = vpack.c.b16 %v2608, %v2600
    %v3017 = vpack.c.b16 %v2609, %v2601
    %v3018 = vpack.c.b16 %v2610, %v2602
    %v3019 = vpack.c.b16 %v2611, %v2603
    %v3020 = vpack.c.b16 %v2612, %v2604
    %v3021 = vpack.c.b16 %v2613, %v2605
    %v3022 = vpack.c.b16 %v2614, %v2606
    %v3023 = vpack.c.b16 %v2623, %v2615
    %v3024 = vpack.c.b16 %v2624, %v2616
    %v3025 = vpack.c.b16 %v2625, %v2617
    %v3026 = vpack.c.b16 %v2626, %v2618
    %v3027 = vpack.c.b16 %v2627, %v2619
    %v3028 = vpack.c.b16 %v2628, %v2620
    %v3029 = vpack.c.b16 %v2629, %v2621
    %v3030 = vpack.c.b16 %v2630, %v2622
    %v3031 = vpack.c.b16 %v2639, %v2631
    %v3032 = vpack.c.b16 %v2640, %v2632
    %v3033 = vpack.c.b16 %v2641, %v2633
    %v3034 = vpack.c.b16 %v2642, %v2634
    %v3035 = vpack.c.b16 %v2643, %v2635
    %v3036 = vpack.c.b16 %v2644, %v2636
    %v3037 = vpack.c.b16 %v2645, %v2637
    %v3038 = vpack.c.b16 %v2646, %v2638
    %v3039 = vpack.c.b16 %v2655, %v2647
    %v3040 = vpack.c.b16 %v2656, %v2648
    %v3041 = vpack.c.b16 %v2657, %v2649
    %v3042 = vpack.c.b16 %v2658, %v2650
    %v3043 = vpack.c.b16 %v2659, %v2651
    %v3044 = vpack.c.b16 %v2660, %v2652
    %v3045 = vpack.c.b16 %v2661, %v2653
    %v3046 = vpack.c.b16 %v2662, %v2654
    %v3047 = vpack.c.b16 %v2671, %v2663
    %v3048 = vpack.c.b16 %v2672, %v2664
    %v3049 = vpack.c.b16 %v2673, %v2665
    %v3050 = vpack.c.b16 %v2674, %v2666
    %v3051 = vpack.c.b16 %v2675, %v2667
    %v3052 = vpack.c.b16 %v2676, %v2668
    %v3053 = vpack.c.b16 %v2677, %v2669
    %v3054 = vpack.c.b16 %v2678, %v2670
    %v3055 = vpack.c.b16 %v2687, %v2679
    %v3056 = vpack.c.b16 %v2688, %v2680
    %v3057 = vpack.c.b16 %v2689, %v2681
    %v3058 = vpack.c.b16 %v2690, %v2682
    %v3059 = vpack.c.b16 %v2691, %v2683
    %v3060 = vpack.c.b16 %v2692, %v2684
    %v3061 = vpack.c.b16 %v2693, %v2685
    %v3062 = vpack.c.b16 %v2694, %v2686
    %v3063 = vpack.c.b16 %v2703, %v2695
    %v3064 = vpack.c.b16 %v2704, %v2696
    %v3065 = vpack.c.b16 %v2705, %v2697
    %v3066 = vpack.c.b16 %v2706, %v2698
    %v3067 = vpack.c.b16 %v2707, %v2699
    %v3068 = vpack.c.b16 %v2708, %v2700
    %v3069 = vpack.c.b16 %v2709, %v2701
    %v3070 = vpack.c.b16 %v2710, %v2702
    %v3071 = vpack.c.b16 %v2719, %v2711
    %v3072 = vpack.c.b16 %v2720, %v2712
    %v3073 = vpack.c.b16 %v2721, %v2713
    %v3074 = vpack.c.b16 %v2722, %v2714
    %v3075 = vpack.c.b16 %v2723, %v2715
    %v3076 = vpack.c.b16 %v2724, %v2716
    %v3077 = vpack.c.b16 %v2725, %v2717
    %v3078 = vpack.c.b16 %v2726, %v2718
    %v3079 = vpack.c.b16 %v2735, %v2727
    %v3080 = vpack.c.b16 %v2736, %v2728
    %v3081 = vpack.c.b16 %v2737, %v2729
    %v3082 = vpack.c.b16 %v2738, %v2730
    %v3083 = vpack.c.b16 %v2739, %v2731
    %v3084 = vpack.c.b16 %v2740, %v2732
    %v3085 = vpack.c.b16 %v2741, %v2733
    %v3086 = vpack.c.b16 %v2742, %v2734
    %v3087 = vpack.c.b16 %v2751, %v2743
    %v3088 = vpack.c.b16 %v2752, %v2744
    %v3089 = vpack.c.b16 %v2753, %v2745
    %v3090 = vpack.c.b16 %v2754, %v2746
    %v3091 = vpack.c.b16 %v2755, %v2747
    %v3092 = vpack.c.b16 %v2756, %v2748
    %v3093 = vpack.c.b16 %v2757, %v2749
    %v3094 = vpack.c.b16 %v2758, %v2750
    %v3095 = vpack.c.b16 %v2767, %v2759
    %v3096 = vpack.c.b16 %v2768, %v2760
    %v3097 = vpack.c.b16 %v2769, %v2761
    %v3098 = vpack.c.b16 %v2770, %v2762
    %v3099 = vpack.c.b16 %v2771, %v2763
    %v3100 = vpack.c.b16 %v2772, %v2764
    %v3101 = vpack.c.b16 %v2773, %v2765
    %v3102 = vpack.c.b16 %v2774, %v2766
    %v3103 = vpack.c.b16 %v2783, %v2775
    %v3104 = vpack.c.b16 %v2784, %v2776
    %v3105 = vpack.c.b16 %v2785, %v2777
    %v3106 = vpack.c.b16 %v2786, %v2778
    %v3107 = vpack.c.b16 %v2787, %v2779
    %v3108 = vpack.c.b16 %v2788, %v2780
    %v3109 = vpack.c.b16 %v2789, %v2781
    %v3110 = vpack.c.b16 %v2790, %v2782
    %3431 = vmatpush.bf16.msra.mxu0 %v2847
    %3432 = vmatpush.bf16.msra.mxu0 %v2839
    %3433 = vmatpush.bf16.msra.mxu0 %v2831
    %3434 = vmatpush.bf16.msra.mxu0 %v2823
    %3435 = vmatpush.bf16.msra.mxu0 %v2815
    %3436 = vmatpush.bf16.msra.mxu0 %v2807
    %3437 = vmatpush.bf16.msra.mxu0 %v2799
    %3438 = vmatpush.bf16.msra.mxu0 %v2791
    %3439 = vmatmul.bf16.gmra.mxu0 %v1506
    %v3440 = vpop.f32.mrf.mxu0
    %v3441 = vadd.f32 0.0, %v3440
    %v3442 = vpop.f32.mrf.mxu0
    %3443 = vdwg.mxu0
    %3444 = vmatpush.bf16.msra.mxu0 %v2911
    %3445 = vmatpush.bf16.msra.mxu0 %v2903
    %3446 = vmatpush.bf16.msra.mxu0 %v2895
    %3447 = vmatpush.bf16.msra.mxu0 %v2887
    %3448 = vmatpush.bf16.msra.mxu0 %v2879
    %3449 = vmatpush.bf16.msra.mxu0 %v2871
    %3450 = vmatpush.bf16.msra.mxu0 %v2863
    %3451 = vmatpush.bf16.msra.mxu0 %v2855
    %3452 = vmatmul.bf16.gmra.mxu0 %v1507
    %v3453 = vpop.f32.mrf.mxu0
    %v3454 = vadd.f32 %v3441, %v3453
    %v3455 = vpop.f32.mrf.mxu0
    %3456 = vdwg.mxu0
    %3457 = vmatpush.bf16.msra.mxu0 %v2975
    %3458 = vmatpush.bf16.msra.mxu0 %v2967
    %3459 = vmatpush.bf16.msra.mxu0 %v2959
    %3460 = vmatpush.bf16.msra.mxu0 %v2951
    %3461 = vmatpush.bf16.msra.mxu0 %v2943
    %3462 = vmatpush.bf16.msra.mxu0 %v2935
    %3463 = vmatpush.bf16.msra.mxu0 %v2927
    %3464 = vmatpush.bf16.msra.mxu0 %v2919
    %3465 = vmatmul.bf16.gmra.mxu0 %v1508
    %v3466 = vpop.f32.mrf.mxu0
    %v3467 = vadd.f32 %v3454, %v3466
    %v3468 = vpop.f32.mrf.mxu0
    %3469 = vdwg.mxu0
    %3470 = vmatpush.bf16.msra.mxu0 %v3039
    %3471 = vmatpush.bf16.msra.mxu0 %v3031
    %3472 = vmatpush.bf16.msra.mxu0 %v3023
    %3473 = vmatpush.bf16.msra.mxu0 %v3015
    %3474 = vmatpush.bf16.msra.mxu0 %v3007
    %3475 = vmatpush.bf16.msra.mxu0 %v2999
    %3476 = vmatpush.bf16.msra.mxu0 %v2991
    %3477 = vmatpush.bf16.msra.mxu0 %v2983
    %3478 = vmatmul.bf16.gmra.mxu0 %v1509
    %v3479 = vpop.f32.mrf.mxu0
    %v3480 = vadd.f32 %v3467, %v3479
    %v3481 = vpop.f32.mrf.mxu0
    %3482 = vdwg.mxu0
    %3483 = vmatpush.bf16.msra.mxu0 %v3103
    %3484 = vmatpush.bf16.msra.mxu0 %v3095
    %3485 = vmatpush.bf16.msra.mxu0 %v3087
    %3486 = vmatpush.bf16.msra.mxu0 %v3079
    %3487 = vmatpush.bf16.msra.mxu0 %v3071
    %3488 = vmatpush.bf16.msra.mxu0 %v3063
    %3489 = vmatpush.bf16.msra.mxu0 %v3055
    %3490 = vmatpush.bf16.msra.mxu0 %v3047
    %3491 = vmatmul.bf16.gmra.mxu0 %v1510
    %v3492 = vpop.f32.mrf.mxu0
    %v3493 = vadd.f32 %v3480, %v3492
    %v3494 = vpop.f32.mrf.mxu0
    %3495 = vdwg.mxu0
    %3496 = vmatpush.bf16.msra.mxu0 %v2848
    %3497 = vmatpush.bf16.msra.mxu0 %v2840
    %3498 = vmatpush.bf16.msra.mxu0 %v2832
    %3499 = vmatpush.bf16.msra.mxu0 %v2824
    %3500 = vmatpush.bf16.msra.mxu0 %v2816
    %3501 = vmatpush.bf16.msra.mxu0 %v2808
    %3502 = vmatpush.bf16.msra.mxu0 %v2800
    %3503 = vmatpush.bf16.msra.mxu0 %v2792
    %3504 = vmatmul.bf16.gmra.mxu0 %v1506
    %v3505 = vpop.f32.mrf.mxu0
    %v3506 = vadd.f32 0.0, %v3505
    %v3507 = vpop.f32.mrf.mxu0
    %3508 = vdwg.mxu0
    %3509 = vmatpush.bf16.msra.mxu0 %v2912
    %3510 = vmatpush.bf16.msra.mxu0 %v2904
    %3511 = vmatpush.bf16.msra.mxu0 %v2896
    %3512 = vmatpush.bf16.msra.mxu0 %v2888
    %3513 = vmatpush.bf16.msra.mxu0 %v2880
    %3514 = vmatpush.bf16.msra.mxu0 %v2872
    %3515 = vmatpush.bf16.msra.mxu0 %v2864
    %3516 = vmatpush.bf16.msra.mxu0 %v2856
    %3517 = vmatmul.bf16.gmra.mxu0 %v1507
    %v3518 = vpop.f32.mrf.mxu0
    %v3519 = vadd.f32 %v3506, %v3518
    %v3520 = vpop.f32.mrf.mxu0
    %3521 = vdwg.mxu0
    %3522 = vmatpush.bf16.msra.mxu0 %v2976
    %3523 = vmatpush.bf16.msra.mxu0 %v2968
    %3524 = vmatpush.bf16.msra.mxu0 %v2960
    %3525 = vmatpush.bf16.msra.mxu0 %v2952
    %3526 = vmatpush.bf16.msra.mxu0 %v2944
    %3527 = vmatpush.bf16.msra.mxu0 %v2936
    %3528 = vmatpush.bf16.msra.mxu0 %v2928
    %3529 = vmatpush.bf16.msra.mxu0 %v2920
    %3530 = vmatmul.bf16.gmra.mxu0 %v1508
    %v3531 = vpop.f32.mrf.mxu0
    %v3532 = vadd.f32 %v3519, %v3531
    %v3533 = vpop.f32.mrf.mxu0
    %3534 = vdwg.mxu0
    %3535 = vmatpush.bf16.msra.mxu0 %v3040
    %3536 = vmatpush.bf16.msra.mxu0 %v3032
    %3537 = vmatpush.bf16.msra.mxu0 %v3024
    %3538 = vmatpush.bf16.msra.mxu0 %v3016
    %3539 = vmatpush.bf16.msra.mxu0 %v3008
    %3540 = vmatpush.bf16.msra.mxu0 %v3000
    %3541 = vmatpush.bf16.msra.mxu0 %v2992
    %3542 = vmatpush.bf16.msra.mxu0 %v2984
    %3543 = vmatmul.bf16.gmra.mxu0 %v1509
    %v3544 = vpop.f32.mrf.mxu0
    %v3545 = vadd.f32 %v3532, %v3544
    %v3546 = vpop.f32.mrf.mxu0
    %3547 = vdwg.mxu0
    %3548 = vmatpush.bf16.msra.mxu0 %v3104
    %3549 = vmatpush.bf16.msra.mxu0 %v3096
    %3550 = vmatpush.bf16.msra.mxu0 %v3088
    %3551 = vmatpush.bf16.msra.mxu0 %v3080
    %3552 = vmatpush.bf16.msra.mxu0 %v3072
    %3553 = vmatpush.bf16.msra.mxu0 %v3064
    %3554 = vmatpush.bf16.msra.mxu0 %v3056
    %3555 = vmatpush.bf16.msra.mxu0 %v3048
    %3556 = vmatmul.bf16.gmra.mxu0 %v1510
    %v3557 = vpop.f32.mrf.mxu0
    %v3558 = vadd.f32 %v3545, %v3557
    %v3559 = vpop.f32.mrf.mxu0
    %3560 = vdwg.mxu0
    %3561 = vmatpush.bf16.msra.mxu0 %v2849
    %3562 = vmatpush.bf16.msra.mxu0 %v2841
    %3563 = vmatpush.bf16.msra.mxu0 %v2833
    %3564 = vmatpush.bf16.msra.mxu0 %v2825
    %3565 = vmatpush.bf16.msra.mxu0 %v2817
    %3566 = vmatpush.bf16.msra.mxu0 %v2809
    %3567 = vmatpush.bf16.msra.mxu0 %v2801
    %3568 = vmatpush.bf16.msra.mxu0 %v2793
    %3569 = vmatmul.bf16.gmra.mxu0 %v1506
    %v3570 = vpop.f32.mrf.mxu0
    %v3571 = vadd.f32 0.0, %v3570
    %v3572 = vpop.f32.mrf.mxu0
    %3573 = vdwg.mxu0
    %3574 = vmatpush.bf16.msra.mxu0 %v2913
    %3575 = vmatpush.bf16.msra.mxu0 %v2905
    %3576 = vmatpush.bf16.msra.mxu0 %v2897
    %3577 = vmatpush.bf16.msra.mxu0 %v2889
    %3578 = vmatpush.bf16.msra.mxu0 %v2881
    %3579 = vmatpush.bf16.msra.mxu0 %v2873
    %3580 = vmatpush.bf16.msra.mxu0 %v2865
    %3581 = vmatpush.bf16.msra.mxu0 %v2857
    %3582 = vmatmul.bf16.gmra.mxu0 %v1507
    %v3583 = vpop.f32.mrf.mxu0
    %v3584 = vadd.f32 %v3571, %v3583
    %v3585 = vpop.f32.mrf.mxu0
    %3586 = vdwg.mxu0
    %3587 = vmatpush.bf16.msra.mxu0 %v2977
    %3588 = vmatpush.bf16.msra.mxu0 %v2969
    %3589 = vmatpush.bf16.msra.mxu0 %v2961
    %3590 = vmatpush.bf16.msra.mxu0 %v2953
    %3591 = vmatpush.bf16.msra.mxu0 %v2945
    %3592 = vmatpush.bf16.msra.mxu0 %v2937
    %3593 = vmatpush.bf16.msra.mxu0 %v2929
    %3594 = vmatpush.bf16.msra.mxu0 %v2921
    %3595 = vmatmul.bf16.gmra.mxu0 %v1508
    %v3596 = vpop.f32.mrf.mxu0
    %v3597 = vadd.f32 %v3584, %v3596
    %v3598 = vpop.f32.mrf.mxu0
    %3599 = vdwg.mxu0
    %3600 = vmatpush.bf16.msra.mxu0 %v3041
    %3601 = vmatpush.bf16.msra.mxu0 %v3033
    %3602 = vmatpush.bf16.msra.mxu0 %v3025
    %3603 = vmatpush.bf16.msra.mxu0 %v3017
    %3604 = vmatpush.bf16.msra.mxu0 %v3009
    %3605 = vmatpush.bf16.msra.mxu0 %v3001
    %3606 = vmatpush.bf16.msra.mxu0 %v2993
    %3607 = vmatpush.bf16.msra.mxu0 %v2985
    %3608 = vmatmul.bf16.gmra.mxu0 %v1509
    %v3609 = vpop.f32.mrf.mxu0
    %v3610 = vadd.f32 %v3597, %v3609
    %v3611 = vpop.f32.mrf.mxu0
    %3612 = vdwg.mxu0
    %3613 = vmatpush.bf16.msra.mxu0 %v3105
    %3614 = vmatpush.bf16.msra.mxu0 %v3097
    %3615 = vmatpush.bf16.msra.mxu0 %v3089
    %3616 = vmatpush.bf16.msra.mxu0 %v3081
    %3617 = vmatpush.bf16.msra.mxu0 %v3073
    %3618 = vmatpush.bf16.msra.mxu0 %v3065
    %3619 = vmatpush.bf16.msra.mxu0 %v3057
    %3620 = vmatpush.bf16.msra.mxu0 %v3049
    %3621 = vmatmul.bf16.gmra.mxu0 %v1510
    %v3622 = vpop.f32.mrf.mxu0
    %v3623 = vadd.f32 %v3610, %v3622
    %v3624 = vpop.f32.mrf.mxu0
    %3625 = vdwg.mxu0
    %3626 = vmatpush.bf16.msra.mxu0 %v2850
    %3627 = vmatpush.bf16.msra.mxu0 %v2842
    %3628 = vmatpush.bf16.msra.mxu0 %v2834
    %3629 = vmatpush.bf16.msra.mxu0 %v2826
    %3630 = vmatpush.bf16.msra.mxu0 %v2818
    %3631 = vmatpush.bf16.msra.mxu0 %v2810
    %3632 = vmatpush.bf16.msra.mxu0 %v2802
    %3633 = vmatpush.bf16.msra.mxu0 %v2794
    %3634 = vmatmul.bf16.gmra.mxu0 %v1506
    %v3635 = vpop.f32.mrf.mxu0
    %v3636 = vadd.f32 0.0, %v3635
    %v3637 = vpop.f32.mrf.mxu0
    %3638 = vdwg.mxu0
    %3639 = vmatpush.bf16.msra.mxu0 %v2914
    %3640 = vmatpush.bf16.msra.mxu0 %v2906
    %3641 = vmatpush.bf16.msra.mxu0 %v2898
    %3642 = vmatpush.bf16.msra.mxu0 %v2890
    %3643 = vmatpush.bf16.msra.mxu0 %v2882
    %3644 = vmatpush.bf16.msra.mxu0 %v2874
    %3645 = vmatpush.bf16.msra.mxu0 %v2866
    %3646 = vmatpush.bf16.msra.mxu0 %v2858
    %3647 = vmatmul.bf16.gmra.mxu0 %v1507
    %v3648 = vpop.f32.mrf.mxu0
    %v3649 = vadd.f32 %v3636, %v3648
    %v3650 = vpop.f32.mrf.mxu0
    %3651 = vdwg.mxu0
    %3652 = vmatpush.bf16.msra.mxu0 %v2978
    %3653 = vmatpush.bf16.msra.mxu0 %v2970
    %3654 = vmatpush.bf16.msra.mxu0 %v2962
    %3655 = vmatpush.bf16.msra.mxu0 %v2954
    %3656 = vmatpush.bf16.msra.mxu0 %v2946
    %3657 = vmatpush.bf16.msra.mxu0 %v2938
    %3658 = vmatpush.bf16.msra.mxu0 %v2930
    %3659 = vmatpush.bf16.msra.mxu0 %v2922
    %3660 = vmatmul.bf16.gmra.mxu0 %v1508
    %v3661 = vpop.f32.mrf.mxu0
    %v3662 = vadd.f32 %v3649, %v3661
    %v3663 = vpop.f32.mrf.mxu0
    %3664 = vdwg.mxu0
    %3665 = vmatpush.bf16.msra.mxu0 %v3042
    %3666 = vmatpush.bf16.msra.mxu0 %v3034
    %3667 = vmatpush.bf16.msra.mxu0 %v3026
    %3668 = vmatpush.bf16.msra.mxu0 %v3018
    %3669 = vmatpush.bf16.msra.mxu0 %v3010
    %3670 = vmatpush.bf16.msra.mxu0 %v3002
    %3671 = vmatpush.bf16.msra.mxu0 %v2994
    %3672 = vmatpush.bf16.msra.mxu0 %v2986
    %3673 = vmatmul.bf16.gmra.mxu0 %v1509
    %v3674 = vpop.f32.mrf.mxu0
    %v3675 = vadd.f32 %v3662, %v3674
    %v3676 = vpop.f32.mrf.mxu0
    %3677 = vdwg.mxu0
    %3678 = vmatpush.bf16.msra.mxu0 %v3106
    %3679 = vmatpush.bf16.msra.mxu0 %v3098
    %3680 = vmatpush.bf16.msra.mxu0 %v3090
    %3681 = vmatpush.bf16.msra.mxu0 %v3082
    %3682 = vmatpush.bf16.msra.mxu0 %v3074
    %3683 = vmatpush.bf16.msra.mxu0 %v3066
    %3684 = vmatpush.bf16.msra.mxu0 %v3058
    %3685 = vmatpush.bf16.msra.mxu0 %v3050
    %3686 = vmatmul.bf16.gmra.mxu0 %v1510
    %v3687 = vpop.f32.mrf.mxu0
    %v3688 = vadd.f32 %v3675, %v3687
    %v3689 = vpop.f32.mrf.mxu0
    %3690 = vdwg.mxu0
    %3691 = vmatpush.bf16.msra.mxu0 %v2851
    %3692 = vmatpush.bf16.msra.mxu0 %v2843
    %3693 = vmatpush.bf16.msra.mxu0 %v2835
    %3694 = vmatpush.bf16.msra.mxu0 %v2827
    %3695 = vmatpush.bf16.msra.mxu0 %v2819
    %3696 = vmatpush.bf16.msra.mxu0 %v2811
    %3697 = vmatpush.bf16.msra.mxu0 %v2803
    %3698 = vmatpush.bf16.msra.mxu0 %v2795
    %3699 = vmatmul.bf16.gmra.mxu0 %v1506
    %v3700 = vpop.f32.mrf.mxu0
    %v3701 = vadd.f32 0.0, %v3700
    %v3702 = vpop.f32.mrf.mxu0
    %3703 = vdwg.mxu0
    %3704 = vmatpush.bf16.msra.mxu0 %v2915
    %3705 = vmatpush.bf16.msra.mxu0 %v2907
    %3706 = vmatpush.bf16.msra.mxu0 %v2899
    %3707 = vmatpush.bf16.msra.mxu0 %v2891
    %3708 = vmatpush.bf16.msra.mxu0 %v2883
    %3709 = vmatpush.bf16.msra.mxu0 %v2875
    %3710 = vmatpush.bf16.msra.mxu0 %v2867
    %3711 = vmatpush.bf16.msra.mxu0 %v2859
    %3712 = vmatmul.bf16.gmra.mxu0 %v1507
    %v3713 = vpop.f32.mrf.mxu0
    %v3714 = vadd.f32 %v3701, %v3713
    %v3715 = vpop.f32.mrf.mxu0
    %3716 = vdwg.mxu0
    %3717 = vmatpush.bf16.msra.mxu0 %v2979
    %3718 = vmatpush.bf16.msra.mxu0 %v2971
    %3719 = vmatpush.bf16.msra.mxu0 %v2963
    %3720 = vmatpush.bf16.msra.mxu0 %v2955
    %3721 = vmatpush.bf16.msra.mxu0 %v2947
    %3722 = vmatpush.bf16.msra.mxu0 %v2939
    %3723 = vmatpush.bf16.msra.mxu0 %v2931
    %3724 = vmatpush.bf16.msra.mxu0 %v2923
    %3725 = vmatmul.bf16.gmra.mxu0 %v1508
    %v3726 = vpop.f32.mrf.mxu0
    %v3727 = vadd.f32 %v3714, %v3726
    %v3728 = vpop.f32.mrf.mxu0
    %3729 = vdwg.mxu0
    %3730 = vmatpush.bf16.msra.mxu0 %v3043
    %3731 = vmatpush.bf16.msra.mxu0 %v3035
    %3732 = vmatpush.bf16.msra.mxu0 %v3027
    %3733 = vmatpush.bf16.msra.mxu0 %v3019
    %3734 = vmatpush.bf16.msra.mxu0 %v3011
    %3735 = vmatpush.bf16.msra.mxu0 %v3003
    %3736 = vmatpush.bf16.msra.mxu0 %v2995
    %3737 = vmatpush.bf16.msra.mxu0 %v2987
    %3738 = vmatmul.bf16.gmra.mxu0 %v1509
    %v3739 = vpop.f32.mrf.mxu0
    %v3740 = vadd.f32 %v3727, %v3739
    %v3741 = vpop.f32.mrf.mxu0
    %3742 = vdwg.mxu0
    %3743 = vmatpush.bf16.msra.mxu0 %v3107
    %3744 = vmatpush.bf16.msra.mxu0 %v3099
    %3745 = vmatpush.bf16.msra.mxu0 %v3091
    %3746 = vmatpush.bf16.msra.mxu0 %v3083
    %3747 = vmatpush.bf16.msra.mxu0 %v3075
    %3748 = vmatpush.bf16.msra.mxu0 %v3067
    %3749 = vmatpush.bf16.msra.mxu0 %v3059
    %3750 = vmatpush.bf16.msra.mxu0 %v3051
    %3751 = vmatmul.bf16.gmra.mxu0 %v1510
    %v3752 = vpop.f32.mrf.mxu0
    %v3753 = vadd.f32 %v3740, %v3752
    %v3754 = vpop.f32.mrf.mxu0
    %3755 = vdwg.mxu0
    %3756 = vmatpush.bf16.msra.mxu0 %v2852
    %3757 = vmatpush.bf16.msra.mxu0 %v2844
    %3758 = vmatpush.bf16.msra.mxu0 %v2836
    %3759 = vmatpush.bf16.msra.mxu0 %v2828
    %3760 = vmatpush.bf16.msra.mxu0 %v2820
    %3761 = vmatpush.bf16.msra.mxu0 %v2812
    %3762 = vmatpush.bf16.msra.mxu0 %v2804
    %3763 = vmatpush.bf16.msra.mxu0 %v2796
    %3764 = vmatmul.bf16.gmra.mxu0 %v1506
    %v3765 = vpop.f32.mrf.mxu0
    %v3766 = vadd.f32 0.0, %v3765
    %v3767 = vpop.f32.mrf.mxu0
    %3768 = vdwg.mxu0
    %3769 = vmatpush.bf16.msra.mxu0 %v2916
    %3770 = vmatpush.bf16.msra.mxu0 %v2908
    %3771 = vmatpush.bf16.msra.mxu0 %v2900
    %3772 = vmatpush.bf16.msra.mxu0 %v2892
    %3773 = vmatpush.bf16.msra.mxu0 %v2884
    %3774 = vmatpush.bf16.msra.mxu0 %v2876
    %3775 = vmatpush.bf16.msra.mxu0 %v2868
    %3776 = vmatpush.bf16.msra.mxu0 %v2860
    %3777 = vmatmul.bf16.gmra.mxu0 %v1507
    %v3778 = vpop.f32.mrf.mxu0
    %v3779 = vadd.f32 %v3766, %v3778
    %v3780 = vpop.f32.mrf.mxu0
    %3781 = vdwg.mxu0
    %3782 = vmatpush.bf16.msra.mxu0 %v2980
    %3783 = vmatpush.bf16.msra.mxu0 %v2972
    %3784 = vmatpush.bf16.msra.mxu0 %v2964
    %3785 = vmatpush.bf16.msra.mxu0 %v2956
    %3786 = vmatpush.bf16.msra.mxu0 %v2948
    %3787 = vmatpush.bf16.msra.mxu0 %v2940
    %3788 = vmatpush.bf16.msra.mxu0 %v2932
    %3789 = vmatpush.bf16.msra.mxu0 %v2924
    %3790 = vmatmul.bf16.gmra.mxu0 %v1508
    %v3791 = vpop.f32.mrf.mxu0
    %v3792 = vadd.f32 %v3779, %v3791
    %v3793 = vpop.f32.mrf.mxu0
    %3794 = vdwg.mxu0
    %3795 = vmatpush.bf16.msra.mxu0 %v3044
    %3796 = vmatpush.bf16.msra.mxu0 %v3036
    %3797 = vmatpush.bf16.msra.mxu0 %v3028
    %3798 = vmatpush.bf16.msra.mxu0 %v3020
    %3799 = vmatpush.bf16.msra.mxu0 %v3012
    %3800 = vmatpush.bf16.msra.mxu0 %v3004
    %3801 = vmatpush.bf16.msra.mxu0 %v2996
    %3802 = vmatpush.bf16.msra.mxu0 %v2988
    %3803 = vmatmul.bf16.gmra.mxu0 %v1509
    %v3804 = vpop.f32.mrf.mxu0
    %v3805 = vadd.f32 %v3792, %v3804
    %v3806 = vpop.f32.mrf.mxu0
    %3807 = vdwg.mxu0
    %3808 = vmatpush.bf16.msra.mxu0 %v3108
    %3809 = vmatpush.bf16.msra.mxu0 %v3100
    %3810 = vmatpush.bf16.msra.mxu0 %v3092
    %3811 = vmatpush.bf16.msra.mxu0 %v3084
    %3812 = vmatpush.bf16.msra.mxu0 %v3076
    %3813 = vmatpush.bf16.msra.mxu0 %v3068
    %3814 = vmatpush.bf16.msra.mxu0 %v3060
    %3815 = vmatpush.bf16.msra.mxu0 %v3052
    %3816 = vmatmul.bf16.gmra.mxu0 %v1510
    %v3817 = vpop.f32.mrf.mxu0
    %v3818 = vadd.f32 %v3805, %v3817
    %v3819 = vpop.f32.mrf.mxu0
    %3820 = vdwg.mxu0
    %3821 = vmatpush.bf16.msra.mxu0 %v2853
    %3822 = vmatpush.bf16.msra.mxu0 %v2845
    %3823 = vmatpush.bf16.msra.mxu0 %v2837
    %3824 = vmatpush.bf16.msra.mxu0 %v2829
    %3825 = vmatpush.bf16.msra.mxu0 %v2821
    %3826 = vmatpush.bf16.msra.mxu0 %v2813
    %3827 = vmatpush.bf16.msra.mxu0 %v2805
    %3828 = vmatpush.bf16.msra.mxu0 %v2797
    %3829 = vmatmul.bf16.gmra.mxu0 %v1506
    %v3830 = vpop.f32.mrf.mxu0
    %v3831 = vadd.f32 0.0, %v3830
    %v3832 = vpop.f32.mrf.mxu0
    %3833 = vdwg.mxu0
    %3834 = vmatpush.bf16.msra.mxu0 %v2917
    %3835 = vmatpush.bf16.msra.mxu0 %v2909
    %3836 = vmatpush.bf16.msra.mxu0 %v2901
    %3837 = vmatpush.bf16.msra.mxu0 %v2893
    %3838 = vmatpush.bf16.msra.mxu0 %v2885
    %3839 = vmatpush.bf16.msra.mxu0 %v2877
    %3840 = vmatpush.bf16.msra.mxu0 %v2869
    %3841 = vmatpush.bf16.msra.mxu0 %v2861
    %3842 = vmatmul.bf16.gmra.mxu0 %v1507
    %v3843 = vpop.f32.mrf.mxu0
    %v3844 = vadd.f32 %v3831, %v3843
    %v3845 = vpop.f32.mrf.mxu0
    %3846 = vdwg.mxu0
    %3847 = vmatpush.bf16.msra.mxu0 %v2981
    %3848 = vmatpush.bf16.msra.mxu0 %v2973
    %3849 = vmatpush.bf16.msra.mxu0 %v2965
    %3850 = vmatpush.bf16.msra.mxu0 %v2957
    %3851 = vmatpush.bf16.msra.mxu0 %v2949
    %3852 = vmatpush.bf16.msra.mxu0 %v2941
    %3853 = vmatpush.bf16.msra.mxu0 %v2933
    %3854 = vmatpush.bf16.msra.mxu0 %v2925
    %3855 = vmatmul.bf16.gmra.mxu0 %v1508
    %v3856 = vpop.f32.mrf.mxu0
    %v3857 = vadd.f32 %v3844, %v3856
    %v3858 = vpop.f32.mrf.mxu0
    %3859 = vdwg.mxu0
    %3860 = vmatpush.bf16.msra.mxu0 %v3045
    %3861 = vmatpush.bf16.msra.mxu0 %v3037
    %3862 = vmatpush.bf16.msra.mxu0 %v3029
    %3863 = vmatpush.bf16.msra.mxu0 %v3021
    %3864 = vmatpush.bf16.msra.mxu0 %v3013
    %3865 = vmatpush.bf16.msra.mxu0 %v3005
    %3866 = vmatpush.bf16.msra.mxu0 %v2997
    %3867 = vmatpush.bf16.msra.mxu0 %v2989
    %3868 = vmatmul.bf16.gmra.mxu0 %v1509
    %v3869 = vpop.f32.mrf.mxu0
    %v3870 = vadd.f32 %v3857, %v3869
    %v3871 = vpop.f32.mrf.mxu0
    %3872 = vdwg.mxu0
    %3873 = vmatpush.bf16.msra.mxu0 %v3109
    %3874 = vmatpush.bf16.msra.mxu0 %v3101
    %3875 = vmatpush.bf16.msra.mxu0 %v3093
    %3876 = vmatpush.bf16.msra.mxu0 %v3085
    %3877 = vmatpush.bf16.msra.mxu0 %v3077
    %3878 = vmatpush.bf16.msra.mxu0 %v3069
    %3879 = vmatpush.bf16.msra.mxu0 %v3061
    %3880 = vmatpush.bf16.msra.mxu0 %v3053
    %3881 = vmatmul.bf16.gmra.mxu0 %v1510
    %v3882 = vpop.f32.mrf.mxu0
    %v3883 = vadd.f32 %v3870, %v3882
    %v3884 = vpop.f32.mrf.mxu0
    %3885 = vdwg.mxu0
    %3886 = vmatpush.bf16.msra.mxu0 %v2854
    %3887 = vmatpush.bf16.msra.mxu0 %v2846
    %3888 = vmatpush.bf16.msra.mxu0 %v2838
    %3889 = vmatpush.bf16.msra.mxu0 %v2830
    %3890 = vmatpush.bf16.msra.mxu0 %v2822
    %3891 = vmatpush.bf16.msra.mxu0 %v2814
    %3892 = vmatpush.bf16.msra.mxu0 %v2806
    %3893 = vmatpush.bf16.msra.mxu0 %v2798
    %3894 = vmatmul.bf16.gmra.mxu0 %v1506
    %v3895 = vpop.f32.mrf.mxu0
    %v3896 = vadd.f32 0.0, %v3895
    %v3897 = vpop.f32.mrf.mxu0
    %3898 = vdwg.mxu0
    %3899 = vmatpush.bf16.msra.mxu0 %v2918
    %3900 = vmatpush.bf16.msra.mxu0 %v2910
    %3901 = vmatpush.bf16.msra.mxu0 %v2902
    %3902 = vmatpush.bf16.msra.mxu0 %v2894
    %3903 = vmatpush.bf16.msra.mxu0 %v2886
    %3904 = vmatpush.bf16.msra.mxu0 %v2878
    %3905 = vmatpush.bf16.msra.mxu0 %v2870
    %3906 = vmatpush.bf16.msra.mxu0 %v2862
    %3907 = vmatmul.bf16.gmra.mxu0 %v1507
    %v3908 = vpop.f32.mrf.mxu0
    %v3909 = vadd.f32 %v3896, %v3908
    %v3910 = vpop.f32.mrf.mxu0
    %3911 = vdwg.mxu0
    %3912 = vmatpush.bf16.msra.mxu0 %v2982
    %3913 = vmatpush.bf16.msra.mxu0 %v2974
    %3914 = vmatpush.bf16.msra.mxu0 %v2966
    %3915 = vmatpush.bf16.msra.mxu0 %v2958
    %3916 = vmatpush.bf16.msra.mxu0 %v2950
    %3917 = vmatpush.bf16.msra.mxu0 %v2942
    %3918 = vmatpush.bf16.msra.mxu0 %v2934
    %3919 = vmatpush.bf16.msra.mxu0 %v2926
    %3920 = vmatmul.bf16.gmra.mxu0 %v1508
    %v3921 = vpop.f32.mrf.mxu0
    %v3922 = vadd.f32 %v3909, %v3921
    %v3923 = vpop.f32.mrf.mxu0
    %3924 = vdwg.mxu0
    %3925 = vmatpush.bf16.msra.mxu0 %v3046
    %3926 = vmatpush.bf16.msra.mxu0 %v3038
    %3927 = vmatpush.bf16.msra.mxu0 %v3030
    %3928 = vmatpush.bf16.msra.mxu0 %v3022
    %3929 = vmatpush.bf16.msra.mxu0 %v3014
    %3930 = vmatpush.bf16.msra.mxu0 %v3006
    %3931 = vmatpush.bf16.msra.mxu0 %v2998
    %3932 = vmatpush.bf16.msra.mxu0 %v2990
    %3933 = vmatmul.bf16.gmra.mxu0 %v1509
    %v3934 = vpop.f32.mrf.mxu0
    %v3935 = vadd.f32 %v3922, %v3934
    %v3936 = vpop.f32.mrf.mxu0
    %3937 = vdwg.mxu0
    %3938 = vmatpush.bf16.msra.mxu0 %v3110
    %3939 = vmatpush.bf16.msra.mxu0 %v3102
    %3940 = vmatpush.bf16.msra.mxu0 %v3094
    %3941 = vmatpush.bf16.msra.mxu0 %v3086
    %3942 = vmatpush.bf16.msra.mxu0 %v3078
    %3943 = vmatpush.bf16.msra.mxu0 %v3070
    %3944 = vmatpush.bf16.msra.mxu0 %v3062
    %3945 = vmatpush.bf16.msra.mxu0 %v3054
    %3946 = vmatmul.bf16.gmra.mxu0 %v1510
    %v3947 = vpop.f32.mrf.mxu0
    %v3948 = vadd.f32 %v3935, %v3947
    %v3949 = vpop.f32.mrf.mxu0
    %3950 = vdwg.mxu0
    %v3951 = vmax.f32 %v3493, %v3623
    %v3952 = vmax.f32 %v3558, %v3688
    %v3953 = vmax.f32 %v3753, %v3883
    %v3954 = vmax.f32 %v3818, %v3948
    %v3955 = vmax.f32 %v3951, %v3953
    %v3956 = vmax.f32 %v3952, %v3954
    %v3957 = vld [vmem:[#allocation8] sm:$0x3]
    %v3959 = vperm.slane %v3957, 0
    %v3960 = vperm.slane %v3957, 1
    %v3963 = vadd.f32 %v3955, %v3959
    %v3964 = vadd.f32 %v3956, %v3960
    %s3965 = sld [smem:[#allocation22 + $0x1]]
    %vm3966 = vcmp.ge.f32.partialorder %v3963, 0.0
    %vm3967 = vcmp.ge.f32.partialorder %v3964, 0.0
    %v3968 = vstv %s3965
    %v3969 = vmul.f32 %v3968, %v3963
    %v3970 = vmul.f32 %v3968, %v3964
    %v3971 = vsel %vm3966, %v3963, %v3969
    %v3972 = vsel %vm3967, %v3964, %v3970
    %v3973 = vpack.c.bf16 %v3971, %v3971
    %v3974 = vpack.c.bf16 %v3972, %v3972
    %v3975 = vld [vmem:[#allocation10] sm:$0xff]
    %v3976 = vld [vmem:[#allocation10 + $0x8] sm:$0xff]
    %v3977 = vld [vmem:[#allocation10 + $0x10] sm:$0xff]
    %v3978 = vld [vmem:[#allocation10 + $0x18] sm:$0xff]
    %v3979 = vld [vmem:[#allocation10 + $0x20] sm:$0xff]
    %v3980 = vld [vmem:[#allocation10 + $0x28] sm:$0xff]
    %v3981 = vld [vmem:[#allocation10 + $0x30] sm:$0xff]
    %v3982 = vld [vmem:[#allocation10 + $0x38] sm:$0xff]
    %v3983 = vld [vmem:[#allocation10 + $0x40] sm:$0xff]
    %v3984 = vld [vmem:[#allocation10 + $0x48] sm:$0xff]
    %v3985 = vld [vmem:[#allocation10 + $0x50] sm:$0xff]
    %v3986 = vld [vmem:[#allocation10 + $0x58] sm:$0xff]
    %v3987 = vld [vmem:[#allocation10 + $0x60] sm:$0xff]
    %v3988 = vld [vmem:[#allocation10 + $0x68] sm:$0xff]
    %v3989 = vld [vmem:[#allocation10 + $0x70] sm:$0xff]
    %v3990 = vld [vmem:[#allocation10 + $0x78] sm:$0xff]
    %v3991 = vld [vmem:[#allocation10 + $0x80] sm:$0xff]
    %v3992 = vld [vmem:[#allocation10 + $0x88] sm:$0xff]
    %v3993 = vld [vmem:[#allocation10 + $0x90] sm:$0xff]
    %v3994 = vld [vmem:[#allocation10 + $0x98] sm:$0xff]
    %v3995 = vld [vmem:[#allocation10 + $0xa0] sm:$0xff]
    %v3996 = vld [vmem:[#allocation10 + $0xa8] sm:$0xff]
    %v3997 = vld [vmem:[#allocation10 + $0xb0] sm:$0xff]
    %v3998 = vld [vmem:[#allocation10 + $0xb8] sm:$0xff]
    %v3999 = vld [vmem:[#allocation10 + $0xc0] sm:$0xff]
    %v4000 = vld [vmem:[#allocation10 + $0xc8] sm:$0xff]
    %v4001 = vld [vmem:[#allocation10 + $0xd0] sm:$0xff]
    %v4002 = vld [vmem:[#allocation10 + $0xd8] sm:$0xff]
    %v4003 = vld [vmem:[#allocation10 + $0xe0] sm:$0xff]
    %v4004 = vld [vmem:[#allocation10 + $0xe8] sm:$0xff]
    %v4005 = vld [vmem:[#allocation10 + $0xf0] sm:$0xff]
    %v4006 = vld [vmem:[#allocation10 + $0xf8] sm:$0xff]
    %v4007 = vld [vmem:[#allocation10 + $0x100] sm:$0xff]
    %v4008 = vld [vmem:[#allocation10 + $0x108] sm:$0xff]
    %v4009 = vld [vmem:[#allocation10 + $0x110] sm:$0xff]
    %v4010 = vld [vmem:[#allocation10 + $0x118] sm:$0xff]
    %v4011 = vld [vmem:[#allocation10 + $0x120] sm:$0xff]
    %v4012 = vld [vmem:[#allocation10 + $0x128] sm:$0xff]
    %v4013 = vld [vmem:[#allocation10 + $0x130] sm:$0xff]
    %v4014 = vld [vmem:[#allocation10 + $0x138] sm:$0xff]
    %v4015 = vld [vmem:[#allocation10 + $0x140] sm:$0xff]
    %v4016 = vld [vmem:[#allocation10 + $0x148] sm:$0xff]
    %v4017 = vld [vmem:[#allocation10 + $0x150] sm:$0xff]
    %v4018 = vld [vmem:[#allocation10 + $0x158] sm:$0xff]
    %v4019 = vld [vmem:[#allocation10 + $0x160] sm:$0xff]
    %v4020 = vld [vmem:[#allocation10 + $0x168] sm:$0xff]
    %v4021 = vld [vmem:[#allocation10 + $0x170] sm:$0xff]
    %v4022 = vld [vmem:[#allocation10 + $0x178] sm:$0xff]
    %v4023 = vld [vmem:[#allocation10 + $0x180] sm:$0xff]
    %v4024 = vld [vmem:[#allocation10 + $0x188] sm:$0xff]
    %v4025 = vld [vmem:[#allocation10 + $0x190] sm:$0xff]
    %v4026 = vld [vmem:[#allocation10 + $0x198] sm:$0xff]
    %v4027 = vld [vmem:[#allocation10 + $0x1a0] sm:$0xff]
    %v4028 = vld [vmem:[#allocation10 + $0x1a8] sm:$0xff]
    %v4029 = vld [vmem:[#allocation10 + $0x1b0] sm:$0xff]
    %v4030 = vld [vmem:[#allocation10 + $0x1b8] sm:$0xff]
    %v4031 = vld [vmem:[#allocation10 + $0x1c0] sm:$0xff]
    %v4032 = vld [vmem:[#allocation10 + $0x1c8] sm:$0xff]
    %v4033 = vld [vmem:[#allocation10 + $0x1d0] sm:$0xff]
    %v4034 = vld [vmem:[#allocation10 + $0x1d8] sm:$0xff]
    %v4035 = vld [vmem:[#allocation10 + $0x1e0] sm:$0xff]
    %v4036 = vld [vmem:[#allocation10 + $0x1e8] sm:$0xff]
    %v4037 = vld [vmem:[#allocation10 + $0x1f0] sm:$0xff]
    %v4038 = vld [vmem:[#allocation10 + $0x1f8] sm:$0xff]
    %v4039 = vld [vmem:[#allocation11] sm:$0xf]
    %v4041 = vperm.slane %v4039, 0
    %v4042 = vperm.slane %v4039, 1
    %v4043 = vperm.slane %v4039, 2
    %v4044 = vperm.slane %v4039, 3
    %v4113 = vunpack.c.l.b16 %v3975
    %v4114 = vunpack.c.h.b16 %v3975
    %v4115 = vunpack.c.l.b16 %v3976
    %v4116 = vunpack.c.h.b16 %v3976
    %v4117 = vunpack.c.l.b16 %v3977
    %v4118 = vunpack.c.h.b16 %v3977
    %v4119 = vunpack.c.l.b16 %v3978
    %v4120 = vunpack.c.h.b16 %v3978
    %v4121 = vunpack.c.l.b16 %v3979
    %v4122 = vunpack.c.h.b16 %v3979
    %v4123 = vunpack.c.l.b16 %v3980
    %v4124 = vunpack.c.h.b16 %v3980
    %v4125 = vunpack.c.l.b16 %v3981
    %v4126 = vunpack.c.h.b16 %v3981
    %v4127 = vunpack.c.l.b16 %v3982
    %v4128 = vunpack.c.h.b16 %v3982
    %v4129 = vunpack.c.l.b16 %v3983
    %v4130 = vunpack.c.h.b16 %v3983
    %v4131 = vunpack.c.l.b16 %v3984
    %v4132 = vunpack.c.h.b16 %v3984
    %v4133 = vunpack.c.l.b16 %v3985
    %v4134 = vunpack.c.h.b16 %v3985
    %v4135 = vunpack.c.l.b16 %v3986
    %v4136 = vunpack.c.h.b16 %v3986
    %v4137 = vunpack.c.l.b16 %v3987
    %v4138 = vunpack.c.h.b16 %v3987
    %v4139 = vunpack.c.l.b16 %v3988
    %v4140 = vunpack.c.h.b16 %v3988
    %v4141 = vunpack.c.l.b16 %v3989
    %v4142 = vunpack.c.h.b16 %v3989
    %v4143 = vunpack.c.l.b16 %v3990
    %v4144 = vunpack.c.h.b16 %v3990
    %v4145 = vunpack.c.l.b16 %v3991
    %v4146 = vunpack.c.h.b16 %v3991
    %v4147 = vunpack.c.l.b16 %v3992
    %v4148 = vunpack.c.h.b16 %v3992
    %v4149 = vunpack.c.l.b16 %v3993
    %v4150 = vunpack.c.h.b16 %v3993
    %v4151 = vunpack.c.l.b16 %v3994
    %v4152 = vunpack.c.h.b16 %v3994
    %v4153 = vunpack.c.l.b16 %v3995
    %v4154 = vunpack.c.h.b16 %v3995
    %v4155 = vunpack.c.l.b16 %v3996
    %v4156 = vunpack.c.h.b16 %v3996
    %v4157 = vunpack.c.l.b16 %v3997
    %v4158 = vunpack.c.h.b16 %v3997
    %v4159 = vunpack.c.l.b16 %v3998
    %v4160 = vunpack.c.h.b16 %v3998
    %v4161 = vunpack.c.l.b16 %v3999
    %v4162 = vunpack.c.h.b16 %v3999
    %v4163 = vunpack.c.l.b16 %v4000
    %v4164 = vunpack.c.h.b16 %v4000
    %v4165 = vunpack.c.l.b16 %v4001
    %v4166 = vunpack.c.h.b16 %v4001
    %v4167 = vunpack.c.l.b16 %v4002
    %v4168 = vunpack.c.h.b16 %v4002
    %v4169 = vunpack.c.l.b16 %v4003
    %v4170 = vunpack.c.h.b16 %v4003
    %v4171 = vunpack.c.l.b16 %v4004
    %v4172 = vunpack.c.h.b16 %v4004
    %v4173 = vunpack.c.l.b16 %v4005
    %v4174 = vunpack.c.h.b16 %v4005
    %v4175 = vunpack.c.l.b16 %v4006
    %v4176 = vunpack.c.h.b16 %v4006
    %v4177 = vunpack.c.l.b16 %v4007
    %v4178 = vunpack.c.h.b16 %v4007
    %v4179 = vunpack.c.l.b16 %v4008
    %v4180 = vunpack.c.h.b16 %v4008
    %v4181 = vunpack.c.l.b16 %v4009
    %v4182 = vunpack.c.h.b16 %v4009
    %v4183 = vunpack.c.l.b16 %v4010
    %v4184 = vunpack.c.h.b16 %v4010
    %v4185 = vunpack.c.l.b16 %v4011
    %v4186 = vunpack.c.h.b16 %v4011
    %v4187 = vunpack.c.l.b16 %v4012
    %v4188 = vunpack.c.h.b16 %v4012
    %v4189 = vunpack.c.l.b16 %v4013
    %v4190 = vunpack.c.h.b16 %v4013
    %v4191 = vunpack.c.l.b16 %v4014
    %v4192 = vunpack.c.h.b16 %v4014
    %v4193 = vunpack.c.l.b16 %v4015
    %v4194 = vunpack.c.h.b16 %v4015
    %v4195 = vunpack.c.l.b16 %v4016
    %v4196 = vunpack.c.h.b16 %v4016
    %v4197 = vunpack.c.l.b16 %v4017
    %v4198 = vunpack.c.h.b16 %v4017
    %v4199 = vunpack.c.l.b16 %v4018
    %v4200 = vunpack.c.h.b16 %v4018
    %v4201 = vunpack.c.l.b16 %v4019
    %v4202 = vunpack.c.h.b16 %v4019
    %v4203 = vunpack.c.l.b16 %v4020
    %v4204 = vunpack.c.h.b16 %v4020
    %v4205 = vunpack.c.l.b16 %v4021
    %v4206 = vunpack.c.h.b16 %v4021
    %v4207 = vunpack.c.l.b16 %v4022
    %v4208 = vunpack.c.h.b16 %v4022
    %v4209 = vunpack.c.l.b16 %v4023
    %v4210 = vunpack.c.h.b16 %v4023
    %v4211 = vunpack.c.l.b16 %v4024
    %v4212 = vunpack.c.h.b16 %v4024
    %v4213 = vunpack.c.l.b16 %v4025
    %v4214 = vunpack.c.h.b16 %v4025
    %v4215 = vunpack.c.l.b16 %v4026
    %v4216 = vunpack.c.h.b16 %v4026
    %v4217 = vunpack.c.l.b16 %v4027
    %v4218 = vunpack.c.h.b16 %v4027
    %v4219 = vunpack.c.l.b16 %v4028
    %v4220 = vunpack.c.h.b16 %v4028
    %v4221 = vunpack.c.l.b16 %v4029
    %v4222 = vunpack.c.h.b16 %v4029
    %v4223 = vunpack.c.l.b16 %v4030
    %v4224 = vunpack.c.h.b16 %v4030
    %v4225 = vunpack.c.l.b16 %v4031
    %v4226 = vunpack.c.h.b16 %v4031
    %v4227 = vunpack.c.l.b16 %v4032
    %v4228 = vunpack.c.h.b16 %v4032
    %v4229 = vunpack.c.l.b16 %v4033
    %v4230 = vunpack.c.h.b16 %v4033
    %v4231 = vunpack.c.l.b16 %v4034
    %v4232 = vunpack.c.h.b16 %v4034
    %v4233 = vunpack.c.l.b16 %v4035
    %v4234 = vunpack.c.h.b16 %v4035
    %v4235 = vunpack.c.l.b16 %v4036
    %v4236 = vunpack.c.h.b16 %v4036
    %v4237 = vunpack.c.l.b16 %v4037
    %v4238 = vunpack.c.h.b16 %v4037
    %v4239 = vunpack.c.l.b16 %v4038
    %v4240 = vunpack.c.h.b16 %v4038
    %v4241 = vpack.c.b16 %v4117, %v4113
    %v4242 = vpack.c.b16 %v4118, %v4114
    %v4243 = vpack.c.b16 %v4119, %v4115
    %v4244 = vpack.c.b16 %v4120, %v4116
    %v4245 = vpack.c.b16 %v4125, %v4121
    %v4246 = vpack.c.b16 %v4126, %v4122
    %v4247 = vpack.c.b16 %v4127, %v4123
    %v4248 = vpack.c.b16 %v4128, %v4124
    %v4249 = vpack.c.b16 %v4133, %v4129
    %v4250 = vpack.c.b16 %v4134, %v4130
    %v4251 = vpack.c.b16 %v4135, %v4131
    %v4252 = vpack.c.b16 %v4136, %v4132
    %v4253 = vpack.c.b16 %v4141, %v4137
    %v4254 = vpack.c.b16 %v4142, %v4138
    %v4255 = vpack.c.b16 %v4143, %v4139
    %v4256 = vpack.c.b16 %v4144, %v4140
    %v4257 = vpack.c.b16 %v4149, %v4145
    %v4258 = vpack.c.b16 %v4150, %v4146
    %v4259 = vpack.c.b16 %v4151, %v4147
    %v4260 = vpack.c.b16 %v4152, %v4148
    %v4261 = vpack.c.b16 %v4157, %v4153
    %v4262 = vpack.c.b16 %v4158, %v4154
    %v4263 = vpack.c.b16 %v4159, %v4155
    %v4264 = vpack.c.b16 %v4160, %v4156
    %v4265 = vpack.c.b16 %v4165, %v4161
    %v4266 = vpack.c.b16 %v4166, %v4162
    %v4267 = vpack.c.b16 %v4167, %v4163
    %v4268 = vpack.c.b16 %v4168, %v4164
    %v4269 = vpack.c.b16 %v4173, %v4169
    %v4270 = vpack.c.b16 %v4174, %v4170
    %v4271 = vpack.c.b16 %v4175, %v4171
    %v4272 = vpack.c.b16 %v4176, %v4172
    %v4273 = vpack.c.b16 %v4181, %v4177
    %v4274 = vpack.c.b16 %v4182, %v4178
    %v4275 = vpack.c.b16 %v4183, %v4179
    %v4276 = vpack.c.b16 %v4184, %v4180
    %v4277 = vpack.c.b16 %v4189, %v4185
    %v4278 = vpack.c.b16 %v4190, %v4186
    %v4279 = vpack.c.b16 %v4191, %v4187
    %v4280 = vpack.c.b16 %v4192, %v4188
    %v4281 = vpack.c.b16 %v4197, %v4193
    %v4282 = vpack.c.b16 %v4198, %v4194
    %v4283 = vpack.c.b16 %v4199, %v4195
    %v4284 = vpack.c.b16 %v4200, %v4196
    %v4285 = vpack.c.b16 %v4205, %v4201
    %v4286 = vpack.c.b16 %v4206, %v4202
    %v4287 = vpack.c.b16 %v4207, %v4203
    %v4288 = vpack.c.b16 %v4208, %v4204
    %v4289 = vpack.c.b16 %v4213, %v4209
    %v4290 = vpack.c.b16 %v4214, %v4210
    %v4291 = vpack.c.b16 %v4215, %v4211
    %v4292 = vpack.c.b16 %v4216, %v4212
    %v4293 = vpack.c.b16 %v4221, %v4217
    %v4294 = vpack.c.b16 %v4222, %v4218
    %v4295 = vpack.c.b16 %v4223, %v4219
    %v4296 = vpack.c.b16 %v4224, %v4220
    %v4297 = vpack.c.b16 %v4229, %v4225
    %v4298 = vpack.c.b16 %v4230, %v4226
    %v4299 = vpack.c.b16 %v4231, %v4227
    %v4300 = vpack.c.b16 %v4232, %v4228
    %v4301 = vpack.c.b16 %v4237, %v4233
    %v4302 = vpack.c.b16 %v4238, %v4234
    %v4303 = vpack.c.b16 %v4239, %v4235
    %v4304 = vpack.c.b16 %v4240, %v4236
    %4369 = vmatpush.bf16.msra.mxu0 %v4269
    %4370 = vmatpush.bf16.msra.mxu0 %v4265
    %4371 = vmatpush.bf16.msra.mxu0 %v4261
    %4372 = vmatpush.bf16.msra.mxu0 %v4257
    %4373 = vmatpush.bf16.msra.mxu0 %v4253
    %4374 = vmatpush.bf16.msra.mxu0 %v4249
    %4375 = vmatpush.bf16.msra.mxu0 %v4245
    %4376 = vmatpush.bf16.msra.mxu0 %v4241
    %4377 = vmatmul.bf16.gmra.mxu0 %v3973
    %v4378 = vpop.f32.mrf.mxu0
    %v4379 = vadd.f32 %v4041, %v4378
    %v4380 = vpop.f32.mrf.mxu0
    %4381 = vdwg.mxu0
    %4382 = vmatpush.bf16.msra.mxu0 %v4301
    %4383 = vmatpush.bf16.msra.mxu0 %v4297
    %4384 = vmatpush.bf16.msra.mxu0 %v4293
    %4385 = vmatpush.bf16.msra.mxu0 %v4289
    %4386 = vmatpush.bf16.msra.mxu0 %v4285
    %4387 = vmatpush.bf16.msra.mxu0 %v4281
    %4388 = vmatpush.bf16.msra.mxu0 %v4277
    %4389 = vmatpush.bf16.msra.mxu0 %v4273
    %4390 = vmatmul.bf16.gmra.mxu0 %v3974
    %v4391 = vpop.f32.mrf.mxu0
    %v4392 = vadd.f32 %v4379, %v4391
    %v4393 = vpop.f32.mrf.mxu0
    %4394 = vdwg.mxu0
    %4395 = vmatpush.bf16.msra.mxu0 %v4270
    %4396 = vmatpush.bf16.msra.mxu0 %v4266
    %4397 = vmatpush.bf16.msra.mxu0 %v4262
    %4398 = vmatpush.bf16.msra.mxu0 %v4258
    %4399 = vmatpush.bf16.msra.mxu0 %v4254
    %4400 = vmatpush.bf16.msra.mxu0 %v4250
    %4401 = vmatpush.bf16.msra.mxu0 %v4246
    %4402 = vmatpush.bf16.msra.mxu0 %v4242
    %4403 = vmatmul.bf16.gmra.mxu0 %v3973
    %v4404 = vpop.f32.mrf.mxu0
    %v4405 = vadd.f32 %v4042, %v4404
    %v4406 = vpop.f32.mrf.mxu0
    %4407 = vdwg.mxu0
    %4408 = vmatpush.bf16.msra.mxu0 %v4302
    %4409 = vmatpush.bf16.msra.mxu0 %v4298
    %4410 = vmatpush.bf16.msra.mxu0 %v4294
    %4411 = vmatpush.bf16.msra.mxu0 %v4290
    %4412 = vmatpush.bf16.msra.mxu0 %v4286
    %4413 = vmatpush.bf16.msra.mxu0 %v4282
    %4414 = vmatpush.bf16.msra.mxu0 %v4278
    %4415 = vmatpush.bf16.msra.mxu0 %v4274
    %4416 = vmatmul.bf16.gmra.mxu0 %v3974
    %v4417 = vpop.f32.mrf.mxu0
    %v4418 = vadd.f32 %v4405, %v4417
    %v4419 = vpop.f32.mrf.mxu0
    %4420 = vdwg.mxu0
    %4421 = vmatpush.bf16.msra.mxu0 %v4271
    %4422 = vmatpush.bf16.msra.mxu0 %v4267
    %4423 = vmatpush.bf16.msra.mxu0 %v4263
    %4424 = vmatpush.bf16.msra.mxu0 %v4259
    %4425 = vmatpush.bf16.msra.mxu0 %v4255
    %4426 = vmatpush.bf16.msra.mxu0 %v4251
    %4427 = vmatpush.bf16.msra.mxu0 %v4247
    %4428 = vmatpush.bf16.msra.mxu0 %v4243
    %4429 = vmatmul.bf16.gmra.mxu0 %v3973
    %v4430 = vpop.f32.mrf.mxu0
    %v4431 = vadd.f32 %v4043, %v4430
    %v4432 = vpop.f32.mrf.mxu0
    %4433 = vdwg.mxu0
    %4434 = vmatpush.bf16.msra.mxu0 %v4303
    %4435 = vmatpush.bf16.msra.mxu0 %v4299
    %4436 = vmatpush.bf16.msra.mxu0 %v4295
    %4437 = vmatpush.bf16.msra.mxu0 %v4291
    %4438 = vmatpush.bf16.msra.mxu0 %v4287
    %4439 = vmatpush.bf16.msra.mxu0 %v4283
    %4440 = vmatpush.bf16.msra.mxu0 %v4279
    %4441 = vmatpush.bf16.msra.mxu0 %v4275
    %4442 = vmatmul.bf16.gmra.mxu0 %v3974
    %v4443 = vpop.f32.mrf.mxu0
    %v4444 = vadd.f32 %v4431, %v4443
    %v4445 = vpop.f32.mrf.mxu0
    %4446 = vdwg.mxu0
    %4447 = vmatpush.bf16.msra.mxu0 %v4272
    %4448 = vmatpush.bf16.msra.mxu0 %v4268
    %4449 = vmatpush.bf16.msra.mxu0 %v4264
    %4450 = vmatpush.bf16.msra.mxu0 %v4260
    %4451 = vmatpush.bf16.msra.mxu0 %v4256
    %4452 = vmatpush.bf16.msra.mxu0 %v4252
    %4453 = vmatpush.bf16.msra.mxu0 %v4248
    %4454 = vmatpush.bf16.msra.mxu0 %v4244
    %4455 = vmatmul.bf16.gmra.mxu0 %v3973
    %v4456 = vpop.f32.mrf.mxu0
    %v4457 = vadd.f32 %v4044, %v4456
    %v4458 = vpop.f32.mrf.mxu0
    %4459 = vdwg.mxu0
    %4460 = vmatpush.bf16.msra.mxu0 %v4304
    %4461 = vmatpush.bf16.msra.mxu0 %v4300
    %4462 = vmatpush.bf16.msra.mxu0 %v4296
    %4463 = vmatpush.bf16.msra.mxu0 %v4292
    %4464 = vmatpush.bf16.msra.mxu0 %v4288
    %4465 = vmatpush.bf16.msra.mxu0 %v4284
    %4466 = vmatpush.bf16.msra.mxu0 %v4280
    %4467 = vmatpush.bf16.msra.mxu0 %v4276
    %4468 = vmatmul.bf16.gmra.mxu0 %v3974
    %v4469 = vpop.f32.mrf.mxu0
    %v4470 = vadd.f32 %v4457, %v4469
    %v4471 = vpop.f32.mrf.mxu0
    %4472 = vdwg.mxu0
    %s4473 = sld [smem:[#allocation22 + $0x2]]
    %vm4474 = vcmp.ge.f32.partialorder %v4392, 0.0
    %vm4475 = vcmp.ge.f32.partialorder %v4418, 0.0
    %vm4476 = vcmp.ge.f32.partialorder %v4444, 0.0
    %vm4477 = vcmp.ge.f32.partialorder %v4470, 0.0
    %v4478 = vstv %s4473
    %v4479 = vmul.f32 %v4478, %v4392
    %v4480 = vmul.f32 %v4478, %v4418
    %v4481 = vmul.f32 %v4478, %v4444
    %v4482 = vmul.f32 %v4478, %v4470
    %v4483 = vsel %vm4474, %v4392, %v4479
    %v4484 = vsel %vm4475, %v4418, %v4480
    %v4485 = vsel %vm4476, %v4444, %v4481
    %v4486 = vsel %vm4477, %v4470, %v4482
    %v4487 = vpack.c.bf16 %v4483, %v4483
    %v4488 = vpack.c.bf16 %v4484, %v4484
    %v4489 = vpack.c.bf16 %v4485, %v4485
    %v4490 = vpack.c.bf16 %v4486, %v4486
    %v4491 = vld [vmem:[#allocation13] sm:$0xff]
    %v4492 = vld [vmem:[#allocation13 + $0x8] sm:$0xff]
    %v4493 = vld [vmem:[#allocation13 + $0x10] sm:$0xff]
    %v4494 = vld [vmem:[#allocation13 + $0x18] sm:$0xff]
    %v4495 = vld [vmem:[#allocation13 + $0x20] sm:$0xff]
    %v4496 = vld [vmem:[#allocation13 + $0x28] sm:$0xff]
    %v4497 = vld [vmem:[#allocation13 + $0x30] sm:$0xff]
    %v4498 = vld [vmem:[#allocation13 + $0x38] sm:$0xff]
    %v4499 = vld [vmem:[#allocation13 + $0x40] sm:$0xff]
    %v4500 = vld [vmem:[#allocation13 + $0x48] sm:$0xff]
    %v4501 = vld [vmem:[#allocation13 + $0x50] sm:$0xff]
    %v4502 = vld [vmem:[#allocation13 + $0x58] sm:$0xff]
    %v4503 = vld [vmem:[#allocation13 + $0x60] sm:$0xff]
    %v4504 = vld [vmem:[#allocation13 + $0x68] sm:$0xff]
    %v4505 = vld [vmem:[#allocation13 + $0x70] sm:$0xff]
    %v4506 = vld [vmem:[#allocation13 + $0x78] sm:$0xff]
    %v4507 = vld [vmem:[#allocation13 + $0x80] sm:$0xff]
    %v4508 = vld [vmem:[#allocation13 + $0x88] sm:$0xff]
    %v4509 = vld [vmem:[#allocation13 + $0x90] sm:$0xff]
    %v4510 = vld [vmem:[#allocation13 + $0x98] sm:$0xff]
    %v4511 = vld [vmem:[#allocation13 + $0xa0] sm:$0xff]
    %v4512 = vld [vmem:[#allocation13 + $0xa8] sm:$0xff]
    %v4513 = vld [vmem:[#allocation13 + $0xb0] sm:$0xff]
    %v4514 = vld [vmem:[#allocation13 + $0xb8] sm:$0xff]
    %v4515 = vld [vmem:[#allocation13 + $0xc0] sm:$0xff]
    %v4516 = vld [vmem:[#allocation13 + $0xc8] sm:$0xff]
    %v4517 = vld [vmem:[#allocation13 + $0xd0] sm:$0xff]
    %v4518 = vld [vmem:[#allocation13 + $0xd8] sm:$0xff]
    %v4519 = vld [vmem:[#allocation13 + $0xe0] sm:$0xff]
    %v4520 = vld [vmem:[#allocation13 + $0xe8] sm:$0xff]
    %v4521 = vld [vmem:[#allocation13 + $0xf0] sm:$0xff]
    %v4522 = vld [vmem:[#allocation13 + $0xf8] sm:$0xff]
    %v4523 = vld [vmem:[#allocation13 + $0x100] sm:$0xff]
    %v4524 = vld [vmem:[#allocation13 + $0x108] sm:$0xff]
    %v4525 = vld [vmem:[#allocation13 + $0x110] sm:$0xff]
    %v4526 = vld [vmem:[#allocation13 + $0x118] sm:$0xff]
    %v4527 = vld [vmem:[#allocation13 + $0x120] sm:$0xff]
    %v4528 = vld [vmem:[#allocation13 + $0x128] sm:$0xff]
    %v4529 = vld [vmem:[#allocation13 + $0x130] sm:$0xff]
    %v4530 = vld [vmem:[#allocation13 + $0x138] sm:$0xff]
    %v4531 = vld [vmem:[#allocation13 + $0x140] sm:$0xff]
    %v4532 = vld [vmem:[#allocation13 + $0x148] sm:$0xff]
    %v4533 = vld [vmem:[#allocation13 + $0x150] sm:$0xff]
    %v4534 = vld [vmem:[#allocation13 + $0x158] sm:$0xff]
    %v4535 = vld [vmem:[#allocation13 + $0x160] sm:$0xff]
    %v4536 = vld [vmem:[#allocation13 + $0x168] sm:$0xff]
    %v4537 = vld [vmem:[#allocation13 + $0x170] sm:$0xff]
    %v4538 = vld [vmem:[#allocation13 + $0x178] sm:$0xff]
    %v4539 = vld [vmem:[#allocation13 + $0x180] sm:$0xff]
    %v4540 = vld [vmem:[#allocation13 + $0x188] sm:$0xff]
    %v4541 = vld [vmem:[#allocation13 + $0x190] sm:$0xff]
    %v4542 = vld [vmem:[#allocation13 + $0x198] sm:$0xff]
    %v4543 = vld [vmem:[#allocation13 + $0x1a0] sm:$0xff]
    %v4544 = vld [vmem:[#allocation13 + $0x1a8] sm:$0xff]
    %v4545 = vld [vmem:[#allocation13 + $0x1b0] sm:$0xff]
    %v4546 = vld [vmem:[#allocation13 + $0x1b8] sm:$0xff]
    %v4547 = vld [vmem:[#allocation13 + $0x1c0] sm:$0xff]
    %v4548 = vld [vmem:[#allocation13 + $0x1c8] sm:$0xff]
    %v4549 = vld [vmem:[#allocation13 + $0x1d0] sm:$0xff]
    %v4550 = vld [vmem:[#allocation13 + $0x1d8] sm:$0xff]
    %v4551 = vld [vmem:[#allocation13 + $0x1e0] sm:$0xff]
    %v4552 = vld [vmem:[#allocation13 + $0x1e8] sm:$0xff]
    %v4553 = vld [vmem:[#allocation13 + $0x1f0] sm:$0xff]
    %v4554 = vld [vmem:[#allocation13 + $0x1f8] sm:$0xff]
    %v4555 = vld [vmem:[#allocation14] sm:$0x3]
    %v4557 = vperm.slane %v4555, 0
    %v4558 = vperm.slane %v4555, 1
    %v4625 = vunpack.c.l.b16 %v4491
    %v4626 = vunpack.c.h.b16 %v4491
    %v4627 = vunpack.c.l.b16 %v4492
    %v4628 = vunpack.c.h.b16 %v4492
    %v4629 = vunpack.c.l.b16 %v4493
    %v4630 = vunpack.c.h.b16 %v4493
    %v4631 = vunpack.c.l.b16 %v4494
    %v4632 = vunpack.c.h.b16 %v4494
    %v4633 = vunpack.c.l.b16 %v4495
    %v4634 = vunpack.c.h.b16 %v4495
    %v4635 = vunpack.c.l.b16 %v4496
    %v4636 = vunpack.c.h.b16 %v4496
    %v4637 = vunpack.c.l.b16 %v4497
    %v4638 = vunpack.c.h.b16 %v4497
    %v4639 = vunpack.c.l.b16 %v4498
    %v4640 = vunpack.c.h.b16 %v4498
    %v4641 = vunpack.c.l.b16 %v4499
    %v4642 = vunpack.c.h.b16 %v4499
    %v4643 = vunpack.c.l.b16 %v4500
    %v4644 = vunpack.c.h.b16 %v4500
    %v4645 = vunpack.c.l.b16 %v4501
    %v4646 = vunpack.c.h.b16 %v4501
    %v4647 = vunpack.c.l.b16 %v4502
    %v4648 = vunpack.c.h.b16 %v4502
    %v4649 = vunpack.c.l.b16 %v4503
    %v4650 = vunpack.c.h.b16 %v4503
    %v4651 = vunpack.c.l.b16 %v4504
    %v4652 = vunpack.c.h.b16 %v4504
    %v4653 = vunpack.c.l.b16 %v4505
    %v4654 = vunpack.c.h.b16 %v4505
    %v4655 = vunpack.c.l.b16 %v4506
    %v4656 = vunpack.c.h.b16 %v4506
    %v4657 = vunpack.c.l.b16 %v4507
    %v4658 = vunpack.c.h.b16 %v4507
    %v4659 = vunpack.c.l.b16 %v4508
    %v4660 = vunpack.c.h.b16 %v4508
    %v4661 = vunpack.c.l.b16 %v4509
    %v4662 = vunpack.c.h.b16 %v4509
    %v4663 = vunpack.c.l.b16 %v4510
    %v4664 = vunpack.c.h.b16 %v4510
    %v4665 = vunpack.c.l.b16 %v4511
    %v4666 = vunpack.c.h.b16 %v4511
    %v4667 = vunpack.c.l.b16 %v4512
    %v4668 = vunpack.c.h.b16 %v4512
    %v4669 = vunpack.c.l.b16 %v4513
    %v4670 = vunpack.c.h.b16 %v4513
    %v4671 = vunpack.c.l.b16 %v4514
    %v4672 = vunpack.c.h.b16 %v4514
    %v4673 = vunpack.c.l.b16 %v4515
    %v4674 = vunpack.c.h.b16 %v4515
    %v4675 = vunpack.c.l.b16 %v4516
    %v4676 = vunpack.c.h.b16 %v4516
    %v4677 = vunpack.c.l.b16 %v4517
    %v4678 = vunpack.c.h.b16 %v4517
    %v4679 = vunpack.c.l.b16 %v4518
    %v4680 = vunpack.c.h.b16 %v4518
    %v4681 = vunpack.c.l.b16 %v4519
    %v4682 = vunpack.c.h.b16 %v4519
    %v4683 = vunpack.c.l.b16 %v4520
    %v4684 = vunpack.c.h.b16 %v4520
    %v4685 = vunpack.c.l.b16 %v4521
    %v4686 = vunpack.c.h.b16 %v4521
    %v4687 = vunpack.c.l.b16 %v4522
    %v4688 = vunpack.c.h.b16 %v4522
    %v4689 = vunpack.c.l.b16 %v4523
    %v4690 = vunpack.c.h.b16 %v4523
    %v4691 = vunpack.c.l.b16 %v4524
    %v4692 = vunpack.c.h.b16 %v4524
    %v4693 = vunpack.c.l.b16 %v4525
    %v4694 = vunpack.c.h.b16 %v4525
    %v4695 = vunpack.c.l.b16 %v4526
    %v4696 = vunpack.c.h.b16 %v4526
    %v4697 = vunpack.c.l.b16 %v4527
    %v4698 = vunpack.c.h.b16 %v4527
    %v4699 = vunpack.c.l.b16 %v4528
    %v4700 = vunpack.c.h.b16 %v4528
    %v4701 = vunpack.c.l.b16 %v4529
    %v4702 = vunpack.c.h.b16 %v4529
    %v4703 = vunpack.c.l.b16 %v4530
    %v4704 = vunpack.c.h.b16 %v4530
    %v4705 = vunpack.c.l.b16 %v4531
    %v4706 = vunpack.c.h.b16 %v4531
    %v4707 = vunpack.c.l.b16 %v4532
    %v4708 = vunpack.c.h.b16 %v4532
    %v4709 = vunpack.c.l.b16 %v4533
    %v4710 = vunpack.c.h.b16 %v4533
    %v4711 = vunpack.c.l.b16 %v4534
    %v4712 = vunpack.c.h.b16 %v4534
    %v4713 = vunpack.c.l.b16 %v4535
    %v4714 = vunpack.c.h.b16 %v4535
    %v4715 = vunpack.c.l.b16 %v4536
    %v4716 = vunpack.c.h.b16 %v4536
    %v4717 = vunpack.c.l.b16 %v4537
    %v4718 = vunpack.c.h.b16 %v4537
    %v4719 = vunpack.c.l.b16 %v4538
    %v4720 = vunpack.c.h.b16 %v4538
    %v4721 = vunpack.c.l.b16 %v4539
    %v4722 = vunpack.c.h.b16 %v4539
    %v4723 = vunpack.c.l.b16 %v4540
    %v4724 = vunpack.c.h.b16 %v4540
    %v4725 = vunpack.c.l.b16 %v4541
    %v4726 = vunpack.c.h.b16 %v4541
    %v4727 = vunpack.c.l.b16 %v4542
    %v4728 = vunpack.c.h.b16 %v4542
    %v4729 = vunpack.c.l.b16 %v4543
    %v4730 = vunpack.c.h.b16 %v4543
    %v4731 = vunpack.c.l.b16 %v4544
    %v4732 = vunpack.c.h.b16 %v4544
    %v4733 = vunpack.c.l.b16 %v4545
    %v4734 = vunpack.c.h.b16 %v4545
    %v4735 = vunpack.c.l.b16 %v4546
    %v4736 = vunpack.c.h.b16 %v4546
    %v4737 = vunpack.c.l.b16 %v4547
    %v4738 = vunpack.c.h.b16 %v4547
    %v4739 = vunpack.c.l.b16 %v4548
    %v4740 = vunpack.c.h.b16 %v4548
    %v4741 = vunpack.c.l.b16 %v4549
    %v4742 = vunpack.c.h.b16 %v4549
    %v4743 = vunpack.c.l.b16 %v4550
    %v4744 = vunpack.c.h.b16 %v4550
    %v4745 = vunpack.c.l.b16 %v4551
    %v4746 = vunpack.c.h.b16 %v4551
    %v4747 = vunpack.c.l.b16 %v4552
    %v4748 = vunpack.c.h.b16 %v4552
    %v4749 = vunpack.c.l.b16 %v4553
    %v4750 = vunpack.c.h.b16 %v4553
    %v4751 = vunpack.c.l.b16 %v4554
    %v4752 = vunpack.c.h.b16 %v4554
    %v4753 = vpack.c.b16 %v4627, %v4625
    %v4754 = vpack.c.b16 %v4628, %v4626
    %v4755 = vpack.c.b16 %v4631, %v4629
    %v4756 = vpack.c.b16 %v4632, %v4630
    %v4757 = vpack.c.b16 %v4635, %v4633
    %v4758 = vpack.c.b16 %v4636, %v4634
    %v4759 = vpack.c.b16 %v4639, %v4637
    %v4760 = vpack.c.b16 %v4640, %v4638
    %v4761 = vpack.c.b16 %v4643, %v4641
    %v4762 = vpack.c.b16 %v4644, %v4642
    %v4763 = vpack.c.b16 %v4647, %v4645
    %v4764 = vpack.c.b16 %v4648, %v4646
    %v4765 = vpack.c.b16 %v4651, %v4649
    %v4766 = vpack.c.b16 %v4652, %v4650
    %v4767 = vpack.c.b16 %v4655, %v4653
    %v4768 = vpack.c.b16 %v4656, %v4654
    %v4769 = vpack.c.b16 %v4659, %v4657
    %v4770 = vpack.c.b16 %v4660, %v4658
    %v4771 = vpack.c.b16 %v4663, %v4661
    %v4772 = vpack.c.b16 %v4664, %v4662
    %v4773 = vpack.c.b16 %v4667, %v4665
    %v4774 = vpack.c.b16 %v4668, %v4666
    %v4775 = vpack.c.b16 %v4671, %v4669
    %v4776 = vpack.c.b16 %v4672, %v4670
    %v4777 = vpack.c.b16 %v4675, %v4673
    %v4778 = vpack.c.b16 %v4676, %v4674
    %v4779 = vpack.c.b16 %v4679, %v4677
    %v4780 = vpack.c.b16 %v4680, %v4678
    %v4781 = vpack.c.b16 %v4683, %v4681
    %v4782 = vpack.c.b16 %v4684, %v4682
    %v4783 = vpack.c.b16 %v4687, %v4685
    %v4784 = vpack.c.b16 %v4688, %v4686
    %v4785 = vpack.c.b16 %v4691, %v4689
    %v4786 = vpack.c.b16 %v4692, %v4690
    %v4787 = vpack.c.b16 %v4695, %v4693
    %v4788 = vpack.c.b16 %v4696, %v4694
    %v4789 = vpack.c.b16 %v4699, %v4697
    %v4790 = vpack.c.b16 %v4700, %v4698
    %v4791 = vpack.c.b16 %v4703, %v4701
    %v4792 = vpack.c.b16 %v4704, %v4702
    %v4793 = vpack.c.b16 %v4707, %v4705
    %v4794 = vpack.c.b16 %v4708, %v4706
    %v4795 = vpack.c.b16 %v4711, %v4709
    %v4796 = vpack.c.b16 %v4712, %v4710
    %v4797 = vpack.c.b16 %v4715, %v4713
    %v4798 = vpack.c.b16 %v4716, %v4714
    %v4799 = vpack.c.b16 %v4719, %v4717
    %v4800 = vpack.c.b16 %v4720, %v4718
    %v4801 = vpack.c.b16 %v4723, %v4721
    %v4802 = vpack.c.b16 %v4724, %v4722
    %v4803 = vpack.c.b16 %v4727, %v4725
    %v4804 = vpack.c.b16 %v4728, %v4726
    %v4805 = vpack.c.b16 %v4731, %v4729
    %v4806 = vpack.c.b16 %v4732, %v4730
    %v4807 = vpack.c.b16 %v4735, %v4733
    %v4808 = vpack.c.b16 %v4736, %v4734
    %v4809 = vpack.c.b16 %v4739, %v4737
    %v4810 = vpack.c.b16 %v4740, %v4738
    %v4811 = vpack.c.b16 %v4743, %v4741
    %v4812 = vpack.c.b16 %v4744, %v4742
    %v4813 = vpack.c.b16 %v4747, %v4745
    %v4814 = vpack.c.b16 %v4748, %v4746
    %v4815 = vpack.c.b16 %v4751, %v4749
    %v4816 = vpack.c.b16 %v4752, %v4750
    %4881 = vmatpush.bf16.msra.mxu0 %v4767
    %4882 = vmatpush.bf16.msra.mxu0 %v4765
    %4883 = vmatpush.bf16.msra.mxu0 %v4763
    %4884 = vmatpush.bf16.msra.mxu0 %v4761
    %4885 = vmatpush.bf16.msra.mxu0 %v4759
    %4886 = vmatpush.bf16.msra.mxu0 %v4757
    %4887 = vmatpush.bf16.msra.mxu0 %v4755
    %4888 = vmatpush.bf16.msra.mxu0 %v4753
    %4889 = vmatmul.bf16.gmra.mxu0 %v4487
    %v4890 = vpop.f32.mrf.mxu0
    %v4891 = vadd.f32 %v4557, %v4890
    %v4892 = vpop.f32.mrf.mxu0
    %4893 = vdwg.mxu0
    %4894 = vmatpush.bf16.msra.mxu0 %v4783
    %4895 = vmatpush.bf16.msra.mxu0 %v4781
    %4896 = vmatpush.bf16.msra.mxu0 %v4779
    %4897 = vmatpush.bf16.msra.mxu0 %v4777
    %4898 = vmatpush.bf16.msra.mxu0 %v4775
    %4899 = vmatpush.bf16.msra.mxu0 %v4773
    %4900 = vmatpush.bf16.msra.mxu0 %v4771
    %4901 = vmatpush.bf16.msra.mxu0 %v4769
    %4902 = vmatmul.bf16.gmra.mxu0 %v4488
    %v4903 = vpop.f32.mrf.mxu0
    %v4904 = vadd.f32 %v4891, %v4903
    %v4905 = vpop.f32.mrf.mxu0
    %4906 = vdwg.mxu0
    %4907 = vmatpush.bf16.msra.mxu0 %v4799
    %4908 = vmatpush.bf16.msra.mxu0 %v4797
    %4909 = vmatpush.bf16.msra.mxu0 %v4795
    %4910 = vmatpush.bf16.msra.mxu0 %v4793
    %4911 = vmatpush.bf16.msra.mxu0 %v4791
    %4912 = vmatpush.bf16.msra.mxu0 %v4789
    %4913 = vmatpush.bf16.msra.mxu0 %v4787
    %4914 = vmatpush.bf16.msra.mxu0 %v4785
    %4915 = vmatmul.bf16.gmra.mxu0 %v4489
    %v4916 = vpop.f32.mrf.mxu0
    %v4917 = vadd.f32 %v4904, %v4916
    %v4918 = vpop.f32.mrf.mxu0
    %4919 = vdwg.mxu0
    %4920 = vmatpush.bf16.msra.mxu0 %v4815
    %4921 = vmatpush.bf16.msra.mxu0 %v4813
    %4922 = vmatpush.bf16.msra.mxu0 %v4811
    %4923 = vmatpush.bf16.msra.mxu0 %v4809
    %4924 = vmatpush.bf16.msra.mxu0 %v4807
    %4925 = vmatpush.bf16.msra.mxu0 %v4805
    %4926 = vmatpush.bf16.msra.mxu0 %v4803
    %4927 = vmatpush.bf16.msra.mxu0 %v4801
    %4928 = vmatmul.bf16.gmra.mxu0 %v4490
    %v4929 = vpop.f32.mrf.mxu0
    %v4930 = vadd.f32 %v4917, %v4929
    %v4931 = vpop.f32.mrf.mxu0
    %4932 = vdwg.mxu0
    %4933 = vmatpush.bf16.msra.mxu0 %v4768
    %4934 = vmatpush.bf16.msra.mxu0 %v4766
    %4935 = vmatpush.bf16.msra.mxu0 %v4764
    %4936 = vmatpush.bf16.msra.mxu0 %v4762
    %4937 = vmatpush.bf16.msra.mxu0 %v4760
    %4938 = vmatpush.bf16.msra.mxu0 %v4758
    %4939 = vmatpush.bf16.msra.mxu0 %v4756
    %4940 = vmatpush.bf16.msra.mxu0 %v4754
    %4941 = vmatmul.bf16.gmra.mxu0 %v4487
    %v4942 = vpop.f32.mrf.mxu0
    %v4943 = vadd.f32 %v4558, %v4942
    %v4944 = vpop.f32.mrf.mxu0
    %4945 = vdwg.mxu0
    %4946 = vmatpush.bf16.msra.mxu0 %v4784
    %4947 = vmatpush.bf16.msra.mxu0 %v4782
    %4948 = vmatpush.bf16.msra.mxu0 %v4780
    %4949 = vmatpush.bf16.msra.mxu0 %v4778
    %4950 = vmatpush.bf16.msra.mxu0 %v4776
    %4951 = vmatpush.bf16.msra.mxu0 %v4774
    %4952 = vmatpush.bf16.msra.mxu0 %v4772
    %4953 = vmatpush.bf16.msra.mxu0 %v4770
    %4954 = vmatmul.bf16.gmra.mxu0 %v4488
    %v4955 = vpop.f32.mrf.mxu0
    %v4956 = vadd.f32 %v4943, %v4955
    %v4957 = vpop.f32.mrf.mxu0
    %4958 = vdwg.mxu0
    %4959 = vmatpush.bf16.msra.mxu0 %v4800
    %4960 = vmatpush.bf16.msra.mxu0 %v4798
    %4961 = vmatpush.bf16.msra.mxu0 %v4796
    %4962 = vmatpush.bf16.msra.mxu0 %v4794
    %4963 = vmatpush.bf16.msra.mxu0 %v4792
    %4964 = vmatpush.bf16.msra.mxu0 %v4790
    %4965 = vmatpush.bf16.msra.mxu0 %v4788
    %4966 = vmatpush.bf16.msra.mxu0 %v4786
    %4967 = vmatmul.bf16.gmra.mxu0 %v4489
    %v4968 = vpop.f32.mrf.mxu0
    %v4969 = vadd.f32 %v4956, %v4968
    %v4970 = vpop.f32.mrf.mxu0
    %4971 = vdwg.mxu0
    %4972 = vmatpush.bf16.msra.mxu0 %v4816
    %4973 = vmatpush.bf16.msra.mxu0 %v4814
    %4974 = vmatpush.bf16.msra.mxu0 %v4812
    %4975 = vmatpush.bf16.msra.mxu0 %v4810
    %4976 = vmatpush.bf16.msra.mxu0 %v4808
    %4977 = vmatpush.bf16.msra.mxu0 %v4806
    %4978 = vmatpush.bf16.msra.mxu0 %v4804
    %4979 = vmatpush.bf16.msra.mxu0 %v4802
    %4980 = vmatmul.bf16.gmra.mxu0 %v4490
    %v4981 = vpop.f32.mrf.mxu0
    %v4982 = vadd.f32 %v4969, %v4981
    %v4983 = vpop.f32.mrf.mxu0
    %4984 = vdwg.mxu0
    %s4985 = sld [smem:[#allocation22 + $0x3]]
    %vm4986 = vcmp.ge.f32.partialorder %v4930, 0.0
    %vm4987 = vcmp.ge.f32.partialorder %v4982, 0.0
    %v4988 = vstv %s4985
    %v4989 = vmul.f32 %v4988, %v4930
    %v4990 = vmul.f32 %v4988, %v4982
    %v4991 = vsel %vm4986, %v4930, %v4989
    %v4992 = vsel %vm4987, %v4982, %v4990
    %v4993 = vpack.c.bf16 %v4991, %v4991
    %v4994 = vpack.c.bf16 %v4992, %v4992
    %v4995 = vld [vmem:[#allocation16] sm:$0xf]
    %v4996 = vld [vmem:[#allocation16 + $0x4] sm:$0xf]
    %v4997 = vld [vmem:[#allocation16 + $0x8] sm:$0xf]
    %v4998 = vld [vmem:[#allocation16 + $0xc] sm:$0xf]
    %v4999 = vld [vmem:[#allocation16 + $0x10] sm:$0xf]
    %v5000 = vld [vmem:[#allocation16 + $0x14] sm:$0xf]
    %v5001 = vld [vmem:[#allocation16 + $0x18] sm:$0xf]
    %v5002 = vld [vmem:[#allocation16 + $0x1c] sm:$0xf]
    %v5003 = vld [vmem:[#allocation16 + $0x20] sm:$0xf]
    %v5004 = vld [vmem:[#allocation16 + $0x24] sm:$0xf]
    %v5005 = vld [vmem:[#allocation16 + $0x28] sm:$0xf]
    %v5006 = vld [vmem:[#allocation16 + $0x2c] sm:$0xf]
    %v5007 = vld [vmem:[#allocation16 + $0x30] sm:$0xf]
    %v5008 = vld [vmem:[#allocation16 + $0x34] sm:$0xf]
    %v5009 = vld [vmem:[#allocation16 + $0x38] sm:$0xf]
    %v5010 = vld [vmem:[#allocation16 + $0x3c] sm:$0xf]
    %v5011 = vld [vmem:[#allocation16 + $0x40] sm:$0xf]
    %v5012 = vld [vmem:[#allocation16 + $0x44] sm:$0xf]
    %v5013 = vld [vmem:[#allocation16 + $0x48] sm:$0xf]
    %v5014 = vld [vmem:[#allocation16 + $0x4c] sm:$0xf]
    %v5015 = vld [vmem:[#allocation16 + $0x50] sm:$0xf]
    %v5016 = vld [vmem:[#allocation16 + $0x54] sm:$0xf]
    %v5017 = vld [vmem:[#allocation16 + $0x58] sm:$0xf]
    %v5018 = vld [vmem:[#allocation16 + $0x5c] sm:$0xf]
    %v5019 = vld [vmem:[#allocation16 + $0x60] sm:$0xf]
    %v5020 = vld [vmem:[#allocation16 + $0x64] sm:$0xf]
    %v5021 = vld [vmem:[#allocation16 + $0x68] sm:$0xf]
    %v5022 = vld [vmem:[#allocation16 + $0x6c] sm:$0xf]
    %v5023 = vld [vmem:[#allocation16 + $0x70] sm:$0xf]
    %v5024 = vld [vmem:[#allocation16 + $0x74] sm:$0xf]
    %v5025 = vld [vmem:[#allocation16 + $0x78] sm:$0xf]
    %v5026 = vld [vmem:[#allocation16 + $0x7c] sm:$0xf]
    %v5027 = vld [vmem:[#allocation17] sm:$0x1]
    %v5029 = vperm.slane %v5027, 0
    %v5063 = vunpack.c.l.b16 %v4995
    %v5064 = vunpack.c.l.b16 %v4996
    %v5065 = vunpack.c.l.b16 %v4997
    %v5066 = vunpack.c.l.b16 %v4998
    %v5067 = vunpack.c.l.b16 %v4999
    %v5068 = vunpack.c.l.b16 %v5000
    %v5069 = vunpack.c.l.b16 %v5001
    %v5070 = vunpack.c.l.b16 %v5002
    %v5071 = vunpack.c.l.b16 %v5003
    %v5072 = vunpack.c.l.b16 %v5004
    %v5073 = vunpack.c.l.b16 %v5005
    %v5074 = vunpack.c.l.b16 %v5006
    %v5075 = vunpack.c.l.b16 %v5007
    %v5076 = vunpack.c.l.b16 %v5008
    %v5077 = vunpack.c.l.b16 %v5009
    %v5078 = vunpack.c.l.b16 %v5010
    %v5079 = vunpack.c.l.b16 %v5011
    %v5080 = vunpack.c.l.b16 %v5012
    %v5081 = vunpack.c.l.b16 %v5013
    %v5082 = vunpack.c.l.b16 %v5014
    %v5083 = vunpack.c.l.b16 %v5015
    %v5084 = vunpack.c.l.b16 %v5016
    %v5085 = vunpack.c.l.b16 %v5017
    %v5086 = vunpack.c.l.b16 %v5018
    %v5087 = vunpack.c.l.b16 %v5019
    %v5088 = vunpack.c.l.b16 %v5020
    %v5089 = vunpack.c.l.b16 %v5021
    %v5090 = vunpack.c.l.b16 %v5022
    %v5091 = vunpack.c.l.b16 %v5023
    %v5092 = vunpack.c.l.b16 %v5024
    %v5093 = vunpack.c.l.b16 %v5025
    %v5094 = vunpack.c.l.b16 %v5026
    %v5095 = vpack.c.b16 %v5064, %v5063
    %v5096 = vpack.c.b16 %v5066, %v5065
    %v5097 = vpack.c.b16 %v5068, %v5067
    %v5098 = vpack.c.b16 %v5070, %v5069
    %v5099 = vpack.c.b16 %v5072, %v5071
    %v5100 = vpack.c.b16 %v5074, %v5073
    %v5101 = vpack.c.b16 %v5076, %v5075
    %v5102 = vpack.c.b16 %v5078, %v5077
    %v5103 = vpack.c.b16 %v5080, %v5079
    %v5104 = vpack.c.b16 %v5082, %v5081
    %v5105 = vpack.c.b16 %v5084, %v5083
    %v5106 = vpack.c.b16 %v5086, %v5085
    %v5107 = vpack.c.b16 %v5088, %v5087
    %v5108 = vpack.c.b16 %v5090, %v5089
    %v5109 = vpack.c.b16 %v5092, %v5091
    %v5110 = vpack.c.b16 %v5094, %v5093
    %5127 = vmatpush.bf16.msra.mxu0 %v5102
    %5128 = vmatpush.bf16.msra.mxu0 %v5101
    %5129 = vmatpush.bf16.msra.mxu0 %v5100
    %5130 = vmatpush.bf16.msra.mxu0 %v5099
    %5131 = vmatpush.bf16.msra.mxu0 %v5098
    %5132 = vmatpush.bf16.msra.mxu0 %v5097
    %5133 = vmatpush.bf16.msra.mxu0 %v5096
    %5134 = vmatpush.bf16.msra.mxu0 %v5095
    %5135 = vmatmul.bf16.gmra.mxu0 %v4993
    %v5136 = vpop.f32.mrf.mxu0
    %v5137 = vadd.f32 %v5029, %v5136
    %v5138 = vpop.f32.mrf.mxu0
    %5139 = vdwg.mxu0
    %5140 = vmatpush.bf16.msra.mxu0 %v5110
    %5141 = vmatpush.bf16.msra.mxu0 %v5109
    %5142 = vmatpush.bf16.msra.mxu0 %v5108
    %5143 = vmatpush.bf16.msra.mxu0 %v5107
    %5144 = vmatpush.bf16.msra.mxu0 %v5106
    %5145 = vmatpush.bf16.msra.mxu0 %v5105
    %5146 = vmatpush.bf16.msra.mxu0 %v5104
    %5147 = vmatpush.bf16.msra.mxu0 %v5103
    %5148 = vmatmul.bf16.gmra.mxu0 %v4994
    %v5149 = vpop.f32.mrf.mxu0
    %v5150 = vadd.f32 %v5137, %v5149
    %v5151 = vpop.f32.mrf.mxu0
    %5152 = vdwg.mxu0
    %s5153 = sld [smem:[#allocation22 + $0x4]]
    %vm5154 = vcmp.ge.f32.partialorder %v5150, 0.0
    %v5155 = vstv %s5153
    %v5156 = vmul.f32 %v5155, %v5150
    %v5157 = vsel %vm5154, %v5150, %v5156
    %v5158 = vpack.c.bf16 %v5157, %v5157
    %v5159 = vld [vmem:[#allocation19] sm:$0xf]
    %v5160 = vld [vmem:[#allocation19 + $0x4] sm:$0xf]
    %v5161 = vld [vmem:[#allocation19 + $0x8] sm:$0xf]
    %v5162 = vld [vmem:[#allocation19 + $0xc] sm:$0xf]
    %v5163 = vld [vmem:[#allocation19 + $0x10] sm:$0xf]
    %v5164 = vld [vmem:[#allocation19 + $0x14] sm:$0xf]
    %v5165 = vld [vmem:[#allocation19 + $0x18] sm:$0xf]
    %v5166 = vld [vmem:[#allocation19 + $0x1c] sm:$0xf]
    %v5167 = vld [vmem:[#allocation19 + $0x20] sm:$0xf]
    %v5168 = vld [vmem:[#allocation19 + $0x24] sm:$0xf]
    %v5169 = vld [vmem:[#allocation19 + $0x28] sm:$0xf]
    %v5170 = vld [vmem:[#allocation19 + $0x2c] sm:$0xf]
    %v5171 = vld [vmem:[#allocation19 + $0x30] sm:$0xf]
    %v5172 = vld [vmem:[#allocation19 + $0x34] sm:$0xf]
    %v5173 = vld [vmem:[#allocation19 + $0x38] sm:$0xf]
    %v5174 = vld [vmem:[#allocation19 + $0x3c] sm:$0xf]
    %v5175 = vld [vmem:[#allocation20] sm:$0x1]
    %v5177 = vperm.slane %v5175, 0
    %v5195 = vunpack.c.l.b16 %v5159
    %v5196 = vunpack.c.l.b16 %v5160
    %v5197 = vunpack.c.l.b16 %v5161
    %v5198 = vunpack.c.l.b16 %v5162
    %v5199 = vunpack.c.l.b16 %v5163
    %v5200 = vunpack.c.l.b16 %v5164
    %v5201 = vunpack.c.l.b16 %v5165
    %v5202 = vunpack.c.l.b16 %v5166
    %v5203 = vunpack.c.l.b16 %v5167
    %v5204 = vunpack.c.l.b16 %v5168
    %v5205 = vunpack.c.l.b16 %v5169
    %v5206 = vunpack.c.l.b16 %v5170
    %v5207 = vunpack.c.l.b16 %v5171
    %v5208 = vunpack.c.l.b16 %v5172
    %v5209 = vunpack.c.l.b16 %v5173
    %v5210 = vunpack.c.l.b16 %v5174
    %v5211 = vpack.c.b16 %v5196, %v5195
    %v5212 = vpack.c.b16 %v5198, %v5197
    %v5213 = vpack.c.b16 %v5200, %v5199
    %v5214 = vpack.c.b16 %v5202, %v5201
    %v5215 = vpack.c.b16 %v5204, %v5203
    %v5216 = vpack.c.b16 %v5206, %v5205
    %v5217 = vpack.c.b16 %v5208, %v5207
    %v5218 = vpack.c.b16 %v5210, %v5209
    %5227 = vmatpush.bf16.msra.mxu0 %v5218
    %5228 = vmatpush.bf16.msra.mxu0 %v5217
    %5229 = vmatpush.bf16.msra.mxu0 %v5216
    %5230 = vmatpush.bf16.msra.mxu0 %v5215
    %5231 = vmatpush.bf16.msra.mxu0 %v5214
    %5232 = vmatpush.bf16.msra.mxu0 %v5213
    %5233 = vmatpush.bf16.msra.mxu0 %v5212
    %5234 = vmatpush.bf16.msra.mxu0 %v5211
    %5235 = vmatmul.bf16.gmra.mxu0 %v5158
    %v5236 = vpop.f32.mrf.mxu0
    %v5237 = vadd.f32 %v5177, %v5236
    %v5238 = vpop.f32.mrf.mxu0
    %5239 = vdwg.mxu0
    %5240 = vst [vmem:[%s14] sm:$0xff] %v5237
    // Predicated region
    $region110: #{convo1dnet_s2_forward.1} parent=1 // pred_check
      _
    $region111: #{convo1dnet_s2_forward.1} parent=1 // pred_check_branch
      %5242 = sbr.rel (0) target = $region113
    $region112: #{convo1dnet_s2_forward.1} parent=1 // pred_region
      _
    $region113: #{convo1dnet_s2_forward.1} parent=1 // pred_fallthru
      _
    // Predicated region
    $region114: #{convo1dnet_s2_forward.1} parent=1 // pred_check
      _
    $region115: #{convo1dnet_s2_forward.1} parent=1 // pred_check_branch
      %5244 = sbr.rel (0) target = $region117
    $region116: #{convo1dnet_s2_forward.1} parent=1 // pred_region
      _
    $region117: #{convo1dnet_s2_forward.1} parent=1 // pred_fallthru
      _
    %5245 = vsyncpa [#allocation3], 1
    %5246 = vsyncpa [#allocation6], 1
    %5247 = vsyncpa [#allocation9], 1
    %5248 = vsyncpa [#allocation12], 1
    %5249 = vsyncpa [#allocation15], 1
    %5250 = vsyncpa [#allocation18], 1
    %5251 = vsyncpa [#allocation21], 1
    %5252 = vsyncpa [#allocation4], 1

</llo_original>
